<compile_context>
chip_gen: v7x
topology: tpu7x:2x2x1
jax: 0.10.0
libtpu: 0.0.40
codegen_flags: <defaults>
</compile_context>

<pallas_src>
import jax
import jax.numpy as jnp
from jax.experimental import pallas as pl
from jax.experimental.pallas import tpu as pltpu


# -----------------------------------------------------------------------------
# In-kernel helpers (operate on already-loaded jnp values)
# -----------------------------------------------------------------------------
def _mm(x, w):
    """MXU matmul with f32 accumulation; casts x to the weight dtype (bf16 ok)."""
    if w.dtype != jnp.float32:
        x = x.astype(w.dtype)
    return jnp.dot(x, w, preferred_element_type=jnp.float32)


def _layer_norm(y, g, beta, eps=1e-5):
    m = jnp.mean(y, axis=-1, keepdims=True)
    v = jnp.mean((y - m) ** 2, axis=-1, keepdims=True)
    return (y - m) * jax.lax.rsqrt(v + eps) * g + beta


def _residual_block(x, p, use_ln):
    """p = (w1, b1, w2, b2, ws, bs, g, beta) as loaded arrays."""
    w1, b1, w2, b2, ws, bs, g, beta = p
    h = jnp.maximum(_mm(x, w1) + b1, 0.0)
    y = _mm(h, w2) + b2 + _mm(x, ws) + bs
    if use_ln:
        y = _layer_norm(y, g, beta)
    return y


# -----------------------------------------------------------------------------
# Fused TIDE forward kernel (single pallas_call, no grid)
# -----------------------------------------------------------------------------
def _build_tide_kernel(cfg):
    S = cfg['seq_len']
    P = cfg['pred_len']
    D = cfg['input_size']
    twp = cfg['temporal_width_past']
    twf = cfg['temporal_width_future']
    do_nr = cfg['decoder_output_dim'] * cfg['nr_params']
    use_ln = cfg['use_layer_norm']
    n_enc = cfg['num_encoder_layers']
    n_dec = cfg['num_decoder_layers']

    def kernel(*refs):
        it = iter(refs)
        nxt = lambda: next(it)
        take8 = lambda: tuple(next(it) for _ in range(8))
        load8 = lambda r8: tuple(r[...] for r in r8)

        # ---- data inputs -----------------------------------------------------
        x_flat_ref = nxt()          # (B, S*D)    VMEM
        xt_ref = nxt()              # (S*B, pcov) VMEM, row = s*B + b
        fut_ref = nxt()             # (P*B, fcov) VMEM, row = p*B + b
        wl_ref = nxt()              # (S, P)      SMEM  lookback weight
        bl_ref = nxt()              # (1, P)      SMEM  lookback bias

        # ---- parameters (order must match _prepare_kernel_params) -----------
        past_p = take8()
        fut_p = take8()
        encs = [take8() for _ in range(n_enc)]
        decs = [take8() for _ in range(n_dec)]
        td_refs = tuple(next(it) for _ in range(10))

        o_ref = nxt()               # (P, B, outD) output
        enc_in_ref = nxt()          # (B, enc_dim) VMEM scratch
        assert next(it, None) is None   # trace-time arity check

        B = x_flat_ref.shape[0]
        x_flat = x_flat_ref[...]

        # 1) covariate projections: ONE batched residual block each ------------
        p_all = _residual_block(xt_ref[...], load8(past_p), use_ln)   # (S*B, twp)
        q_all = _residual_block(fut_ref[...], load8(fut_p), use_ln)   # (P*B, twf)

        # 2) assemble encoder input [x | past | fut] in VMEM scratch -----------
        enc_in_ref[:, 0:S * D] = x_flat
        for s in range(S):
            off = S * D + s * twp
            enc_in_ref[:, off:off + twp] = p_all[s * B:(s + 1) * B, :]
        base = S * D + S * twp
        for p in range(P):
            off = base + p * twf
            enc_in_ref[:, off:off + twf] = q_all[p * B:(p + 1) * B, :]

        # 3) encoder / decoder stacks (full-width matmuls, unsplit weights) ----
        h = enc_in_ref[...]
        for lp in encs:
            h = _residual_block(h, load8(lp), use_ln)
        for lp in decs:
            h = _residual_block(h, load8(lp), use_ln)
        dec = h                                                       # (B, P*do_nr)

        # 4) temporal decoder + lookback skip, one horizon step at a time ------
        (w1d_r, w1f_r, b1_r, w2_r, b2_r, wsd_r, wsf_r, bs_r, g_r, be_r) = td_refs
        w1d = w1d_r[...]; w1f = w1f_r[...]; b1 = b1_r[...]
        w2 = w2_r[...]; b2 = b2_r[...]
        wsd = wsd_r[...]; wsf = wsf_r[...]; bs = bs_r[...]
        g = g_r[...]; be = be_r[...]

        x_steps = [x_flat[:, s * D:(s + 1) * D] for s in range(S)]    # (B, D) each

        for p in range(P):                                            # P small, static
            dec_p = dec[:, p * do_nr:(p + 1) * do_nr]                 # (B, do_nr)
            q_p = q_all[p * B:(p + 1) * B, :]                         # (B, twf)
            hh = jnp.maximum(_mm(dec_p, w1d) + _mm(q_p, w1f) + b1, 0.0)
            t_p = _mm(hh, w2) + b2 + _mm(dec_p, wsd) + _mm(q_p, wsf) + bs
            if use_ln:
                t_p = _layer_norm(t_p, g, be)
            # lookback skip: skip[b, p, d] = sum_s x[b, s, d] * wl[s, p] + bl[p]
            skip_p = x_steps[0] * wl_ref[0, p]
            for s in range(1, S):
                skip_p = skip_p + x_steps[s] * wl_ref[s, p]
            o_ref[p, :, :] = (t_p + skip_p + bl_ref[0, p]).astype(o_ref.dtype)

    return kernel


# -----------------------------------------------------------------------------
# Parameter init (deterministic, mimics torch.nn.Linear default init)
# -----------------------------------------------------------------------------
def init_linear(key, in_dim, out_dim):
    k1, k2 = jax.random.split(key)
    bound = 1.0 / (in_dim ** 0.5)
    w = jax.random.uniform(k1, (in_dim, out_dim), jnp.float32, -bound, bound)
    b = jax.random.uniform(k2, (1, out_dim), jnp.float32, -bound, bound)
    return w, b


def init_residual_block(key, in_dim, out_dim, hidden):
    k1, k2, k3 = jax.random.split(key, 3)
    w1, b1 = init_linear(k1, in_dim, hidden)
    w2, b2 = init_linear(k2, hidden, out_dim)
    ws, bs = init_linear(k3, in_dim, out_dim)
    g = jnp.ones((1, out_dim), jnp.float32)
    beta = jnp.zeros((1, out_dim), jnp.float32)
    return (w1, b1, w2, b2, ws, bs, g, beta)


def init_model(key, cfg):
    keys = jax.random.split(key, 8)
    encoder_dim = (cfg['seq_len'] * (cfg['input_size'] + cfg['temporal_width_past'])
                   + cfg['pred_len'] * cfg['temporal_width_future'])
    decoder_input_dim = ((cfg['decoder_output_dim'] + cfg['temporal_width_future'])
                         * cfg['nr_params'])

    params = {}
    params['past_proj'] = init_residual_block(
        keys[0], cfg['past_cov_dim'], cfg['temporal_width_past'], cfg['hidden_size'])
    params['future_proj'] = init_residual_block(
        keys[1], cfg['future_cov_dim'], cfg['temporal_width_future'], cfg['hidden_size'])

    enc = [init_residual_block(jax.random.fold_in(keys[2], 0),
                               encoder_dim, cfg['hidden_size'], cfg['hidden_size'])]
    for i in range(cfg['num_encoder_layers'] - 1):
        enc.append(init_residual_block(jax.random.fold_in(keys[2], i + 1),
                                       cfg['hidden_size'], cfg['hidden_size'],
                                       cfg['hidden_size']))
    params['encoders'] = enc

    dec = []
    for i in range(cfg['num_decoder_layers'] - 1):
        dec.append(init_residual_block(jax.random.fold_in(keys[3], i),
                                       cfg['hidden_size'], cfg['hidden_size'],
                                       cfg['hidden_size']))
    dec.append(init_residual_block(
        jax.random.fold_in(keys[3], 100), cfg['hidden_size'],
        cfg['decoder_output_dim'] * cfg['pred_len'] * cfg['nr_params'],
        cfg['hidden_size']))
    params['decoders'] = dec

    params['temporal_decoder'] = init_residual_block(
        keys[4], decoder_input_dim, cfg['output_dim'] * cfg['nr_params'],
        cfg['temporal_decoder_hidden'])

    wl, bl = init_linear(keys[5], cfg['seq_len'],
                         cfg['pred_len'] * cfg['nr_params'])
    params['lookback_w'] = wl            # (S, P*nr)
    params['lookback_b'] = bl[0]         # (P*nr,)
    return params


# -----------------------------------------------------------------------------
# Wrapper-side parameter preparation (no padding / expansion; optional bf16)
# -----------------------------------------------------------------------------
def _prepare_kernel_params(params, cfg, matmul_dtype=jnp.float32):
    do_nr = cfg['decoder_output_dim'] * cfg['nr_params']

    def cast_w(w):
        return w.astype(matmul_dtype)

    def rb(p):
        w1, b1, w2, b2, ws, bs, g, beta = p
        # weights may go bf16 (MXU), biases / LN params stay f32 (f32 accum path)
        return [cast_w(w1), b1, cast_w(w2), b2, cast_w(ws), bs, g, beta]

    flat = []
    flat += rb(params['past_proj'])
    flat += rb(params['future_proj'])
    for lp in params['encoders']:
        flat += rb(lp)
    for lp in params['decoders']:
        flat += rb(lp)

    # temporal decoder: split the concat [decoded_p | fut_p] weights into the
    # two small unpadded blocks applied per horizon step (no zero padding).
    w1, b1, w2, b2, ws, bs, g, beta = params['temporal_decoder']
    flat += [cast_w(w1[:do_nr]), cast_w(w1[do_nr:]), b1,
             cast_w(w2), b2,
             cast_w(ws[:do_nr]), cast_w(ws[do_nr:]), bs, g, beta]
    return flat


# -----------------------------------------------------------------------------
# Model forward: one fused pallas_call
# -----------------------------------------------------------------------------
def model_forward(params, seq_x, seq_xt, dec_input, seq_yt, cfg,
                  matmul_dtype=jnp.float32):
    del dec_input  # unused by the reference forward
    assert cfg['nr_params'] == 1, "forward requires nr_params == 1"
    assert cfg['output_dim'] == cfg['input_size'], "forward requires output_dim == input_size"

    B, S, D = seq_x.shape
    P = cfg['pred_len']
    outD = cfg['output_dim'] * cfg['nr_params']
    enc_dim = S * (D + cfg['temporal_width_past']) + P * cfg['temporal_width_future']

    x_flat = seq_x.reshape(B, S * D)
    # time-major row slabs (row = t*B + b) so each projection is ONE residual block
    xt_all = jnp.transpose(seq_xt, (1, 0, 2)).reshape(S * B, -1)
    fut_all = jnp.transpose(seq_yt[:, cfg['label_len']:, :], (1, 0, 2)).reshape(P * B, -1)

    wl = params['lookback_w'].astype(jnp.float32)            # (S, P)
    bl = params['lookback_b'].reshape(1, -1).astype(jnp.float32)  # (1, P)

    weight_inputs = tuple(_prepare_kernel_params(params, cfg, matmul_dtype))
    inputs = (x_flat, xt_all, fut_all, wl, bl) + weight_inputs

    vmem = pl.BlockSpec(memory_space=pltpu.MemorySpace.VMEM)
    smem = pl.BlockSpec(memory_space=pltpu.MemorySpace.SMEM)
    in_specs = [vmem, vmem, vmem, smem, smem] + [vmem] * len(weight_inputs)

    # explicit scoped-VMEM request sized from the actual footprint (+ headroom)
    raw_bytes = sum(int(x.size) * x.dtype.itemsize for x in inputs)
    raw_bytes += (P * B * outD + B * enc_dim) * 4
    vmem_limit = int(max(8 * 1024 * 1024, 2 * raw_bytes))

    out = pl.pallas_call(
        _build_tide_kernel(cfg),
        out_shape=jax.ShapeDtypeStruct((P, B, outD), jnp.float32),
        in_specs=in_specs,
        out_specs=vmem,
        scratch_shapes=[pltpu.VMEM((B, enc_dim), jnp.float32)],
        compiler_params=pltpu.CompilerParams(vmem_limit_bytes=vmem_limit),
    )(*inputs)
    # kernel writes horizon-major (P, B, outD); present as (B, P, outD)
    return jnp.transpose(out, (1, 0, 2))


# -----------------------------------------------------------------------------
# Pure-JAX reference (for correctness check)
# -----------------------------------------------------------------------------
def _rb_ref(x, p, use_ln):
    w1, b1, w2, b2, ws, bs, g, beta = p
    y = jnp.maximum(x @ w1 + b1, 0.0) @ w2 + b2 + x @ ws + bs
    if use_ln:
        m = jnp.mean(y, -1, keepdims=True)
        v = jnp.mean((y - m) ** 2, -1, keepdims=True)
        y = (y - m) / jnp.sqrt(v + 1e-5) * g + beta
    return y


def model_ref(params, seq_x, seq_xt, dec_input, seq_yt, cfg):
    B = seq_x.shape[0]
    use_ln = cfg['use_layer_norm']
    fut_in = seq_yt[:, cfg['label_len']:, :]
    past = _rb_ref(seq_xt.reshape(B * cfg['seq_len'], -1), params['past_proj'],
                   use_ln).reshape(B, cfg['seq_len'], -1)
    fut = _rb_ref(fut_in.reshape(B * cfg['pred_len'], -1), params['future_proj'],
                  use_ln).reshape(B, cfg['pred_len'], -1)
    enc = jnp.concatenate([seq_x.reshape(B, -1), past.reshape(B, -1),
                           fut.reshape(B, -1)], axis=1)
    for p in params['encoders']:
        enc = _rb_ref(enc, p, use_ln)
    dec = enc
    for p in params['decoders']:
        dec = _rb_ref(dec, p, use_ln)
    dec = dec.reshape(B, cfg['pred_len'], cfg['decoder_output_dim'] * cfg['nr_params'])
    tdi = jnp.concatenate([dec, fut], axis=2)
    td = _rb_ref(tdi.reshape(B * cfg['pred_len'], -1), params['temporal_decoder'],
                 use_ln).reshape(B, cfg['pred_len'], -1)
    skip = jnp.einsum('bsd,sp->bpd', seq_x, params['lookback_w'])
    skip = skip + params['lookback_b'][None, :, None]
    return td + skip


# -----------------------------------------------------------------------------
if __name__ == "__main__":
    cfg = dict(
        seq_len=8, pred_len=4, label_len=4,
        input_size=4, past_cov_dim=3, temporal_width_past=2,
        future_cov_dim=5, temporal_width_future=2,
        hidden_size=32, output_dim=4, use_layer_norm=True, dropout=0.1,
        num_encoder_layers=2, num_decoder_layers=2,
        decoder_output_dim=3, nr_params=1, temporal_decoder_hidden=16,
    )
    B = 2
    key = jax.random.PRNGKey(0)
    kp, kx, kxt, kdec, kyt = jax.random.split(key, 5)

    params = init_model(kp, cfg)
    seq_x = jax.random.normal(kx, (B, cfg['seq_len'], cfg['input_size']), jnp.float32)
    seq_xt = jax.random.normal(kxt, (B, cfg['seq_len'], cfg['past_cov_dim']), jnp.float32)
    dec_input = jax.random.normal(
        kdec, (B, cfg['label_len'] + cfg['pred_len'], cfg['input_size']), jnp.float32)
    seq_yt = jax.random.normal(
        kyt, (B, cfg['label_len'] + cfg['pred_len'], cfg['future_cov_dim']), jnp.float32)

    # NOTE: pass matmul_dtype=jnp.bfloat16 on v6e/v7x for 2x MXU throughput;
    # kept f32 here so the strict 1e-4 check against the f32 reference holds.
    fwd = jax.jit(lambda p, a, b, c, d: model_forward(p, a, b, c, d, cfg))
    y = jax.block_until_ready(fwd(params, seq_x, seq_xt, dec_input, seq_yt))

    y_ref = model_ref(params, seq_x, seq_xt, dec_input, seq_yt, cfg)
    assert y.shape == (B, cfg['pred_len'], cfg['output_dim'] * cfg['nr_params'])
    assert jnp.allclose(y, y_ref, atol=1e-4, rtol=1e-4), "mismatch vs JAX reference"

    print("KERNEL_OK")
</pallas_src>

<mosaic_0001>
module attributes {stable_mosaic.version = 11 : i64} {
  func.func @kernel(%arg0: memref<2x32xf32, #tpu.memory_space<vmem>>, %arg1: memref<16x3xf32, #tpu.memory_space<vmem>>, %arg2: memref<8x5xf32, #tpu.memory_space<vmem>>, %arg3: memref<8x4xf32, #tpu.memory_space<smem>>, %arg4: memref<1x4xf32, #tpu.memory_space<smem>>, %arg5: memref<3x32xf32, #tpu.memory_space<vmem>>, %arg6: memref<1x32xf32, #tpu.memory_space<vmem>>, %arg7: memref<32x2xf32, #tpu.memory_space<vmem>>, %arg8: memref<1x2xf32, #tpu.memory_space<vmem>>, %arg9: memref<3x2xf32, #tpu.memory_space<vmem>>, %arg10: memref<1x2xf32, #tpu.memory_space<vmem>>, %arg11: memref<1x2xf32, #tpu.memory_space<vmem>>, %arg12: memref<1x2xf32, #tpu.memory_space<vmem>>, %arg13: memref<5x32xf32, #tpu.memory_space<vmem>>, %arg14: memref<1x32xf32, #tpu.memory_space<vmem>>, %arg15: memref<32x2xf32, #tpu.memory_space<vmem>>, %arg16: memref<1x2xf32, #tpu.memory_space<vmem>>, %arg17: memref<5x2xf32, #tpu.memory_space<vmem>>, %arg18: memref<1x2xf32, #tpu.memory_space<vmem>>, %arg19: memref<1x2xf32, #tpu.memory_space<vmem>>, %arg20: memref<1x2xf32, #tpu.memory_space<vmem>>, %arg21: memref<56x32xf32, #tpu.memory_space<vmem>>, %arg22: memref<1x32xf32, #tpu.memory_space<vmem>>, %arg23: memref<32x32xf32, #tpu.memory_space<vmem>>, %arg24: memref<1x32xf32, #tpu.memory_space<vmem>>, %arg25: memref<56x32xf32, #tpu.memory_space<vmem>>, %arg26: memref<1x32xf32, #tpu.memory_space<vmem>>, %arg27: memref<1x32xf32, #tpu.memory_space<vmem>>, %arg28: memref<1x32xf32, #tpu.memory_space<vmem>>, %arg29: memref<32x32xf32, #tpu.memory_space<vmem>>, %arg30: memref<1x32xf32, #tpu.memory_space<vmem>>, %arg31: memref<32x32xf32, #tpu.memory_space<vmem>>, %arg32: memref<1x32xf32, #tpu.memory_space<vmem>>, %arg33: memref<32x32xf32, #tpu.memory_space<vmem>>, %arg34: memref<1x32xf32, #tpu.memory_space<vmem>>, %arg35: memref<1x32xf32, #tpu.memory_space<vmem>>, %arg36: memref<1x32xf32, #tpu.memory_space<vmem>>, %arg37: memref<32x32xf32, #tpu.memory_space<vmem>>, %arg38: memref<1x32xf32, #tpu.memory_space<vmem>>, %arg39: memref<32x32xf32, #tpu.memory_space<vmem>>, %arg40: memref<1x32xf32, #tpu.memory_space<vmem>>, %arg41: memref<32x32xf32, #tpu.memory_space<vmem>>, %arg42: memref<1x32xf32, #tpu.memory_space<vmem>>, %arg43: memref<1x32xf32, #tpu.memory_space<vmem>>, %arg44: memref<1x32xf32, #tpu.memory_space<vmem>>, %arg45: memref<32x32xf32, #tpu.memory_space<vmem>>, %arg46: memref<1x32xf32, #tpu.memory_space<vmem>>, %arg47: memref<32x12xf32, #tpu.memory_space<vmem>>, %arg48: memref<1x12xf32, #tpu.memory_space<vmem>>, %arg49: memref<32x12xf32, #tpu.memory_space<vmem>>, %arg50: memref<1x12xf32, #tpu.memory_space<vmem>>, %arg51: memref<1x12xf32, #tpu.memory_space<vmem>>, %arg52: memref<1x12xf32, #tpu.memory_space<vmem>>, %arg53: memref<3x16xf32, #tpu.memory_space<vmem>>, %arg54: memref<2x16xf32, #tpu.memory_space<vmem>>, %arg55: memref<1x16xf32, #tpu.memory_space<vmem>>, %arg56: memref<16x4xf32, #tpu.memory_space<vmem>>, %arg57: memref<1x4xf32, #tpu.memory_space<vmem>>, %arg58: memref<3x4xf32, #tpu.memory_space<vmem>>, %arg59: memref<2x4xf32, #tpu.memory_space<vmem>>, %arg60: memref<1x4xf32, #tpu.memory_space<vmem>>, %arg61: memref<1x4xf32, #tpu.memory_space<vmem>>, %arg62: memref<1x4xf32, #tpu.memory_space<vmem>>, %arg63: memref<4x2x4xf32, #tpu.memory_space<vmem>>, %arg64: memref<2x56xf32, #tpu.memory_space<vmem>>) attributes {dimension_semantics = [], scalar_prefetch = 0 : i64, scratch_operands = 1 : i64, tpu.core_type = #tpu.core_type<tc>} {
    %c0 = arith.constant 0 : index
    %c0_0 = arith.constant 0 : index
    %0 = vector.load %arg0[%c0, %c0_0] : memref<2x32xf32, #tpu.memory_space<vmem>>, vector<2x32xf32>
    %c0_1 = arith.constant 0 : index
    %c0_2 = arith.constant 0 : index
    %1 = vector.load %arg1[%c0_1, %c0_2] : memref<16x3xf32, #tpu.memory_space<vmem>>, vector<16x3xf32>
    %c0_3 = arith.constant 0 : index
    %c0_4 = arith.constant 0 : index
    %2 = vector.load %arg5[%c0_3, %c0_4] : memref<3x32xf32, #tpu.memory_space<vmem>>, vector<3x32xf32>
    %c0_5 = arith.constant 0 : index
    %c0_6 = arith.constant 0 : index
    %3 = vector.load %arg6[%c0_5, %c0_6] : memref<1x32xf32, #tpu.memory_space<vmem>>, vector<1x32xf32>
    %c0_7 = arith.constant 0 : index
    %c0_8 = arith.constant 0 : index
    %4 = vector.load %arg7[%c0_7, %c0_8] : memref<32x2xf32, #tpu.memory_space<vmem>>, vector<32x2xf32>
    %c0_9 = arith.constant 0 : index
    %c0_10 = arith.constant 0 : index
    %5 = vector.load %arg8[%c0_9, %c0_10] : memref<1x2xf32, #tpu.memory_space<vmem>>, vector<1x2xf32>
    %c0_11 = arith.constant 0 : index
    %c0_12 = arith.constant 0 : index
    %6 = vector.load %arg9[%c0_11, %c0_12] : memref<3x2xf32, #tpu.memory_space<vmem>>, vector<3x2xf32>
    %c0_13 = arith.constant 0 : index
    %c0_14 = arith.constant 0 : index
    %7 = vector.load %arg10[%c0_13, %c0_14] : memref<1x2xf32, #tpu.memory_space<vmem>>, vector<1x2xf32>
    %c0_15 = arith.constant 0 : index
    %c0_16 = arith.constant 0 : index
    %8 = vector.load %arg11[%c0_15, %c0_16] : memref<1x2xf32, #tpu.memory_space<vmem>>, vector<1x2xf32>
    %c0_17 = arith.constant 0 : index
    %c0_18 = arith.constant 0 : index
    %9 = vector.load %arg12[%c0_17, %c0_18] : memref<1x2xf32, #tpu.memory_space<vmem>>, vector<1x2xf32>
    %cst = arith.constant dense<0.000000e+00> : vector<16x32xf32>
    %10 = tpu.matmul %1, %2, %cst {dimension_numbers = #tpu.dot_dimension_numbers<[1], [0], [0], [1], [0, 0, 1, 1], [], []>} : vector<16x3xf32>, vector<3x32xf32>, vector<16x32xf32> -> vector<16x32xf32>
    %11 = vector.broadcast %3 : vector<1x32xf32> to vector<16x32xf32>
    %12 = arith.addf %10, %11 : vector<16x32xf32>
    %cst_19 = arith.constant 0.000000e+00 : f32
    %13 = vector.broadcast %cst_19 : f32 to vector<16x32xf32>
    %14 = arith.maximumf %12, %13 : vector<16x32xf32>
    %cst_20 = arith.constant dense<0.000000e+00> : vector<16x2xf32>
    %15 = tpu.matmul %14, %4, %cst_20 {dimension_numbers = #tpu.dot_dimension_numbers<[1], [0], [0], [1], [0, 0, 1, 1], [], []>} : vector<16x32xf32>, vector<32x2xf32>, vector<16x2xf32> -> vector<16x2xf32>
    %16 = vector.broadcast %5 : vector<1x2xf32> to vector<16x2xf32>
    %17 = arith.addf %15, %16 : vector<16x2xf32>
    %cst_21 = arith.constant dense<0.000000e+00> : vector<16x2xf32>
    %18 = tpu.matmul %1, %6, %cst_21 {dimension_numbers = #tpu.dot_dimension_numbers<[1], [0], [0], [1], [0, 0, 1, 1], [], []>} : vector<16x3xf32>, vector<3x2xf32>, vector<16x2xf32> -> vector<16x2xf32>
    %19 = arith.addf %17, %18 : vector<16x2xf32>
    %20 = vector.broadcast %7 : vector<1x2xf32> to vector<16x2xf32>
    %21 = arith.addf %19, %20 : vector<16x2xf32>
    %cst_22 = arith.constant dense<0.000000e+00> : vector<16xf32>
    %22 = vector.multi_reduction <add>, %21, %cst_22 [1] : vector<16x2xf32> to vector<16xf32>
    %23 = vector.shape_cast %22 : vector<16xf32> to vector<16x1xf32>
    %cst_23 = arith.constant 2.000000e+00 : f32
    %24 = vector.broadcast %cst_23 : f32 to vector<16x1xf32>
    %25 = arith.divf %23, %24 : vector<16x1xf32>
    %26 = vector.broadcast %25 : vector<16x1xf32> to vector<16x2xf32>
    %27 = arith.subf %21, %26 : vector<16x2xf32>
    %28 = arith.mulf %27, %27 : vector<16x2xf32>
    %cst_24 = arith.constant dense<0.000000e+00> : vector<16xf32>
    %29 = vector.multi_reduction <add>, %28, %cst_24 [1] : vector<16x2xf32> to vector<16xf32>
    %30 = vector.shape_cast %29 : vector<16xf32> to vector<16x1xf32>
    %cst_25 = arith.constant 2.000000e+00 : f32
    %31 = vector.broadcast %cst_25 : f32 to vector<16x1xf32>
    %32 = arith.divf %30, %31 : vector<16x1xf32>
    %33 = vector.broadcast %25 : vector<16x1xf32> to vector<16x2xf32>
    %34 = arith.subf %21, %33 : vector<16x2xf32>
    %cst_26 = arith.constant 9.99999974E-6 : f32
    %35 = vector.broadcast %cst_26 : f32 to vector<16x1xf32>
    %36 = arith.addf %32, %35 : vector<16x1xf32>
    %37 = math.rsqrt %36 : vector<16x1xf32>
    %38 = vector.broadcast %37 : vector<16x1xf32> to vector<16x2xf32>
    %39 = arith.mulf %34, %38 : vector<16x2xf32>
    %40 = vector.broadcast %8 : vector<1x2xf32> to vector<16x2xf32>
    %41 = arith.mulf %39, %40 : vector<16x2xf32>
    %42 = vector.broadcast %9 : vector<1x2xf32> to vector<16x2xf32>
    %43 = arith.addf %41, %42 : vector<16x2xf32>
    %c0_27 = arith.constant 0 : index
    %c0_28 = arith.constant 0 : index
    %44 = vector.load %arg2[%c0_27, %c0_28] : memref<8x5xf32, #tpu.memory_space<vmem>>, vector<8x5xf32>
    %c0_29 = arith.constant 0 : index
    %c0_30 = arith.constant 0 : index
    %45 = vector.load %arg13[%c0_29, %c0_30] : memref<5x32xf32, #tpu.memory_space<vmem>>, vector<5x32xf32>
    %c0_31 = arith.constant 0 : index
    %c0_32 = arith.constant 0 : index
    %46 = vector.load %arg14[%c0_31, %c0_32] : memref<1x32xf32, #tpu.memory_space<vmem>>, vector<1x32xf32>
    %c0_33 = arith.constant 0 : index
    %c0_34 = arith.constant 0 : index
    %47 = vector.load %arg15[%c0_33, %c0_34] : memref<32x2xf32, #tpu.memory_space<vmem>>, vector<32x2xf32>
    %c0_35 = arith.constant 0 : index
    %c0_36 = arith.constant 0 : index
    %48 = vector.load %arg16[%c0_35, %c0_36] : memref<1x2xf32, #tpu.memory_space<vmem>>, vector<1x2xf32>
    %c0_37 = arith.constant 0 : index
    %c0_38 = arith.constant 0 : index
    %49 = vector.load %arg17[%c0_37, %c0_38] : memref<5x2xf32, #tpu.memory_space<vmem>>, vector<5x2xf32>
    %c0_39 = arith.constant 0 : index
    %c0_40 = arith.constant 0 : index
    %50 = vector.load %arg18[%c0_39, %c0_40] : memref<1x2xf32, #tpu.memory_space<vmem>>, vector<1x2xf32>
    %c0_41 = arith.constant 0 : index
    %c0_42 = arith.constant 0 : index
    %51 = vector.load %arg19[%c0_41, %c0_42] : memref<1x2xf32, #tpu.memory_space<vmem>>, vector<1x2xf32>
    %c0_43 = arith.constant 0 : index
    %c0_44 = arith.constant 0 : index
    %52 = vector.load %arg20[%c0_43, %c0_44] : memref<1x2xf32, #tpu.memory_space<vmem>>, vector<1x2xf32>
    %cst_45 = arith.constant dense<0.000000e+00> : vector<8x32xf32>
    %53 = tpu.matmul %44, %45, %cst_45 {dimension_numbers = #tpu.dot_dimension_numbers<[1], [0], [0], [1], [0, 0, 1, 1], [], []>} : vector<8x5xf32>, vector<5x32xf32>, vector<8x32xf32> -> vector<8x32xf32>
    %54 = vector.broadcast %46 : vector<1x32xf32> to vector<8x32xf32>
    %55 = arith.addf %53, %54 : vector<8x32xf32>
    %cst_46 = arith.constant 0.000000e+00 : f32
    %56 = vector.broadcast %cst_46 : f32 to vector<8x32xf32>
    %57 = arith.maximumf %55, %56 : vector<8x32xf32>
    %cst_47 = arith.constant dense<0.000000e+00> : vector<8x2xf32>
    %58 = tpu.matmul %57, %47, %cst_47 {dimension_numbers = #tpu.dot_dimension_numbers<[1], [0], [0], [1], [0, 0, 1, 1], [], []>} : vector<8x32xf32>, vector<32x2xf32>, vector<8x2xf32> -> vector<8x2xf32>
    %59 = vector.broadcast %48 : vector<1x2xf32> to vector<8x2xf32>
    %60 = arith.addf %58, %59 : vector<8x2xf32>
    %cst_48 = arith.constant dense<0.000000e+00> : vector<8x2xf32>
    %61 = tpu.matmul %44, %49, %cst_48 {dimension_numbers = #tpu.dot_dimension_numbers<[1], [0], [0], [1], [0, 0, 1, 1], [], []>} : vector<8x5xf32>, vector<5x2xf32>, vector<8x2xf32> -> vector<8x2xf32>
    %62 = arith.addf %60, %61 : vector<8x2xf32>
    %63 = vector.broadcast %50 : vector<1x2xf32> to vector<8x2xf32>
    %64 = arith.addf %62, %63 : vector<8x2xf32>
    %cst_49 = arith.constant dense<0.000000e+00> : vector<8xf32>
    %65 = vector.multi_reduction <add>, %64, %cst_49 [1] : vector<8x2xf32> to vector<8xf32>
    %66 = vector.shape_cast %65 : vector<8xf32> to vector<8x1xf32>
    %cst_50 = arith.constant 2.000000e+00 : f32
    %67 = vector.broadcast %cst_50 : f32 to vector<8x1xf32>
    %68 = arith.divf %66, %67 : vector<8x1xf32>
    %69 = vector.broadcast %68 : vector<8x1xf32> to vector<8x2xf32>
    %70 = arith.subf %64, %69 : vector<8x2xf32>
    %71 = arith.mulf %70, %70 : vector<8x2xf32>
    %cst_51 = arith.constant dense<0.000000e+00> : vector<8xf32>
    %72 = vector.multi_reduction <add>, %71, %cst_51 [1] : vector<8x2xf32> to vector<8xf32>
    %73 = vector.shape_cast %72 : vector<8xf32> to vector<8x1xf32>
    %cst_52 = arith.constant 2.000000e+00 : f32
    %74 = vector.broadcast %cst_52 : f32 to vector<8x1xf32>
    %75 = arith.divf %73, %74 : vector<8x1xf32>
    %76 = vector.broadcast %68 : vector<8x1xf32> to vector<8x2xf32>
    %77 = arith.subf %64, %76 : vector<8x2xf32>
    %cst_53 = arith.constant 9.99999974E-6 : f32
    %78 = vector.broadcast %cst_53 : f32 to vector<8x1xf32>
    %79 = arith.addf %75, %78 : vector<8x1xf32>
    %80 = math.rsqrt %79 : vector<8x1xf32>
    %81 = vector.broadcast %80 : vector<8x1xf32> to vector<8x2xf32>
    %82 = arith.mulf %77, %81 : vector<8x2xf32>
    %83 = vector.broadcast %51 : vector<1x2xf32> to vector<8x2xf32>
    %84 = arith.mulf %82, %83 : vector<8x2xf32>
    %85 = vector.broadcast %52 : vector<1x2xf32> to vector<8x2xf32>
    %86 = arith.addf %84, %85 : vector<8x2xf32>
    %c0_54 = arith.constant 0 : index
    %c0_55 = arith.constant 0 : index
    %87 = vector.load %arg64[%c0_54, %c0_55] : memref<2x56xf32, #tpu.memory_space<vmem>>, vector<2x32xf32>
    tpu.vector_store %arg64[%c0_54, %c0_55], %0 {strides = array<i32>} : memref<2x56xf32, #tpu.memory_space<vmem>>, vector<2x32xf32>,
    %88 = vector.extract_strided_slice %43 {offsets = [0, 0], sizes = [2, 2], strides = [1, 1]} : vector<16x2xf32> to vector<2x2xf32>
    %c0_56 = arith.constant 0 : index
    %c32 = arith.constant 32 : index
    %89 = vector.load %arg64[%c0_56, %c32] : memref<2x56xf32, #tpu.memory_space<vmem>>, vector<2x2xf32>
    tpu.vector_store %arg64[%c0_56, %c32], %88 {strides = array<i32>} : memref<2x56xf32, #tpu.memory_space<vmem>>, vector<2x2xf32>,
    %90 = vector.extract_strided_slice %43 {offsets = [2, 0], sizes = [2, 2], strides = [1, 1]} : vector<16x2xf32> to vector<2x2xf32>
    %c0_57 = arith.constant 0 : index
    %c34 = arith.constant 34 : index
    %91 = vector.load %arg64[%c0_57, %c34] : memref<2x56xf32, #tpu.memory_space<vmem>>, vector<2x2xf32>
    tpu.vector_store %arg64[%c0_57, %c34], %90 {strides = array<i32>} : memref<2x56xf32, #tpu.memory_space<vmem>>, vector<2x2xf32>,
    %92 = vector.extract_strided_slice %43 {offsets = [4, 0], sizes = [2, 2], strides = [1, 1]} : vector<16x2xf32> to vector<2x2xf32>
    %c0_58 = arith.constant 0 : index
    %c36 = arith.constant 36 : index
    %93 = vector.load %arg64[%c0_58, %c36] : memref<2x56xf32, #tpu.memory_space<vmem>>, vector<2x2xf32>
    tpu.vector_store %arg64[%c0_58, %c36], %92 {strides = array<i32>} : memref<2x56xf32, #tpu.memory_space<vmem>>, vector<2x2xf32>,
    %94 = vector.extract_strided_slice %43 {offsets = [6, 0], sizes = [2, 2], strides = [1, 1]} : vector<16x2xf32> to vector<2x2xf32>
    %c0_59 = arith.constant 0 : index
    %c38 = arith.constant 38 : index
    %95 = vector.load %arg64[%c0_59, %c38] : memref<2x56xf32, #tpu.memory_space<vmem>>, vector<2x2xf32>
    tpu.vector_store %arg64[%c0_59, %c38], %94 {strides = array<i32>} : memref<2x56xf32, #tpu.memory_space<vmem>>, vector<2x2xf32>,
    %96 = vector.extract_strided_slice %43 {offsets = [8, 0], sizes = [2, 2], strides = [1, 1]} : vector<16x2xf32> to vector<2x2xf32>
    %c0_60 = arith.constant 0 : index
    %c40 = arith.constant 40 : index
    %97 = vector.load %arg64[%c0_60, %c40] : memref<2x56xf32, #tpu.memory_space<vmem>>, vector<2x2xf32>
    tpu.vector_store %arg64[%c0_60, %c40], %96 {strides = array<i32>} : memref<2x56xf32, #tpu.memory_space<vmem>>, vector<2x2xf32>,
    %98 = vector.extract_strided_slice %43 {offsets = [10, 0], sizes = [2, 2], strides = [1, 1]} : vector<16x2xf32> to vector<2x2xf32>
    %c0_61 = arith.constant 0 : index
    %c42 = arith.constant 42 : index
    %99 = vector.load %arg64[%c0_61, %c42] : memref<2x56xf32, #tpu.memory_space<vmem>>, vector<2x2xf32>
    tpu.vector_store %arg64[%c0_61, %c42], %98 {strides = array<i32>} : memref<2x56xf32, #tpu.memory_space<vmem>>, vector<2x2xf32>,
    %100 = vector.extract_strided_slice %43 {offsets = [12, 0], sizes = [2, 2], strides = [1, 1]} : vector<16x2xf32> to vector<2x2xf32>
    %c0_62 = arith.constant 0 : index
    %c44 = arith.constant 44 : index
    %101 = vector.load %arg64[%c0_62, %c44] : memref<2x56xf32, #tpu.memory_space<vmem>>, vector<2x2xf32>
    tpu.vector_store %arg64[%c0_62, %c44], %100 {strides = array<i32>} : memref<2x56xf32, #tpu.memory_space<vmem>>, vector<2x2xf32>,
    %102 = vector.extract_strided_slice %43 {offsets = [14, 0], sizes = [2, 2], strides = [1, 1]} : vector<16x2xf32> to vector<2x2xf32>
    %c0_63 = arith.constant 0 : index
    %c46 = arith.constant 46 : index
    %103 = vector.load %arg64[%c0_63, %c46] : memref<2x56xf32, #tpu.memory_space<vmem>>, vector<2x2xf32>
    tpu.vector_store %arg64[%c0_63, %c46], %102 {strides = array<i32>} : memref<2x56xf32, #tpu.memory_space<vmem>>, vector<2x2xf32>,
    %104 = vector.extract_strided_slice %86 {offsets = [0, 0], sizes = [2, 2], strides = [1, 1]} : vector<8x2xf32> to vector<2x2xf32>
    %c0_64 = arith.constant 0 : index
    %c48 = arith.constant 48 : index
    %105 = vector.load %arg64[%c0_64, %c48] : memref<2x56xf32, #tpu.memory_space<vmem>>, vector<2x2xf32>
    tpu.vector_store %arg64[%c0_64, %c48], %104 {strides = array<i32>} : memref<2x56xf32, #tpu.memory_space<vmem>>, vector<2x2xf32>,
    %106 = vector.extract_strided_slice %86 {offsets = [2, 0], sizes = [2, 2], strides = [1, 1]} : vector<8x2xf32> to vector<2x2xf32>
    %c0_65 = arith.constant 0 : index
    %c50 = arith.constant 50 : index
    %107 = vector.load %arg64[%c0_65, %c50] : memref<2x56xf32, #tpu.memory_space<vmem>>, vector<2x2xf32>
    tpu.vector_store %arg64[%c0_65, %c50], %106 {strides = array<i32>} : memref<2x56xf32, #tpu.memory_space<vmem>>, vector<2x2xf32>,
    %108 = vector.extract_strided_slice %86 {offsets = [4, 0], sizes = [2, 2], strides = [1, 1]} : vector<8x2xf32> to vector<2x2xf32>
    %c0_66 = arith.constant 0 : index
    %c52 = arith.constant 52 : index
    %109 = vector.load %arg64[%c0_66, %c52] : memref<2x56xf32, #tpu.memory_space<vmem>>, vector<2x2xf32>
    tpu.vector_store %arg64[%c0_66, %c52], %108 {strides = array<i32>} : memref<2x56xf32, #tpu.memory_space<vmem>>, vector<2x2xf32>,
    %110 = vector.extract_strided_slice %86 {offsets = [6, 0], sizes = [2, 2], strides = [1, 1]} : vector<8x2xf32> to vector<2x2xf32>
    %c0_67 = arith.constant 0 : index
    %c54 = arith.constant 54 : index
    %111 = vector.load %arg64[%c0_67, %c54] : memref<2x56xf32, #tpu.memory_space<vmem>>, vector<2x2xf32>
    tpu.vector_store %arg64[%c0_67, %c54], %110 {strides = array<i32>} : memref<2x56xf32, #tpu.memory_space<vmem>>, vector<2x2xf32>,
    %c0_68 = arith.constant 0 : index
    %c0_69 = arith.constant 0 : index
    %112 = vector.load %arg64[%c0_68, %c0_69] : memref<2x56xf32, #tpu.memory_space<vmem>>, vector<2x56xf32>
    %c0_70 = arith.constant 0 : index
    %c0_71 = arith.constant 0 : index
    %113 = vector.load %arg21[%c0_70, %c0_71] : memref<56x32xf32, #tpu.memory_space<vmem>>, vector<56x32xf32>
    %c0_72 = arith.constant 0 : index
    %c0_73 = arith.constant 0 : index
    %114 = vector.load %arg22[%c0_72, %c0_73] : memref<1x32xf32, #tpu.memory_space<vmem>>, vector<1x32xf32>
    %c0_74 = arith.constant 0 : index
    %c0_75 = arith.constant 0 : index
    %115 = vector.load %arg23[%c0_74, %c0_75] : memref<32x32xf32, #tpu.memory_space<vmem>>, vector<32x32xf32>
    %c0_76 = arith.constant 0 : index
    %c0_77 = arith.constant 0 : index
    %116 = vector.load %arg24[%c0_76, %c0_77] : memref<1x32xf32, #tpu.memory_space<vmem>>, vector<1x32xf32>
    %c0_78 = arith.constant 0 : index
    %c0_79 = arith.constant 0 : index
    %117 = vector.load %arg25[%c0_78, %c0_79] : memref<56x32xf32, #tpu.memory_space<vmem>>, vector<56x32xf32>
    %c0_80 = arith.constant 0 : index
    %c0_81 = arith.constant 0 : index
    %118 = vector.load %arg26[%c0_80, %c0_81] : memref<1x32xf32, #tpu.memory_space<vmem>>, vector<1x32xf32>
    %c0_82 = arith.constant 0 : index
    %c0_83 = arith.constant 0 : index
    %119 = vector.load %arg27[%c0_82, %c0_83] : memref<1x32xf32, #tpu.memory_space<vmem>>, vector<1x32xf32>
    %c0_84 = arith.constant 0 : index
    %c0_85 = arith.constant 0 : index
    %120 = vector.load %arg28[%c0_84, %c0_85] : memref<1x32xf32, #tpu.memory_space<vmem>>, vector<1x32xf32>
    %cst_86 = arith.constant dense<0.000000e+00> : vector<2x32xf32>
    %121 = tpu.matmul %112, %113, %cst_86 {dimension_numbers = #tpu.dot_dimension_numbers<[1], [0], [0], [1], [0, 0, 1, 1], [], []>} : vector<2x56xf32>, vector<56x32xf32>, vector<2x32xf32> -> vector<2x32xf32>
    %122 = vector.broadcast %114 : vector<1x32xf32> to vector<2x32xf32>
    %123 = arith.addf %121, %122 : vector<2x32xf32>
    %cst_87 = arith.constant 0.000000e+00 : f32
    %124 = vector.broadcast %cst_87 : f32 to vector<2x32xf32>
    %125 = arith.maximumf %123, %124 : vector<2x32xf32>
    %cst_88 = arith.constant dense<0.000000e+00> : vector<2x32xf32>
    %126 = tpu.matmul %125, %115, %cst_88 {dimension_numbers = #tpu.dot_dimension_numbers<[1], [0], [0], [1], [0, 0, 1, 1], [], []>} : vector<2x32xf32>, vector<32x32xf32>, vector<2x32xf32> -> vector<2x32xf32>
    %127 = vector.broadcast %116 : vector<1x32xf32> to vector<2x32xf32>
    %128 = arith.addf %126, %127 : vector<2x32xf32>
    %cst_89 = arith.constant dense<0.000000e+00> : vector<2x32xf32>
    %129 = tpu.matmul %112, %117, %cst_89 {dimension_numbers = #tpu.dot_dimension_numbers<[1], [0], [0], [1], [0, 0, 1, 1], [], []>} : vector<2x56xf32>, vector<56x32xf32>, vector<2x32xf32> -> vector<2x32xf32>
    %130 = arith.addf %128, %129 : vector<2x32xf32>
    %131 = vector.broadcast %118 : vector<1x32xf32> to vector<2x32xf32>
    %132 = arith.addf %130, %131 : vector<2x32xf32>
    %cst_90 = arith.constant dense<0.000000e+00> : vector<2xf32>
    %133 = vector.multi_reduction <add>, %132, %cst_90 [1] : vector<2x32xf32> to vector<2xf32>
    %134 = vector.shape_cast %133 : vector<2xf32> to vector<2x1xf32>
    %cst_91 = arith.constant 3.200000e+01 : f32
    %135 = vector.broadcast %cst_91 : f32 to vector<2x1xf32>
    %136 = arith.divf %134, %135 : vector<2x1xf32>
    %137 = vector.broadcast %136 : vector<2x1xf32> to vector<2x32xf32>
    %138 = arith.subf %132, %137 : vector<2x32xf32>
    %139 = arith.mulf %138, %138 : vector<2x32xf32>
    %cst_92 = arith.constant dense<0.000000e+00> : vector<2xf32>
    %140 = vector.multi_reduction <add>, %139, %cst_92 [1] : vector<2x32xf32> to vector<2xf32>
    %141 = vector.shape_cast %140 : vector<2xf32> to vector<2x1xf32>
    %cst_93 = arith.constant 3.200000e+01 : f32
    %142 = vector.broadcast %cst_93 : f32 to vector<2x1xf32>
    %143 = arith.divf %141, %142 : vector<2x1xf32>
    %144 = vector.broadcast %136 : vector<2x1xf32> to vector<2x32xf32>
    %145 = arith.subf %132, %144 : vector<2x32xf32>
    %cst_94 = arith.constant 9.99999974E-6 : f32
    %146 = vector.broadcast %cst_94 : f32 to vector<2x1xf32>
    %147 = arith.addf %143, %146 : vector<2x1xf32>
    %148 = math.rsqrt %147 : vector<2x1xf32>
    %149 = vector.broadcast %148 : vector<2x1xf32> to vector<2x32xf32>
    %150 = arith.mulf %145, %149 : vector<2x32xf32>
    %151 = vector.broadcast %119 : vector<1x32xf32> to vector<2x32xf32>
    %152 = arith.mulf %150, %151 : vector<2x32xf32>
    %153 = vector.broadcast %120 : vector<1x32xf32> to vector<2x32xf32>
    %154 = arith.addf %152, %153 : vector<2x32xf32>
    %c0_95 = arith.constant 0 : index
    %c0_96 = arith.constant 0 : index
    %155 = vector.load %arg29[%c0_95, %c0_96] : memref<32x32xf32, #tpu.memory_space<vmem>>, vector<32x32xf32>
    %c0_97 = arith.constant 0 : index
    %c0_98 = arith.constant 0 : index
    %156 = vector.load %arg30[%c0_97, %c0_98] : memref<1x32xf32, #tpu.memory_space<vmem>>, vector<1x32xf32>
    %c0_99 = arith.constant 0 : index
    %c0_100 = arith.constant 0 : index
    %157 = vector.load %arg31[%c0_99, %c0_100] : memref<32x32xf32, #tpu.memory_space<vmem>>, vector<32x32xf32>
    %c0_101 = arith.constant 0 : index
    %c0_102 = arith.constant 0 : index
    %158 = vector.load %arg32[%c0_101, %c0_102] : memref<1x32xf32, #tpu.memory_space<vmem>>, vector<1x32xf32>
    %c0_103 = arith.constant 0 : index
    %c0_104 = arith.constant 0 : index
    %159 = vector.load %arg33[%c0_103, %c0_104] : memref<32x32xf32, #tpu.memory_space<vmem>>, vector<32x32xf32>
    %c0_105 = arith.constant 0 : index
    %c0_106 = arith.constant 0 : index
    %160 = vector.load %arg34[%c0_105, %c0_106] : memref<1x32xf32, #tpu.memory_space<vmem>>, vector<1x32xf32>
    %c0_107 = arith.constant 0 : index
    %c0_108 = arith.constant 0 : index
    %161 = vector.load %arg35[%c0_107, %c0_108] : memref<1x32xf32, #tpu.memory_space<vmem>>, vector<1x32xf32>
    %c0_109 = arith.constant 0 : index
    %c0_110 = arith.constant 0 : index
    %162 = vector.load %arg36[%c0_109, %c0_110] : memref<1x32xf32, #tpu.memory_space<vmem>>, vector<1x32xf32>
    %cst_111 = arith.constant dense<0.000000e+00> : vector<2x32xf32>
    %163 = tpu.matmul %154, %155, %cst_111 {dimension_numbers = #tpu.dot_dimension_numbers<[1], [0], [0], [1], [0, 0, 1, 1], [], []>} : vector<2x32xf32>, vector<32x32xf32>, vector<2x32xf32> -> vector<2x32xf32>
    %164 = vector.broadcast %156 : vector<1x32xf32> to vector<2x32xf32>
    %165 = arith.addf %163, %164 : vector<2x32xf32>
    %cst_112 = arith.constant 0.000000e+00 : f32
    %166 = vector.broadcast %cst_112 : f32 to vector<2x32xf32>
    %167 = arith.maximumf %165, %166 : vector<2x32xf32>
    %cst_113 = arith.constant dense<0.000000e+00> : vector<2x32xf32>
    %168 = tpu.matmul %167, %157, %cst_113 {dimension_numbers = #tpu.dot_dimension_numbers<[1], [0], [0], [1], [0, 0, 1, 1], [], []>} : vector<2x32xf32>, vector<32x32xf32>, vector<2x32xf32> -> vector<2x32xf32>
    %169 = vector.broadcast %158 : vector<1x32xf32> to vector<2x32xf32>
    %170 = arith.addf %168, %169 : vector<2x32xf32>
    %cst_114 = arith.constant dense<0.000000e+00> : vector<2x32xf32>
    %171 = tpu.matmul %154, %159, %cst_114 {dimension_numbers = #tpu.dot_dimension_numbers<[1], [0], [0], [1], [0, 0, 1, 1], [], []>} : vector<2x32xf32>, vector<32x32xf32>, vector<2x32xf32> -> vector<2x32xf32>
    %172 = arith.addf %170, %171 : vector<2x32xf32>
    %173 = vector.broadcast %160 : vector<1x32xf32> to vector<2x32xf32>
    %174 = arith.addf %172, %173 : vector<2x32xf32>
    %cst_115 = arith.constant dense<0.000000e+00> : vector<2xf32>
    %175 = vector.multi_reduction <add>, %174, %cst_115 [1] : vector<2x32xf32> to vector<2xf32>
    %176 = vector.shape_cast %175 : vector<2xf32> to vector<2x1xf32>
    %cst_116 = arith.constant 3.200000e+01 : f32
    %177 = vector.broadcast %cst_116 : f32 to vector<2x1xf32>
    %178 = arith.divf %176, %177 : vector<2x1xf32>
    %179 = vector.broadcast %178 : vector<2x1xf32> to vector<2x32xf32>
    %180 = arith.subf %174, %179 : vector<2x32xf32>
    %181 = arith.mulf %180, %180 : vector<2x32xf32>
    %cst_117 = arith.constant dense<0.000000e+00> : vector<2xf32>
    %182 = vector.multi_reduction <add>, %181, %cst_117 [1] : vector<2x32xf32> to vector<2xf32>
    %183 = vector.shape_cast %182 : vector<2xf32> to vector<2x1xf32>
    %cst_118 = arith.constant 3.200000e+01 : f32
    %184 = vector.broadcast %cst_118 : f32 to vector<2x1xf32>
    %185 = arith.divf %183, %184 : vector<2x1xf32>
    %186 = vector.broadcast %178 : vector<2x1xf32> to vector<2x32xf32>
    %187 = arith.subf %174, %186 : vector<2x32xf32>
    %cst_119 = arith.constant 9.99999974E-6 : f32
    %188 = vector.broadcast %cst_119 : f32 to vector<2x1xf32>
    %189 = arith.addf %185, %188 : vector<2x1xf32>
    %190 = math.rsqrt %189 : vector<2x1xf32>
    %191 = vector.broadcast %190 : vector<2x1xf32> to vector<2x32xf32>
    %192 = arith.mulf %187, %191 : vector<2x32xf32>
    %193 = vector.broadcast %161 : vector<1x32xf32> to vector<2x32xf32>
    %194 = arith.mulf %192, %193 : vector<2x32xf32>
    %195 = vector.broadcast %162 : vector<1x32xf32> to vector<2x32xf32>
    %196 = arith.addf %194, %195 : vector<2x32xf32>
    %c0_120 = arith.constant 0 : index
    %c0_121 = arith.constant 0 : index
    %197 = vector.load %arg37[%c0_120, %c0_121] : memref<32x32xf32, #tpu.memory_space<vmem>>, vector<32x32xf32>
    %c0_122 = arith.constant 0 : index
    %c0_123 = arith.constant 0 : index
    %198 = vector.load %arg38[%c0_122, %c0_123] : memref<1x32xf32, #tpu.memory_space<vmem>>, vector<1x32xf32>
    %c0_124 = arith.constant 0 : index
    %c0_125 = arith.constant 0 : index
    %199 = vector.load %arg39[%c0_124, %c0_125] : memref<32x32xf32, #tpu.memory_space<vmem>>, vector<32x32xf32>
    %c0_126 = arith.constant 0 : index
    %c0_127 = arith.constant 0 : index
    %200 = vector.load %arg40[%c0_126, %c0_127] : memref<1x32xf32, #tpu.memory_space<vmem>>, vector<1x32xf32>
    %c0_128 = arith.constant 0 : index
    %c0_129 = arith.constant 0 : index
    %201 = vector.load %arg41[%c0_128, %c0_129] : memref<32x32xf32, #tpu.memory_space<vmem>>, vector<32x32xf32>
    %c0_130 = arith.constant 0 : index
    %c0_131 = arith.constant 0 : index
    %202 = vector.load %arg42[%c0_130, %c0_131] : memref<1x32xf32, #tpu.memory_space<vmem>>, vector<1x32xf32>
    %c0_132 = arith.constant 0 : index
    %c0_133 = arith.constant 0 : index
    %203 = vector.load %arg43[%c0_132, %c0_133] : memref<1x32xf32, #tpu.memory_space<vmem>>, vector<1x32xf32>
    %c0_134 = arith.constant 0 : index
    %c0_135 = arith.constant 0 : index
    %204 = vector.load %arg44[%c0_134, %c0_135] : memref<1x32xf32, #tpu.memory_space<vmem>>, vector<1x32xf32>
    %cst_136 = arith.constant dense<0.000000e+00> : vector<2x32xf32>
    %205 = tpu.matmul %196, %197, %cst_136 {dimension_numbers = #tpu.dot_dimension_numbers<[1], [0], [0], [1], [0, 0, 1, 1], [], []>} : vector<2x32xf32>, vector<32x32xf32>, vector<2x32xf32> -> vector<2x32xf32>
    %206 = vector.broadcast %198 : vector<1x32xf32> to vector<2x32xf32>
    %207 = arith.addf %205, %206 : vector<2x32xf32>
    %cst_137 = arith.constant 0.000000e+00 : f32
    %208 = vector.broadcast %cst_137 : f32 to vector<2x32xf32>
    %209 = arith.maximumf %207, %208 : vector<2x32xf32>
    %cst_138 = arith.constant dense<0.000000e+00> : vector<2x32xf32>
    %210 = tpu.matmul %209, %199, %cst_138 {dimension_numbers = #tpu.dot_dimension_numbers<[1], [0], [0], [1], [0, 0, 1, 1], [], []>} : vector<2x32xf32>, vector<32x32xf32>, vector<2x32xf32> -> vector<2x32xf32>
    %211 = vector.broadcast %200 : vector<1x32xf32> to vector<2x32xf32>
    %212 = arith.addf %210, %211 : vector<2x32xf32>
    %cst_139 = arith.constant dense<0.000000e+00> : vector<2x32xf32>
    %213 = tpu.matmul %196, %201, %cst_139 {dimension_numbers = #tpu.dot_dimension_numbers<[1], [0], [0], [1], [0, 0, 1, 1], [], []>} : vector<2x32xf32>, vector<32x32xf32>, vector<2x32xf32> -> vector<2x32xf32>
    %214 = arith.addf %212, %213 : vector<2x32xf32>
    %215 = vector.broadcast %202 : vector<1x32xf32> to vector<2x32xf32>
    %216 = arith.addf %214, %215 : vector<2x32xf32>
    %cst_140 = arith.constant dense<0.000000e+00> : vector<2xf32>
    %217 = vector.multi_reduction <add>, %216, %cst_140 [1] : vector<2x32xf32> to vector<2xf32>
    %218 = vector.shape_cast %217 : vector<2xf32> to vector<2x1xf32>
    %cst_141 = arith.constant 3.200000e+01 : f32
    %219 = vector.broadcast %cst_141 : f32 to vector<2x1xf32>
    %220 = arith.divf %218, %219 : vector<2x1xf32>
    %221 = vector.broadcast %220 : vector<2x1xf32> to vector<2x32xf32>
    %222 = arith.subf %216, %221 : vector<2x32xf32>
    %223 = arith.mulf %222, %222 : vector<2x32xf32>
    %cst_142 = arith.constant dense<0.000000e+00> : vector<2xf32>
    %224 = vector.multi_reduction <add>, %223, %cst_142 [1] : vector<2x32xf32> to vector<2xf32>
    %225 = vector.shape_cast %224 : vector<2xf32> to vector<2x1xf32>
    %cst_143 = arith.constant 3.200000e+01 : f32
    %226 = vector.broadcast %cst_143 : f32 to vector<2x1xf32>
    %227 = arith.divf %225, %226 : vector<2x1xf32>
    %228 = vector.broadcast %220 : vector<2x1xf32> to vector<2x32xf32>
    %229 = arith.subf %216, %228 : vector<2x32xf32>
    %cst_144 = arith.constant 9.99999974E-6 : f32
    %230 = vector.broadcast %cst_144 : f32 to vector<2x1xf32>
    %231 = arith.addf %227, %230 : vector<2x1xf32>
    %232 = math.rsqrt %231 : vector<2x1xf32>
    %233 = vector.broadcast %232 : vector<2x1xf32> to vector<2x32xf32>
    %234 = arith.mulf %229, %233 : vector<2x32xf32>
    %235 = vector.broadcast %203 : vector<1x32xf32> to vector<2x32xf32>
    %236 = arith.mulf %234, %235 : vector<2x32xf32>
    %237 = vector.broadcast %204 : vector<1x32xf32> to vector<2x32xf32>
    %238 = arith.addf %236, %237 : vector<2x32xf32>
    %c0_145 = arith.constant 0 : index
    %c0_146 = arith.constant 0 : index
    %239 = vector.load %arg45[%c0_145, %c0_146] : memref<32x32xf32, #tpu.memory_space<vmem>>, vector<32x32xf32>
    %c0_147 = arith.constant 0 : index
    %c0_148 = arith.constant 0 : index
    %240 = vector.load %arg46[%c0_147, %c0_148] : memref<1x32xf32, #tpu.memory_space<vmem>>, vector<1x32xf32>
    %c0_149 = arith.constant 0 : index
    %c0_150 = arith.constant 0 : index
    %241 = vector.load %arg47[%c0_149, %c0_150] : memref<32x12xf32, #tpu.memory_space<vmem>>, vector<32x12xf32>
    %c0_151 = arith.constant 0 : index
    %c0_152 = arith.constant 0 : index
    %242 = vector.load %arg48[%c0_151, %c0_152] : memref<1x12xf32, #tpu.memory_space<vmem>>, vector<1x12xf32>
    %c0_153 = arith.constant 0 : index
    %c0_154 = arith.constant 0 : index
    %243 = vector.load %arg49[%c0_153, %c0_154] : memref<32x12xf32, #tpu.memory_space<vmem>>, vector<32x12xf32>
    %c0_155 = arith.constant 0 : index
    %c0_156 = arith.constant 0 : index
    %244 = vector.load %arg50[%c0_155, %c0_156] : memref<1x12xf32, #tpu.memory_space<vmem>>, vector<1x12xf32>
    %c0_157 = arith.constant 0 : index
    %c0_158 = arith.constant 0 : index
    %245 = vector.load %arg51[%c0_157, %c0_158] : memref<1x12xf32, #tpu.memory_space<vmem>>, vector<1x12xf32>
    %c0_159 = arith.constant 0 : index
    %c0_160 = arith.constant 0 : index
    %246 = vector.load %arg52[%c0_159, %c0_160] : memref<1x12xf32, #tpu.memory_space<vmem>>, vector<1x12xf32>
    %cst_161 = arith.constant dense<0.000000e+00> : vector<2x32xf32>
    %247 = tpu.matmul %238, %239, %cst_161 {dimension_numbers = #tpu.dot_dimension_numbers<[1], [0], [0], [1], [0, 0, 1, 1], [], []>} : vector<2x32xf32>, vector<32x32xf32>, vector<2x32xf32> -> vector<2x32xf32>
    %248 = vector.broadcast %240 : vector<1x32xf32> to vector<2x32xf32>
    %249 = arith.addf %247, %248 : vector<2x32xf32>
    %cst_162 = arith.constant 0.000000e+00 : f32
    %250 = vector.broadcast %cst_162 : f32 to vector<2x32xf32>
    %251 = arith.maximumf %249, %250 : vector<2x32xf32>
    %cst_163 = arith.constant dense<0.000000e+00> : vector<2x12xf32>
    %252 = tpu.matmul %251, %241, %cst_163 {dimension_numbers = #tpu.dot_dimension_numbers<[1], [0], [0], [1], [0, 0, 1, 1], [], []>} : vector<2x32xf32>, vector<32x12xf32>, vector<2x12xf32> -> vector<2x12xf32>
    %253 = vector.broadcast %242 : vector<1x12xf32> to vector<2x12xf32>
    %254 = arith.addf %252, %253 : vector<2x12xf32>
    %cst_164 = arith.constant dense<0.000000e+00> : vector<2x12xf32>
    %255 = tpu.matmul %238, %243, %cst_164 {dimension_numbers = #tpu.dot_dimension_numbers<[1], [0], [0], [1], [0, 0, 1, 1], [], []>} : vector<2x32xf32>, vector<32x12xf32>, vector<2x12xf32> -> vector<2x12xf32>
    %256 = arith.addf %254, %255 : vector<2x12xf32>
    %257 = vector.broadcast %244 : vector<1x12xf32> to vector<2x12xf32>
    %258 = arith.addf %256, %257 : vector<2x12xf32>
    %cst_165 = arith.constant dense<0.000000e+00> : vector<2xf32>
    %259 = vector.multi_reduction <add>, %258, %cst_165 [1] : vector<2x12xf32> to vector<2xf32>
    %260 = vector.shape_cast %259 : vector<2xf32> to vector<2x1xf32>
    %cst_166 = arith.constant 1.200000e+01 : f32
    %261 = vector.broadcast %cst_166 : f32 to vector<2x1xf32>
    %262 = arith.divf %260, %261 : vector<2x1xf32>
    %263 = vector.broadcast %262 : vector<2x1xf32> to vector<2x12xf32>
    %264 = arith.subf %258, %263 : vector<2x12xf32>
    %265 = arith.mulf %264, %264 : vector<2x12xf32>
    %cst_167 = arith.constant dense<0.000000e+00> : vector<2xf32>
    %266 = vector.multi_reduction <add>, %265, %cst_167 [1] : vector<2x12xf32> to vector<2xf32>
    %267 = vector.shape_cast %266 : vector<2xf32> to vector<2x1xf32>
    %cst_168 = arith.constant 1.200000e+01 : f32
    %268 = vector.broadcast %cst_168 : f32 to vector<2x1xf32>
    %269 = arith.divf %267, %268 : vector<2x1xf32>
    %270 = vector.broadcast %262 : vector<2x1xf32> to vector<2x12xf32>
    %271 = arith.subf %258, %270 : vector<2x12xf32>
    %cst_169 = arith.constant 9.99999974E-6 : f32
    %272 = vector.broadcast %cst_169 : f32 to vector<2x1xf32>
    %273 = arith.addf %269, %272 : vector<2x1xf32>
    %274 = math.rsqrt %273 : vector<2x1xf32>
    %275 = vector.broadcast %274 : vector<2x1xf32> to vector<2x12xf32>
    %276 = arith.mulf %271, %275 : vector<2x12xf32>
    %277 = vector.broadcast %245 : vector<1x12xf32> to vector<2x12xf32>
    %278 = arith.mulf %276, %277 : vector<2x12xf32>
    %279 = vector.broadcast %246 : vector<1x12xf32> to vector<2x12xf32>
    %280 = arith.addf %278, %279 : vector<2x12xf32>
    %c0_170 = arith.constant 0 : index
    %c0_171 = arith.constant 0 : index
    %281 = vector.load %arg53[%c0_170, %c0_171] : memref<3x16xf32, #tpu.memory_space<vmem>>, vector<3x16xf32>
    %c0_172 = arith.constant 0 : index
    %c0_173 = arith.constant 0 : index
    %282 = vector.load %arg54[%c0_172, %c0_173] : memref<2x16xf32, #tpu.memory_space<vmem>>, vector<2x16xf32>
    %c0_174 = arith.constant 0 : index
    %c0_175 = arith.constant 0 : index
    %283 = vector.load %arg55[%c0_174, %c0_175] : memref<1x16xf32, #tpu.memory_space<vmem>>, vector<1x16xf32>
    %c0_176 = arith.constant 0 : index
    %c0_177 = arith.constant 0 : index
    %284 = vector.load %arg56[%c0_176, %c0_177] : memref<16x4xf32, #tpu.memory_space<vmem>>, vector<16x4xf32>
    %c0_178 = arith.constant 0 : index
    %c0_179 = arith.constant 0 : index
    %285 = vector.load %arg57[%c0_178, %c0_179] : memref<1x4xf32, #tpu.memory_space<vmem>>, vector<1x4xf32>
    %c0_180 = arith.constant 0 : index
    %c0_181 = arith.constant 0 : index
    %286 = vector.load %arg58[%c0_180, %c0_181] : memref<3x4xf32, #tpu.memory_space<vmem>>, vector<3x4xf32>
    %c0_182 = arith.constant 0 : index
    %c0_183 = arith.constant 0 : index
    %287 = vector.load %arg59[%c0_182, %c0_183] : memref<2x4xf32, #tpu.memory_space<vmem>>, vector<2x4xf32>
    %c0_184 = arith.constant 0 : index
    %c0_185 = arith.constant 0 : index
    %288 = vector.load %arg60[%c0_184, %c0_185] : memref<1x4xf32, #tpu.memory_space<vmem>>, vector<1x4xf32>
    %c0_186 = arith.constant 0 : index
    %c0_187 = arith.constant 0 : index
    %289 = vector.load %arg61[%c0_186, %c0_187] : memref<1x4xf32, #tpu.memory_space<vmem>>, vector<1x4xf32>
    %c0_188 = arith.constant 0 : index
    %c0_189 = arith.constant 0 : index
    %290 = vector.load %arg62[%c0_188, %c0_189] : memref<1x4xf32, #tpu.memory_space<vmem>>, vector<1x4xf32>
    %291 = vector.extract_strided_slice %0 {offsets = [0, 0], sizes = [2, 4], strides = [1, 1]} : vector<2x32xf32> to vector<2x4xf32>
    %292 = vector.extract_strided_slice %0 {offsets = [0, 4], sizes = [2, 4], strides = [1, 1]} : vector<2x32xf32> to vector<2x4xf32>
    %293 = vector.extract_strided_slice %0 {offsets = [0, 8], sizes = [2, 4], strides = [1, 1]} : vector<2x32xf32> to vector<2x4xf32>
    %294 = vector.extract_strided_slice %0 {offsets = [0, 12], sizes = [2, 4], strides = [1, 1]} : vector<2x32xf32> to vector<2x4xf32>
    %295 = vector.extract_strided_slice %0 {offsets = [0, 16], sizes = [2, 4], strides = [1, 1]} : vector<2x32xf32> to vector<2x4xf32>
    %296 = vector.extract_strided_slice %0 {offsets = [0, 20], sizes = [2, 4], strides = [1, 1]} : vector<2x32xf32> to vector<2x4xf32>
    %297 = vector.extract_strided_slice %0 {offsets = [0, 24], sizes = [2, 4], strides = [1, 1]} : vector<2x32xf32> to vector<2x4xf32>
    %298 = vector.extract_strided_slice %0 {offsets = [0, 28], sizes = [2, 4], strides = [1, 1]} : vector<2x32xf32> to vector<2x4xf32>
    %299 = vector.extract_strided_slice %280 {offsets = [0, 0], sizes = [2, 3], strides = [1, 1]} : vector<2x12xf32> to vector<2x3xf32>
    %300 = vector.extract_strided_slice %86 {offsets = [0, 0], sizes = [2, 2], strides = [1, 1]} : vector<8x2xf32> to vector<2x2xf32>
    %cst_190 = arith.constant dense<0.000000e+00> : vector<2x16xf32>
    %301 = tpu.matmul %299, %281, %cst_190 {dimension_numbers = #tpu.dot_dimension_numbers<[1], [0], [0], [1], [0, 0, 1, 1], [], []>} : vector<2x3xf32>, vector<3x16xf32>, vector<2x16xf32> -> vector<2x16xf32>
    %cst_191 = arith.constant dense<0.000000e+00> : vector<2x16xf32>
    %302 = tpu.matmul %300, %282, %cst_191 {dimension_numbers = #tpu.dot_dimension_numbers<[1], [0], [0], [1], [0, 0, 1, 1], [], []>} : vector<2x2xf32>, vector<2x16xf32>, vector<2x16xf32> -> vector<2x16xf32>
    %303 = arith.addf %301, %302 : vector<2x16xf32>
    %304 = vector.broadcast %283 : vector<1x16xf32> to vector<2x16xf32>
    %305 = arith.addf %303, %304 : vector<2x16xf32>
    %cst_192 = arith.constant 0.000000e+00 : f32
    %306 = vector.broadcast %cst_192 : f32 to vector<2x16xf32>
    %307 = arith.maximumf %305, %306 : vector<2x16xf32>
    %cst_193 = arith.constant dense<0.000000e+00> : vector<2x4xf32>
    %308 = tpu.matmul %307, %284, %cst_193 {dimension_numbers = #tpu.dot_dimension_numbers<[1], [0], [0], [1], [0, 0, 1, 1], [], []>} : vector<2x16xf32>, vector<16x4xf32>, vector<2x4xf32> -> vector<2x4xf32>
    %309 = vector.broadcast %285 : vector<1x4xf32> to vector<2x4xf32>
    %310 = arith.addf %308, %309 : vector<2x4xf32>
    %cst_194 = arith.constant dense<0.000000e+00> : vector<2x4xf32>
    %311 = tpu.matmul %299, %286, %cst_194 {dimension_numbers = #tpu.dot_dimension_numbers<[1], [0], [0], [1], [0, 0, 1, 1], [], []>} : vector<2x3xf32>, vector<3x4xf32>, vector<2x4xf32> -> vector<2x4xf32>
    %312 = arith.addf %310, %311 : vector<2x4xf32>
    %cst_195 = arith.constant dense<0.000000e+00> : vector<2x4xf32>
    %313 = tpu.matmul %300, %287, %cst_195 {dimension_numbers = #tpu.dot_dimension_numbers<[1], [0], [0], [1], [0, 0, 1, 1], [], []>} : vector<2x2xf32>, vector<2x4xf32>, vector<2x4xf32> -> vector<2x4xf32>
    %314 = arith.addf %312, %313 : vector<2x4xf32>
    %315 = vector.broadcast %288 : vector<1x4xf32> to vector<2x4xf32>
    %316 = arith.addf %314, %315 : vector<2x4xf32>
    %cst_196 = arith.constant dense<0.000000e+00> : vector<2xf32>
    %317 = vector.multi_reduction <add>, %316, %cst_196 [1] : vector<2x4xf32> to vector<2xf32>
    %318 = vector.shape_cast %317 : vector<2xf32> to vector<2x1xf32>
    %cst_197 = arith.constant 4.000000e+00 : f32
    %319 = vector.broadcast %cst_197 : f32 to vector<2x1xf32>
    %320 = arith.divf %318, %319 : vector<2x1xf32>
    %321 = vector.broadcast %320 : vector<2x1xf32> to vector<2x4xf32>
    %322 = arith.subf %316, %321 : vector<2x4xf32>
    %323 = arith.mulf %322, %322 : vector<2x4xf32>
    %cst_198 = arith.constant dense<0.000000e+00> : vector<2xf32>
    %324 = vector.multi_reduction <add>, %323, %cst_198 [1] : vector<2x4xf32> to vector<2xf32>
    %325 = vector.shape_cast %324 : vector<2xf32> to vector<2x1xf32>
    %cst_199 = arith.constant 4.000000e+00 : f32
    %326 = vector.broadcast %cst_199 : f32 to vector<2x1xf32>
    %327 = arith.divf %325, %326 : vector<2x1xf32>
    %328 = vector.broadcast %320 : vector<2x1xf32> to vector<2x4xf32>
    %329 = arith.subf %316, %328 : vector<2x4xf32>
    %cst_200 = arith.constant 9.99999974E-6 : f32
    %330 = vector.broadcast %cst_200 : f32 to vector<2x1xf32>
    %331 = arith.addf %327, %330 : vector<2x1xf32>
    %332 = math.rsqrt %331 : vector<2x1xf32>
    %333 = vector.broadcast %332 : vector<2x1xf32> to vector<2x4xf32>
    %334 = arith.mulf %329, %333 : vector<2x4xf32>
    %335 = vector.broadcast %289 : vector<1x4xf32> to vector<2x4xf32>
    %336 = arith.mulf %334, %335 : vector<2x4xf32>
    %337 = vector.broadcast %290 : vector<1x4xf32> to vector<2x4xf32>
    %338 = arith.addf %336, %337 : vector<2x4xf32>
    %c0_201 = arith.constant 0 : index
    %c0_202 = arith.constant 0 : index
    %339 = memref.load %arg3[%c0_201, %c0_202] : memref<8x4xf32, #tpu.memory_space<smem>>
    %340 = vector.broadcast %339 : f32 to vector<2x4xf32>
    %341 = arith.mulf %291, %340 : vector<2x4xf32>
    %c1 = arith.constant 1 : index
    %c0_203 = arith.constant 0 : index
    %342 = memref.load %arg3[%c1, %c0_203] : memref<8x4xf32, #tpu.memory_space<smem>>
    %343 = vector.broadcast %342 : f32 to vector<2x4xf32>
    %344 = arith.mulf %292, %343 : vector<2x4xf32>
    %345 = arith.addf %341, %344 : vector<2x4xf32>
    %c2 = arith.constant 2 : index
    %c0_204 = arith.constant 0 : index
    %346 = memref.load %arg3[%c2, %c0_204] : memref<8x4xf32, #tpu.memory_space<smem>>
    %347 = vector.broadcast %346 : f32 to vector<2x4xf32>
    %348 = arith.mulf %293, %347 : vector<2x4xf32>
    %349 = arith.addf %345, %348 : vector<2x4xf32>
    %c3 = arith.constant 3 : index
    %c0_205 = arith.constant 0 : index
    %350 = memref.load %arg3[%c3, %c0_205] : memref<8x4xf32, #tpu.memory_space<smem>>
    %351 = vector.broadcast %350 : f32 to vector<2x4xf32>
    %352 = arith.mulf %294, %351 : vector<2x4xf32>
    %353 = arith.addf %349, %352 : vector<2x4xf32>
    %c4 = arith.constant 4 : index
    %c0_206 = arith.constant 0 : index
    %354 = memref.load %arg3[%c4, %c0_206] : memref<8x4xf32, #tpu.memory_space<smem>>
    %355 = vector.broadcast %354 : f32 to vector<2x4xf32>
    %356 = arith.mulf %295, %355 : vector<2x4xf32>
    %357 = arith.addf %353, %356 : vector<2x4xf32>
    %c5 = arith.constant 5 : index
    %c0_207 = arith.constant 0 : index
    %358 = memref.load %arg3[%c5, %c0_207] : memref<8x4xf32, #tpu.memory_space<smem>>
    %359 = vector.broadcast %358 : f32 to vector<2x4xf32>
    %360 = arith.mulf %296, %359 : vector<2x4xf32>
    %361 = arith.addf %357, %360 : vector<2x4xf32>
    %c6 = arith.constant 6 : index
    %c0_208 = arith.constant 0 : index
    %362 = memref.load %arg3[%c6, %c0_208] : memref<8x4xf32, #tpu.memory_space<smem>>
    %363 = vector.broadcast %362 : f32 to vector<2x4xf32>
    %364 = arith.mulf %297, %363 : vector<2x4xf32>
    %365 = arith.addf %361, %364 : vector<2x4xf32>
    %c7 = arith.constant 7 : index
    %c0_209 = arith.constant 0 : index
    %366 = memref.load %arg3[%c7, %c0_209] : memref<8x4xf32, #tpu.memory_space<smem>>
    %367 = vector.broadcast %366 : f32 to vector<2x4xf32>
    %368 = arith.mulf %298, %367 : vector<2x4xf32>
    %369 = arith.addf %365, %368 : vector<2x4xf32>
    %370 = arith.addf %338, %369 : vector<2x4xf32>
    %c0_210 = arith.constant 0 : index
    %c0_211 = arith.constant 0 : index
    %371 = memref.load %arg4[%c0_210, %c0_211] : memref<1x4xf32, #tpu.memory_space<smem>>
    %372 = vector.broadcast %371 : f32 to vector<2x4xf32>
    %373 = arith.addf %370, %372 : vector<2x4xf32>
    %c0_212 = arith.constant 0 : index
    %c0_213 = arith.constant 0 : index
    %c0_214 = arith.constant 0 : index
    %374 = vector.load %arg63[%c0_212, %c0_213, %c0_214] : memref<4x2x4xf32, #tpu.memory_space<vmem>>, vector<1x2x4xf32>
    %375 = vector.shape_cast %374 : vector<1x2x4xf32> to vector<2x4xf32>
    %376 = vector.shape_cast %373 : vector<2x4xf32> to vector<1x2x4xf32>
    tpu.vector_store %arg63[%c0_212, %c0_213, %c0_214], %376 {strides = array<i32>} : memref<4x2x4xf32, #tpu.memory_space<vmem>>, vector<1x2x4xf32>,
    %377 = vector.extract_strided_slice %280 {offsets = [0, 3], sizes = [2, 3], strides = [1, 1]} : vector<2x12xf32> to vector<2x3xf32>
    %378 = vector.extract_strided_slice %86 {offsets = [2, 0], sizes = [2, 2], strides = [1, 1]} : vector<8x2xf32> to vector<2x2xf32>
    %cst_215 = arith.constant dense<0.000000e+00> : vector<2x16xf32>
    %379 = tpu.matmul %377, %281, %cst_215 {dimension_numbers = #tpu.dot_dimension_numbers<[1], [0], [0], [1], [0, 0, 1, 1], [], []>} : vector<2x3xf32>, vector<3x16xf32>, vector<2x16xf32> -> vector<2x16xf32>
    %cst_216 = arith.constant dense<0.000000e+00> : vector<2x16xf32>
    %380 = tpu.matmul %378, %282, %cst_216 {dimension_numbers = #tpu.dot_dimension_numbers<[1], [0], [0], [1], [0, 0, 1, 1], [], []>} : vector<2x2xf32>, vector<2x16xf32>, vector<2x16xf32> -> vector<2x16xf32>
    %381 = arith.addf %379, %380 : vector<2x16xf32>
    %382 = vector.broadcast %283 : vector<1x16xf32> to vector<2x16xf32>
    %383 = arith.addf %381, %382 : vector<2x16xf32>
    %cst_217 = arith.constant 0.000000e+00 : f32
    %384 = vector.broadcast %cst_217 : f32 to vector<2x16xf32>
    %385 = arith.maximumf %383, %384 : vector<2x16xf32>
    %cst_218 = arith.constant dense<0.000000e+00> : vector<2x4xf32>
    %386 = tpu.matmul %385, %284, %cst_218 {dimension_numbers = #tpu.dot_dimension_numbers<[1], [0], [0], [1], [0, 0, 1, 1], [], []>} : vector<2x16xf32>, vector<16x4xf32>, vector<2x4xf32> -> vector<2x4xf32>
    %387 = vector.broadcast %285 : vector<1x4xf32> to vector<2x4xf32>
    %388 = arith.addf %386, %387 : vector<2x4xf32>
    %cst_219 = arith.constant dense<0.000000e+00> : vector<2x4xf32>
    %389 = tpu.matmul %377, %286, %cst_219 {dimension_numbers = #tpu.dot_dimension_numbers<[1], [0], [0], [1], [0, 0, 1, 1], [], []>} : vector<2x3xf32>, vector<3x4xf32>, vector<2x4xf32> -> vector<2x4xf32>
    %390 = arith.addf %388, %389 : vector<2x4xf32>
    %cst_220 = arith.constant dense<0.000000e+00> : vector<2x4xf32>
    %391 = tpu.matmul %378, %287, %cst_220 {dimension_numbers = #tpu.dot_dimension_numbers<[1], [0], [0], [1], [0, 0, 1, 1], [], []>} : vector<2x2xf32>, vector<2x4xf32>, vector<2x4xf32> -> vector<2x4xf32>
    %392 = arith.addf %390, %391 : vector<2x4xf32>
    %393 = vector.broadcast %288 : vector<1x4xf32> to vector<2x4xf32>
    %394 = arith.addf %392, %393 : vector<2x4xf32>
    %cst_221 = arith.constant dense<0.000000e+00> : vector<2xf32>
    %395 = vector.multi_reduction <add>, %394, %cst_221 [1] : vector<2x4xf32> to vector<2xf32>
    %396 = vector.shape_cast %395 : vector<2xf32> to vector<2x1xf32>
    %cst_222 = arith.constant 4.000000e+00 : f32
    %397 = vector.broadcast %cst_222 : f32 to vector<2x1xf32>
    %398 = arith.divf %396, %397 : vector<2x1xf32>
    %399 = vector.broadcast %398 : vector<2x1xf32> to vector<2x4xf32>
    %400 = arith.subf %394, %399 : vector<2x4xf32>
    %401 = arith.mulf %400, %400 : vector<2x4xf32>
    %cst_223 = arith.constant dense<0.000000e+00> : vector<2xf32>
    %402 = vector.multi_reduction <add>, %401, %cst_223 [1] : vector<2x4xf32> to vector<2xf32>
    %403 = vector.shape_cast %402 : vector<2xf32> to vector<2x1xf32>
    %cst_224 = arith.constant 4.000000e+00 : f32
    %404 = vector.broadcast %cst_224 : f32 to vector<2x1xf32>
    %405 = arith.divf %403, %404 : vector<2x1xf32>
    %406 = vector.broadcast %398 : vector<2x1xf32> to vector<2x4xf32>
    %407 = arith.subf %394, %406 : vector<2x4xf32>
    %cst_225 = arith.constant 9.99999974E-6 : f32
    %408 = vector.broadcast %cst_225 : f32 to vector<2x1xf32>
    %409 = arith.addf %405, %408 : vector<2x1xf32>
    %410 = math.rsqrt %409 : vector<2x1xf32>
    %411 = vector.broadcast %410 : vector<2x1xf32> to vector<2x4xf32>
    %412 = arith.mulf %407, %411 : vector<2x4xf32>
    %413 = vector.broadcast %289 : vector<1x4xf32> to vector<2x4xf32>
    %414 = arith.mulf %412, %413 : vector<2x4xf32>
    %415 = vector.broadcast %290 : vector<1x4xf32> to vector<2x4xf32>
    %416 = arith.addf %414, %415 : vector<2x4xf32>
    %c0_226 = arith.constant 0 : index
    %c1_227 = arith.constant 1 : index
    %417 = memref.load %arg3[%c0_226, %c1_227] : memref<8x4xf32, #tpu.memory_space<smem>>
    %418 = vector.broadcast %417 : f32 to vector<2x4xf32>
    %419 = arith.mulf %291, %418 : vector<2x4xf32>
    %c1_228 = arith.constant 1 : index
    %c1_229 = arith.constant 1 : index
    %420 = memref.load %arg3[%c1_228, %c1_229] : memref<8x4xf32, #tpu.memory_space<smem>>
    %421 = vector.broadcast %420 : f32 to vector<2x4xf32>
    %422 = arith.mulf %292, %421 : vector<2x4xf32>
    %423 = arith.addf %419, %422 : vector<2x4xf32>
    %c2_230 = arith.constant 2 : index
    %c1_231 = arith.constant 1 : index
    %424 = memref.load %arg3[%c2_230, %c1_231] : memref<8x4xf32, #tpu.memory_space<smem>>
    %425 = vector.broadcast %424 : f32 to vector<2x4xf32>
    %426 = arith.mulf %293, %425 : vector<2x4xf32>
    %427 = arith.addf %423, %426 : vector<2x4xf32>
    %c3_232 = arith.constant 3 : index
    %c1_233 = arith.constant 1 : index
    %428 = memref.load %arg3[%c3_232, %c1_233] : memref<8x4xf32, #tpu.memory_space<smem>>
    %429 = vector.broadcast %428 : f32 to vector<2x4xf32>
    %430 = arith.mulf %294, %429 : vector<2x4xf32>
    %431 = arith.addf %427, %430 : vector<2x4xf32>
    %c4_234 = arith.constant 4 : index
    %c1_235 = arith.constant 1 : index
    %432 = memref.load %arg3[%c4_234, %c1_235] : memref<8x4xf32, #tpu.memory_space<smem>>
    %433 = vector.broadcast %432 : f32 to vector<2x4xf32>
    %434 = arith.mulf %295, %433 : vector<2x4xf32>
    %435 = arith.addf %431, %434 : vector<2x4xf32>
    %c5_236 = arith.constant 5 : index
    %c1_237 = arith.constant 1 : index
    %436 = memref.load %arg3[%c5_236, %c1_237] : memref<8x4xf32, #tpu.memory_space<smem>>
    %437 = vector.broadcast %436 : f32 to vector<2x4xf32>
    %438 = arith.mulf %296, %437 : vector<2x4xf32>
    %439 = arith.addf %435, %438 : vector<2x4xf32>
    %c6_238 = arith.constant 6 : index
    %c1_239 = arith.constant 1 : index
    %440 = memref.load %arg3[%c6_238, %c1_239] : memref<8x4xf32, #tpu.memory_space<smem>>
    %441 = vector.broadcast %440 : f32 to vector<2x4xf32>
    %442 = arith.mulf %297, %441 : vector<2x4xf32>
    %443 = arith.addf %439, %442 : vector<2x4xf32>
    %c7_240 = arith.constant 7 : index
    %c1_241 = arith.constant 1 : index
    %444 = memref.load %arg3[%c7_240, %c1_241] : memref<8x4xf32, #tpu.memory_space<smem>>
    %445 = vector.broadcast %444 : f32 to vector<2x4xf32>
    %446 = arith.mulf %298, %445 : vector<2x4xf32>
    %447 = arith.addf %443, %446 : vector<2x4xf32>
    %448 = arith.addf %416, %447 : vector<2x4xf32>
    %c0_242 = arith.constant 0 : index
    %c1_243 = arith.constant 1 : index
    %449 = memref.load %arg4[%c0_242, %c1_243] : memref<1x4xf32, #tpu.memory_space<smem>>
    %450 = vector.broadcast %449 : f32 to vector<2x4xf32>
    %451 = arith.addf %448, %450 : vector<2x4xf32>
    %c1_244 = arith.constant 1 : index
    %c0_245 = arith.constant 0 : index
    %c0_246 = arith.constant 0 : index
    %452 = vector.load %arg63[%c1_244, %c0_245, %c0_246] : memref<4x2x4xf32, #tpu.memory_space<vmem>>, vector<1x2x4xf32>
    %453 = vector.shape_cast %452 : vector<1x2x4xf32> to vector<2x4xf32>
    %454 = vector.shape_cast %451 : vector<2x4xf32> to vector<1x2x4xf32>
    tpu.vector_store %arg63[%c1_244, %c0_245, %c0_246], %454 {strides = array<i32>} : memref<4x2x4xf32, #tpu.memory_space<vmem>>, vector<1x2x4xf32>,
    %455 = vector.extract_strided_slice %280 {offsets = [0, 6], sizes = [2, 3], strides = [1, 1]} : vector<2x12xf32> to vector<2x3xf32>
    %456 = vector.extract_strided_slice %86 {offsets = [4, 0], sizes = [2, 2], strides = [1, 1]} : vector<8x2xf32> to vector<2x2xf32>
    %cst_247 = arith.constant dense<0.000000e+00> : vector<2x16xf32>
    %457 = tpu.matmul %455, %281, %cst_247 {dimension_numbers = #tpu.dot_dimension_numbers<[1], [0], [0], [1], [0, 0, 1, 1], [], []>} : vector<2x3xf32>, vector<3x16xf32>, vector<2x16xf32> -> vector<2x16xf32>
    %cst_248 = arith.constant dense<0.000000e+00> : vector<2x16xf32>
    %458 = tpu.matmul %456, %282, %cst_248 {dimension_numbers = #tpu.dot_dimension_numbers<[1], [0], [0], [1], [0, 0, 1, 1], [], []>} : vector<2x2xf32>, vector<2x16xf32>, vector<2x16xf32> -> vector<2x16xf32>
    %459 = arith.addf %457, %458 : vector<2x16xf32>
    %460 = vector.broadcast %283 : vector<1x16xf32> to vector<2x16xf32>
    %461 = arith.addf %459, %460 : vector<2x16xf32>
    %cst_249 = arith.constant 0.000000e+00 : f32
    %462 = vector.broadcast %cst_249 : f32 to vector<2x16xf32>
    %463 = arith.maximumf %461, %462 : vector<2x16xf32>
    %cst_250 = arith.constant dense<0.000000e+00> : vector<2x4xf32>
    %464 = tpu.matmul %463, %284, %cst_250 {dimension_numbers = #tpu.dot_dimension_numbers<[1], [0], [0], [1], [0, 0, 1, 1], [], []>} : vector<2x16xf32>, vector<16x4xf32>, vector<2x4xf32> -> vector<2x4xf32>
    %465 = vector.broadcast %285 : vector<1x4xf32> to vector<2x4xf32>
    %466 = arith.addf %464, %465 : vector<2x4xf32>
    %cst_251 = arith.constant dense<0.000000e+00> : vector<2x4xf32>
    %467 = tpu.matmul %455, %286, %cst_251 {dimension_numbers = #tpu.dot_dimension_numbers<[1], [0], [0], [1], [0, 0, 1, 1], [], []>} : vector<2x3xf32>, vector<3x4xf32>, vector<2x4xf32> -> vector<2x4xf32>
    %468 = arith.addf %466, %467 : vector<2x4xf32>
    %cst_252 = arith.constant dense<0.000000e+00> : vector<2x4xf32>
    %469 = tpu.matmul %456, %287, %cst_252 {dimension_numbers = #tpu.dot_dimension_numbers<[1], [0], [0], [1], [0, 0, 1, 1], [], []>} : vector<2x2xf32>, vector<2x4xf32>, vector<2x4xf32> -> vector<2x4xf32>
    %470 = arith.addf %468, %469 : vector<2x4xf32>
    %471 = vector.broadcast %288 : vector<1x4xf32> to vector<2x4xf32>
    %472 = arith.addf %470, %471 : vector<2x4xf32>
    %cst_253 = arith.constant dense<0.000000e+00> : vector<2xf32>
    %473 = vector.multi_reduction <add>, %472, %cst_253 [1] : vector<2x4xf32> to vector<2xf32>
    %474 = vector.shape_cast %473 : vector<2xf32> to vector<2x1xf32>
    %cst_254 = arith.constant 4.000000e+00 : f32
    %475 = vector.broadcast %cst_254 : f32 to vector<2x1xf32>
    %476 = arith.divf %474, %475 : vector<2x1xf32>
    %477 = vector.broadcast %476 : vector<2x1xf32> to vector<2x4xf32>
    %478 = arith.subf %472, %477 : vector<2x4xf32>
    %479 = arith.mulf %478, %478 : vector<2x4xf32>
    %cst_255 = arith.constant dense<0.000000e+00> : vector<2xf32>
    %480 = vector.multi_reduction <add>, %479, %cst_255 [1] : vector<2x4xf32> to vector<2xf32>
    %481 = vector.shape_cast %480 : vector<2xf32> to vector<2x1xf32>
    %cst_256 = arith.constant 4.000000e+00 : f32
    %482 = vector.broadcast %cst_256 : f32 to vector<2x1xf32>
    %483 = arith.divf %481, %482 : vector<2x1xf32>
    %484 = vector.broadcast %476 : vector<2x1xf32> to vector<2x4xf32>
    %485 = arith.subf %472, %484 : vector<2x4xf32>
    %cst_257 = arith.constant 9.99999974E-6 : f32
    %486 = vector.broadcast %cst_257 : f32 to vector<2x1xf32>
    %487 = arith.addf %483, %486 : vector<2x1xf32>
    %488 = math.rsqrt %487 : vector<2x1xf32>
    %489 = vector.broadcast %488 : vector<2x1xf32> to vector<2x4xf32>
    %490 = arith.mulf %485, %489 : vector<2x4xf32>
    %491 = vector.broadcast %289 : vector<1x4xf32> to vector<2x4xf32>
    %492 = arith.mulf %490, %491 : vector<2x4xf32>
    %493 = vector.broadcast %290 : vector<1x4xf32> to vector<2x4xf32>
    %494 = arith.addf %492, %493 : vector<2x4xf32>
    %c0_258 = arith.constant 0 : index
    %c2_259 = arith.constant 2 : index
    %495 = memref.load %arg3[%c0_258, %c2_259] : memref<8x4xf32, #tpu.memory_space<smem>>
    %496 = vector.broadcast %495 : f32 to vector<2x4xf32>
    %497 = arith.mulf %291, %496 : vector<2x4xf32>
    %c1_260 = arith.constant 1 : index
    %c2_261 = arith.constant 2 : index
    %498 = memref.load %arg3[%c1_260, %c2_261] : memref<8x4xf32, #tpu.memory_space<smem>>
    %499 = vector.broadcast %498 : f32 to vector<2x4xf32>
    %500 = arith.mulf %292, %499 : vector<2x4xf32>
    %501 = arith.addf %497, %500 : vector<2x4xf32>
    %c2_262 = arith.constant 2 : index
    %c2_263 = arith.constant 2 : index
    %502 = memref.load %arg3[%c2_262, %c2_263] : memref<8x4xf32, #tpu.memory_space<smem>>
    %503 = vector.broadcast %502 : f32 to vector<2x4xf32>
    %504 = arith.mulf %293, %503 : vector<2x4xf32>
    %505 = arith.addf %501, %504 : vector<2x4xf32>
    %c3_264 = arith.constant 3 : index
    %c2_265 = arith.constant 2 : index
    %506 = memref.load %arg3[%c3_264, %c2_265] : memref<8x4xf32, #tpu.memory_space<smem>>
    %507 = vector.broadcast %506 : f32 to vector<2x4xf32>
    %508 = arith.mulf %294, %507 : vector<2x4xf32>
    %509 = arith.addf %505, %508 : vector<2x4xf32>
    %c4_266 = arith.constant 4 : index
    %c2_267 = arith.constant 2 : index
    %510 = memref.load %arg3[%c4_266, %c2_267] : memref<8x4xf32, #tpu.memory_space<smem>>
    %511 = vector.broadcast %510 : f32 to vector<2x4xf32>
    %512 = arith.mulf %295, %511 : vector<2x4xf32>
    %513 = arith.addf %509, %512 : vector<2x4xf32>
    %c5_268 = arith.constant 5 : index
    %c2_269 = arith.constant 2 : index
    %514 = memref.load %arg3[%c5_268, %c2_269] : memref<8x4xf32, #tpu.memory_space<smem>>
    %515 = vector.broadcast %514 : f32 to vector<2x4xf32>
    %516 = arith.mulf %296, %515 : vector<2x4xf32>
    %517 = arith.addf %513, %516 : vector<2x4xf32>
    %c6_270 = arith.constant 6 : index
    %c2_271 = arith.constant 2 : index
    %518 = memref.load %arg3[%c6_270, %c2_271] : memref<8x4xf32, #tpu.memory_space<smem>>
    %519 = vector.broadcast %518 : f32 to vector<2x4xf32>
    %520 = arith.mulf %297, %519 : vector<2x4xf32>
    %521 = arith.addf %517, %520 : vector<2x4xf32>
    %c7_272 = arith.constant 7 : index
    %c2_273 = arith.constant 2 : index
    %522 = memref.load %arg3[%c7_272, %c2_273] : memref<8x4xf32, #tpu.memory_space<smem>>
    %523 = vector.broadcast %522 : f32 to vector<2x4xf32>
    %524 = arith.mulf %298, %523 : vector<2x4xf32>
    %525 = arith.addf %521, %524 : vector<2x4xf32>
    %526 = arith.addf %494, %525 : vector<2x4xf32>
    %c0_274 = arith.constant 0 : index
    %c2_275 = arith.constant 2 : index
    %527 = memref.load %arg4[%c0_274, %c2_275] : memref<1x4xf32, #tpu.memory_space<smem>>
    %528 = vector.broadcast %527 : f32 to vector<2x4xf32>
    %529 = arith.addf %526, %528 : vector<2x4xf32>
    %c2_276 = arith.constant 2 : index
    %c0_277 = arith.constant 0 : index
    %c0_278 = arith.constant 0 : index
    %530 = vector.load %arg63[%c2_276, %c0_277, %c0_278] : memref<4x2x4xf32, #tpu.memory_space<vmem>>, vector<1x2x4xf32>
    %531 = vector.shape_cast %530 : vector<1x2x4xf32> to vector<2x4xf32>
    %532 = vector.shape_cast %529 : vector<2x4xf32> to vector<1x2x4xf32>
    tpu.vector_store %arg63[%c2_276, %c0_277, %c0_278], %532 {strides = array<i32>} : memref<4x2x4xf32, #tpu.memory_space<vmem>>, vector<1x2x4xf32>,
    %533 = vector.extract_strided_slice %280 {offsets = [0, 9], sizes = [2, 3], strides = [1, 1]} : vector<2x12xf32> to vector<2x3xf32>
    %534 = vector.extract_strided_slice %86 {offsets = [6, 0], sizes = [2, 2], strides = [1, 1]} : vector<8x2xf32> to vector<2x2xf32>
    %cst_279 = arith.constant dense<0.000000e+00> : vector<2x16xf32>
    %535 = tpu.matmul %533, %281, %cst_279 {dimension_numbers = #tpu.dot_dimension_numbers<[1], [0], [0], [1], [0, 0, 1, 1], [], []>} : vector<2x3xf32>, vector<3x16xf32>, vector<2x16xf32> -> vector<2x16xf32>
    %cst_280 = arith.constant dense<0.000000e+00> : vector<2x16xf32>
    %536 = tpu.matmul %534, %282, %cst_280 {dimension_numbers = #tpu.dot_dimension_numbers<[1], [0], [0], [1], [0, 0, 1, 1], [], []>} : vector<2x2xf32>, vector<2x16xf32>, vector<2x16xf32> -> vector<2x16xf32>
    %537 = arith.addf %535, %536 : vector<2x16xf32>
    %538 = vector.broadcast %283 : vector<1x16xf32> to vector<2x16xf32>
    %539 = arith.addf %537, %538 : vector<2x16xf32>
    %cst_281 = arith.constant 0.000000e+00 : f32
    %540 = vector.broadcast %cst_281 : f32 to vector<2x16xf32>
    %541 = arith.maximumf %539, %540 : vector<2x16xf32>
    %cst_282 = arith.constant dense<0.000000e+00> : vector<2x4xf32>
    %542 = tpu.matmul %541, %284, %cst_282 {dimension_numbers = #tpu.dot_dimension_numbers<[1], [0], [0], [1], [0, 0, 1, 1], [], []>} : vector<2x16xf32>, vector<16x4xf32>, vector<2x4xf32> -> vector<2x4xf32>
    %543 = vector.broadcast %285 : vector<1x4xf32> to vector<2x4xf32>
    %544 = arith.addf %542, %543 : vector<2x4xf32>
    %cst_283 = arith.constant dense<0.000000e+00> : vector<2x4xf32>
    %545 = tpu.matmul %533, %286, %cst_283 {dimension_numbers = #tpu.dot_dimension_numbers<[1], [0], [0], [1], [0, 0, 1, 1], [], []>} : vector<2x3xf32>, vector<3x4xf32>, vector<2x4xf32> -> vector<2x4xf32>
    %546 = arith.addf %544, %545 : vector<2x4xf32>
    %cst_284 = arith.constant dense<0.000000e+00> : vector<2x4xf32>
    %547 = tpu.matmul %534, %287, %cst_284 {dimension_numbers = #tpu.dot_dimension_numbers<[1], [0], [0], [1], [0, 0, 1, 1], [], []>} : vector<2x2xf32>, vector<2x4xf32>, vector<2x4xf32> -> vector<2x4xf32>
    %548 = arith.addf %546, %547 : vector<2x4xf32>
    %549 = vector.broadcast %288 : vector<1x4xf32> to vector<2x4xf32>
    %550 = arith.addf %548, %549 : vector<2x4xf32>
    %cst_285 = arith.constant dense<0.000000e+00> : vector<2xf32>
    %551 = vector.multi_reduction <add>, %550, %cst_285 [1] : vector<2x4xf32> to vector<2xf32>
    %552 = vector.shape_cast %551 : vector<2xf32> to vector<2x1xf32>
    %cst_286 = arith.constant 4.000000e+00 : f32
    %553 = vector.broadcast %cst_286 : f32 to vector<2x1xf32>
    %554 = arith.divf %552, %553 : vector<2x1xf32>
    %555 = vector.broadcast %554 : vector<2x1xf32> to vector<2x4xf32>
    %556 = arith.subf %550, %555 : vector<2x4xf32>
    %557 = arith.mulf %556, %556 : vector<2x4xf32>
    %cst_287 = arith.constant dense<0.000000e+00> : vector<2xf32>
    %558 = vector.multi_reduction <add>, %557, %cst_287 [1] : vector<2x4xf32> to vector<2xf32>
    %559 = vector.shape_cast %558 : vector<2xf32> to vector<2x1xf32>
    %cst_288 = arith.constant 4.000000e+00 : f32
    %560 = vector.broadcast %cst_288 : f32 to vector<2x1xf32>
    %561 = arith.divf %559, %560 : vector<2x1xf32>
    %562 = vector.broadcast %554 : vector<2x1xf32> to vector<2x4xf32>
    %563 = arith.subf %550, %562 : vector<2x4xf32>
    %cst_289 = arith.constant 9.99999974E-6 : f32
    %564 = vector.broadcast %cst_289 : f32 to vector<2x1xf32>
    %565 = arith.addf %561, %564 : vector<2x1xf32>
    %566 = math.rsqrt %565 : vector<2x1xf32>
    %567 = vector.broadcast %566 : vector<2x1xf32> to vector<2x4xf32>
    %568 = arith.mulf %563, %567 : vector<2x4xf32>
    %569 = vector.broadcast %289 : vector<1x4xf32> to vector<2x4xf32>
    %570 = arith.mulf %568, %569 : vector<2x4xf32>
    %571 = vector.broadcast %290 : vector<1x4xf32> to vector<2x4xf32>
    %572 = arith.addf %570, %571 : vector<2x4xf32>
    %c0_290 = arith.constant 0 : index
    %c3_291 = arith.constant 3 : index
    %573 = memref.load %arg3[%c0_290, %c3_291] : memref<8x4xf32, #tpu.memory_space<smem>>
    %574 = vector.broadcast %573 : f32 to vector<2x4xf32>
    %575 = arith.mulf %291, %574 : vector<2x4xf32>
    %c1_292 = arith.constant 1 : index
    %c3_293 = arith.constant 3 : index
    %576 = memref.load %arg3[%c1_292, %c3_293] : memref<8x4xf32, #tpu.memory_space<smem>>
    %577 = vector.broadcast %576 : f32 to vector<2x4xf32>
    %578 = arith.mulf %292, %577 : vector<2x4xf32>
    %579 = arith.addf %575, %578 : vector<2x4xf32>
    %c2_294 = arith.constant 2 : index
    %c3_295 = arith.constant 3 : index
    %580 = memref.load %arg3[%c2_294, %c3_295] : memref<8x4xf32, #tpu.memory_space<smem>>
    %581 = vector.broadcast %580 : f32 to vector<2x4xf32>
    %582 = arith.mulf %293, %581 : vector<2x4xf32>
    %583 = arith.addf %579, %582 : vector<2x4xf32>
    %c3_296 = arith.constant 3 : index
    %c3_297 = arith.constant 3 : index
    %584 = memref.load %arg3[%c3_296, %c3_297] : memref<8x4xf32, #tpu.memory_space<smem>>
    %585 = vector.broadcast %584 : f32 to vector<2x4xf32>
    %586 = arith.mulf %294, %585 : vector<2x4xf32>
    %587 = arith.addf %583, %586 : vector<2x4xf32>
    %c4_298 = arith.constant 4 : index
    %c3_299 = arith.constant 3 : index
    %588 = memref.load %arg3[%c4_298, %c3_299] : memref<8x4xf32, #tpu.memory_space<smem>>
    %589 = vector.broadcast %588 : f32 to vector<2x4xf32>
    %590 = arith.mulf %295, %589 : vector<2x4xf32>
    %591 = arith.addf %587, %590 : vector<2x4xf32>
    %c5_300 = arith.constant 5 : index
    %c3_301 = arith.constant 3 : index
    %592 = memref.load %arg3[%c5_300, %c3_301] : memref<8x4xf32, #tpu.memory_space<smem>>
    %593 = vector.broadcast %592 : f32 to vector<2x4xf32>
    %594 = arith.mulf %296, %593 : vector<2x4xf32>
    %595 = arith.addf %591, %594 : vector<2x4xf32>
    %c6_302 = arith.constant 6 : index
    %c3_303 = arith.constant 3 : index
    %596 = memref.load %arg3[%c6_302, %c3_303] : memref<8x4xf32, #tpu.memory_space<smem>>
    %597 = vector.broadcast %596 : f32 to vector<2x4xf32>
    %598 = arith.mulf %297, %597 : vector<2x4xf32>
    %599 = arith.addf %595, %598 : vector<2x4xf32>
    %c7_304 = arith.constant 7 : index
    %c3_305 = arith.constant 3 : index
    %600 = memref.load %arg3[%c7_304, %c3_305] : memref<8x4xf32, #tpu.memory_space<smem>>
    %601 = vector.broadcast %600 : f32 to vector<2x4xf32>
    %602 = arith.mulf %298, %601 : vector<2x4xf32>
    %603 = arith.addf %599, %602 : vector<2x4xf32>
    %604 = arith.addf %572, %603 : vector<2x4xf32>
    %c0_306 = arith.constant 0 : index
    %c3_307 = arith.constant 3 : index
    %605 = memref.load %arg4[%c0_306, %c3_307] : memref<1x4xf32, #tpu.memory_space<smem>>
    %606 = vector.broadcast %605 : f32 to vector<2x4xf32>
    %607 = arith.addf %604, %606 : vector<2x4xf32>
    %c3_308 = arith.constant 3 : index
    %c0_309 = arith.constant 0 : index
    %c0_310 = arith.constant 0 : index
    %608 = vector.load %arg63[%c3_308, %c0_309, %c0_310] : memref<4x2x4xf32, #tpu.memory_space<vmem>>, vector<1x2x4xf32>
    %609 = vector.shape_cast %608 : vector<1x2x4xf32> to vector<2x4xf32>
    %610 = vector.shape_cast %607 : vector<2x4xf32> to vector<1x2x4xf32>
    tpu.vector_store %arg63[%c3_308, %c0_309, %c0_310], %610 {strides = array<i32>} : memref<4x2x4xf32, #tpu.memory_space<vmem>>, vector<1x2x4xf32>,
    return
  }
}

</mosaic_0001>

<llo_original>
// kernel: _lambda_.1
$region0: #{_lambda_.1}
  #allocation0 [shape = 'u32[]', space=smem, size = 0x4, offset = 0x4, fixed_abs, tag = 'smem constant byte address 0x4 - core index']
  #allocation1 [shape = 'u32[144,128]{1,0:T(1,128)}', space=vmem, size = 0x12000, scoped, tag = 'internal scratch']
  #allocation2 [shape = 'f32[2,56]{1,0:T(2,128)}', space=vmem, size = 0x400, scoped, tag = 'scratch operand']
  %s0 = inlined_call_operand.smem [shape: u32[64], index: -1, kind: input, shape index: {}]
  %s1 = sld [smem:[%s0]]
  %s2 = scalar_lea.smem %s0, 1
  %s3 = sld [smem:[%s2]]
  %s4 = scalar_lea.smem %s0, 2
  %s5 = sld [smem:[%s4]]
  %s6 = scalar_lea.smem %s0, 3
  %s7 = sld [smem:[%s6]]
  %s8 = scalar_lea.smem %s0, 4
  %s9 = sld [smem:[%s8]]
  %s10 = scalar_lea.smem %s0, 5
  %s11 = sld [smem:[%s10]]
  %s12 = scalar_lea.smem %s0, 6
  %s13 = sld [smem:[%s12]]
  %s14 = scalar_lea.smem %s0, 7
  %s15 = sld [smem:[%s14]]
  %s16 = scalar_lea.smem %s0, 8
  %s17 = sld [smem:[%s16]]
  %s18 = scalar_lea.smem %s0, 9
  %s19 = sld [smem:[%s18]]
  %s20 = scalar_lea.smem %s0, 10
  %s21 = sld [smem:[%s20]]
  %s22 = scalar_lea.smem %s0, 11
  %s23 = sld [smem:[%s22]]
  %s24 = scalar_lea.smem %s0, 12
  %s25 = sld [smem:[%s24]]
  %s26 = scalar_lea.smem %s0, 13
  %s27 = sld [smem:[%s26]]
  %s28 = scalar_lea.smem %s0, 14
  %s29 = sld [smem:[%s28]]
  %s30 = scalar_lea.smem %s0, 15
  %s31 = sld [smem:[%s30]]
  %s32 = scalar_lea.smem %s0, 16
  %s33 = sld [smem:[%s32]]
  %s34 = scalar_lea.smem %s0, 17
  %s35 = sld [smem:[%s34]]
  %s36 = scalar_lea.smem %s0, 18
  %s37 = sld [smem:[%s36]]
  %s38 = scalar_lea.smem %s0, 19
  %s39 = sld [smem:[%s38]]
  %s40 = scalar_lea.smem %s0, 20
  %s41 = sld [smem:[%s40]]
  %s42 = scalar_lea.smem %s0, 21
  %s43 = sld [smem:[%s42]]
  %s44 = scalar_lea.smem %s0, 22
  %s45 = sld [smem:[%s44]]
  %s46 = scalar_lea.smem %s0, 23
  %s47 = sld [smem:[%s46]]
  %s48 = scalar_lea.smem %s0, 24
  %s49 = sld [smem:[%s48]]
  %s50 = scalar_lea.smem %s0, 25
  %s51 = sld [smem:[%s50]]
  %s52 = scalar_lea.smem %s0, 26
  %s53 = sld [smem:[%s52]]
  %s54 = scalar_lea.smem %s0, 27
  %s55 = sld [smem:[%s54]]
  %s56 = scalar_lea.smem %s0, 28
  %s57 = sld [smem:[%s56]]
  %s58 = scalar_lea.smem %s0, 29
  %s59 = sld [smem:[%s58]]
  %s60 = scalar_lea.smem %s0, 30
  %s61 = sld [smem:[%s60]]
  %s62 = scalar_lea.smem %s0, 31
  %s63 = sld [smem:[%s62]]
  %s64 = scalar_lea.smem %s0, 32
  %s65 = sld [smem:[%s64]]
  %s66 = scalar_lea.smem %s0, 33
  %s67 = sld [smem:[%s66]]
  %s68 = scalar_lea.smem %s0, 34
  %s69 = sld [smem:[%s68]]
  %s70 = scalar_lea.smem %s0, 35
  %s71 = sld [smem:[%s70]]
  %s72 = scalar_lea.smem %s0, 36
  %s73 = sld [smem:[%s72]]
  %s74 = scalar_lea.smem %s0, 37
  %s75 = sld [smem:[%s74]]
  %s76 = scalar_lea.smem %s0, 38
  %s77 = sld [smem:[%s76]]
  %s78 = scalar_lea.smem %s0, 39
  %s79 = sld [smem:[%s78]]
  %s80 = scalar_lea.smem %s0, 40
  %s81 = sld [smem:[%s80]]
  %s82 = scalar_lea.smem %s0, 41
  %s83 = sld [smem:[%s82]]
  %s84 = scalar_lea.smem %s0, 42
  %s85 = sld [smem:[%s84]]
  %s86 = scalar_lea.smem %s0, 43
  %s87 = sld [smem:[%s86]]
  %s88 = scalar_lea.smem %s0, 44
  %s89 = sld [smem:[%s88]]
  %s90 = scalar_lea.smem %s0, 45
  %s91 = sld [smem:[%s90]]
  %s92 = scalar_lea.smem %s0, 46
  %s93 = sld [smem:[%s92]]
  %s94 = scalar_lea.smem %s0, 47
  %s95 = sld [smem:[%s94]]
  %s96 = scalar_lea.smem %s0, 48
  %s97 = sld [smem:[%s96]]
  %s98 = scalar_lea.smem %s0, 49
  %s99 = sld [smem:[%s98]]
  %s100 = scalar_lea.smem %s0, 50
  %s101 = sld [smem:[%s100]]
  %s102 = scalar_lea.smem %s0, 51
  %s103 = sld [smem:[%s102]]
  %s104 = scalar_lea.smem %s0, 52
  %s105 = sld [smem:[%s104]]
  %s106 = scalar_lea.smem %s0, 53
  %s107 = sld [smem:[%s106]]
  %s108 = scalar_lea.smem %s0, 54
  %s109 = sld [smem:[%s108]]
  %s110 = scalar_lea.smem %s0, 55
  %s111 = sld [smem:[%s110]]
  %s112 = scalar_lea.smem %s0, 56
  %s113 = sld [smem:[%s112]]
  %s114 = scalar_lea.smem %s0, 57
  %s115 = sld [smem:[%s114]]
  %s116 = scalar_lea.smem %s0, 58
  %s117 = sld [smem:[%s116]]
  %s118 = scalar_lea.smem %s0, 59
  %s119 = sld [smem:[%s118]]
  %s120 = scalar_lea.smem %s0, 60
  %s121 = sld [smem:[%s120]]
  %s122 = scalar_lea.smem %s0, 61
  %s123 = sld [smem:[%s122]]
  %s124 = scalar_lea.smem %s0, 62
  %s125 = sld [smem:[%s124]]
  %s126 = scalar_lea.smem %s0, 63
  %s127 = sld [smem:[%s126]]
  %s128 = sld [smem:[#allocation0]]
  $region334: #{_lambda_.1} parent=0
    _
  %s130 = ssub.s32 1, %s128
  %s131 = scalar_select 0, %s130, %s128
  $region1: #{_lambda_.1} parent=0
    #allocation3 [shape = 'u8[4096]{0}', space=smem, size = 0x1000, scoped, tag = 'input window, operand 3, single buffered']
    #allocation4 [shape = 's32[1]{0}', space=sflag, size = 0x4, scoped, tag = 'scoped memory for _lambda_.1']
    #allocation5 [shape = 's32[1]{0}', space=sflag, size = 0x4, scoped, tag = 'scoped memory for _lambda_.1']
    #allocation6 [shape = 'u8[512]{0}', space=smem, size = 0x200, scoped, tag = 'input window, operand 4, single buffered']
    #allocation7 [shape = 's32[1]{0}', space=sflag, size = 0x4, scoped, tag = 'scoped memory for _lambda_.1']
    #allocation8 [shape = 'u8[512]{0}', space=vmem, size = 0x400, scoped, tag = 'input window, operand 36, single buffered']
    #allocation9 [shape = 'u8[512]{0}', space=vmem, size = 0x400, scoped, tag = 'input window, operand 38, single buffered']
    #allocation10 [shape = 's32[1]{0}', space=sflag, size = 0x4, scoped, tag = 'scoped memory for _lambda_.1']
    #allocation11 [shape = 'u8[512]{0}', space=vmem, size = 0x400, scoped, tag = 'input window, operand 40, single buffered']
    #allocation12 [shape = 'u8[512]{0}', space=vmem, size = 0x400, scoped, tag = 'input window, operand 42, single buffered']
    #allocation13 [shape = 's32[1]{0}', space=sflag, size = 0x4, scoped, tag = 'scoped memory for _lambda_.1']
    #allocation14 [shape = 'u8[512]{0}', space=vmem, size = 0x400, scoped, tag = 'input window, operand 43, single buffered']
    #allocation15 [shape = 'u8[512]{0}', space=vmem, size = 0x400, scoped, tag = 'input window, operand 44, single buffered']
    #allocation16 [shape = 's32[1]{0}', space=sflag, size = 0x4, scoped, tag = 'scoped memory for _lambda_.1']
    #allocation17 [shape = 'u8[512]{0}', space=vmem, size = 0x400, scoped, tag = 'input window, operand 46, single buffered']
    #allocation18 [shape = 'u8[512]{0}', space=vmem, size = 0x400, scoped, tag = 'input window, operand 48, single buffered']
    #allocation19 [shape = 's32[1]{0}', space=sflag, size = 0x4, scoped, tag = 'scoped memory for _lambda_.1']
    #allocation20 [shape = 'u8[512]{0}', space=vmem, size = 0x400, scoped, tag = 'input window, operand 50, single buffered']
    #allocation21 [shape = 'u8[512]{0}', space=vmem, size = 0x400, scoped, tag = 'input window, operand 51, single buffered']
    #allocation22 [shape = 's32[1]{0}', space=sflag, size = 0x4, scoped, tag = 'scoped memory for _lambda_.1']
    #allocation23 [shape = 'u8[512]{0}', space=vmem, size = 0x400, scoped, tag = 'input window, operand 52, single buffered']
    #allocation24 [shape = 'u8[512]{0}', space=vmem, size = 0x400, scoped, tag = 'input window, operand 55, single buffered']
    #allocation25 [shape = 's32[1]{0}', space=sflag, size = 0x4, scoped, tag = 'scoped memory for _lambda_.1']
    #allocation26 [shape = 'u8[512]{0}', space=vmem, size = 0x400, scoped, tag = 'input window, operand 57, single buffered']
    #allocation27 [shape = 'u8[512]{0}', space=vmem, size = 0x400, scoped, tag = 'input window, operand 60, single buffered']
    #allocation28 [shape = 's32[1]{0}', space=sflag, size = 0x4, scoped, tag = 'scoped memory for _lambda_.1']
    #allocation29 [shape = 'u8[512]{0}', space=vmem, size = 0x400, scoped, tag = 'input window, operand 61, single buffered']
    #allocation30 [shape = 'u8[512]{0}', space=vmem, size = 0x400, scoped, tag = 'input window, operand 62, single buffered']
    #allocation31 [shape = 's32[1]{0}', space=sflag, size = 0x4, scoped, tag = 'scoped memory for _lambda_.1']
    %132 = vsyncpa [#allocation5], 0
    %133 = vsyncpa [#allocation7], 0
    %134 = vsyncpa [#allocation4], 0
    %135 = vsyncpa [#allocation10], 0
    %136 = vsyncpa [#allocation13], 0
    %137 = vsyncpa [#allocation16], 0
    %138 = vsyncpa [#allocation19], 0
    %139 = vsyncpa [#allocation22], 0
    %140 = vsyncpa [#allocation25], 0
    %141 = vsyncpa [#allocation28], 0
    %142 = vsyncpa [#allocation31], 0
    // Predicated region
    $region2: #{_lambda_.1} parent=1 // pred_check
      _
    $region3: #{_lambda_.1} parent=1 // pred_check_branch
      %144 = sbr.rel (0) target = $region5
    $region4: #{_lambda_.1} parent=1 // pred_region
      _
    $region5: #{_lambda_.1} parent=1 // pred_fallthru
      _
    // Predicated region
    $region6: #{_lambda_.1} parent=1 // pred_check
      _
    $region7: #{_lambda_.1} parent=1 // pred_check_branch
      %146 = sbr.rel (0) target = $region9
    $region8: #{_lambda_.1} parent=1 // pred_region
      _
    $region9: #{_lambda_.1} parent=1 // pred_fallthru
      _
    // Predicated region
    $region10: #{_lambda_.1} parent=1 // pred_check
      _
    $region11: #{_lambda_.1} parent=1 // pred_check_branch
      %148 = sbr.rel (0) target = $region13
    $region12: #{_lambda_.1} parent=1 // pred_region
      _
    $region13: #{_lambda_.1} parent=1 // pred_fallthru
      _
    // Predicated region
    $region14: #{_lambda_.1} parent=1 // pred_check
      _
    $region15: #{_lambda_.1} parent=1 // pred_check_branch
      %150 = sbr.rel (0) target = $region17
    $region16: #{_lambda_.1} parent=1 // pred_region
      %s152 = ssub.s32 128, 128
      %153 = vsyncadd [#allocation5], %s152
      %s155 = sshll.u32 %s7, 4
      %s156 = int_to_ptr.vmem [resolvable:$true] %s155
      %158 = dma.vmem_to_smem %s156, 128, [#allocation3], [#allocation5]
    $region17: #{_lambda_.1} parent=1 // pred_fallthru
      _
    // Predicated region
    $region18: #{_lambda_.1} parent=1 // pred_check
      _
    $region19: #{_lambda_.1} parent=1 // pred_check_branch
      %160 = sbr.rel (0) target = $region21
    $region20: #{_lambda_.1} parent=1 // pred_region
      %s162 = ssub.s32 16, 16
      %163 = vsyncadd [#allocation7], %s162
      %s165 = sshll.u32 %s9, 4
      %s166 = int_to_ptr.vmem [resolvable:$true] %s165
      %168 = dma.vmem_to_smem %s166, 16, [#allocation6], [#allocation7]
    $region21: #{_lambda_.1} parent=1 // pred_fallthru
      _
    // Predicated region
    $region22: #{_lambda_.1} parent=1 // pred_check
      _
    $region23: #{_lambda_.1} parent=1 // pred_check_branch
      %170 = sbr.rel (0) target = $region25
    $region24: #{_lambda_.1} parent=1 // pred_region
      _
    $region25: #{_lambda_.1} parent=1 // pred_fallthru
      _
    // Predicated region
    $region26: #{_lambda_.1} parent=1 // pred_check
      _
    $region27: #{_lambda_.1} parent=1 // pred_check_branch
      %172 = sbr.rel (0) target = $region29
    $region28: #{_lambda_.1} parent=1 // pred_region
      _
    $region29: #{_lambda_.1} parent=1 // pred_fallthru
      _
    // Predicated region
    $region30: #{_lambda_.1} parent=1 // pred_check
      _
    $region31: #{_lambda_.1} parent=1 // pred_check_branch
      %174 = sbr.rel (0) target = $region33
    $region32: #{_lambda_.1} parent=1 // pred_region
      _
    $region33: #{_lambda_.1} parent=1 // pred_fallthru
      _
    // Predicated region
    $region34: #{_lambda_.1} parent=1 // pred_check
      _
    $region35: #{_lambda_.1} parent=1 // pred_check_branch
      %176 = sbr.rel (0) target = $region37
    $region36: #{_lambda_.1} parent=1 // pred_region
      _
    $region37: #{_lambda_.1} parent=1 // pred_fallthru
      _
    // Predicated region
    $region38: #{_lambda_.1} parent=1 // pred_check
      _
    $region39: #{_lambda_.1} parent=1 // pred_check_branch
      %178 = sbr.rel (0) target = $region41
    $region40: #{_lambda_.1} parent=1 // pred_region
      _
    $region41: #{_lambda_.1} parent=1 // pred_fallthru
      _
    // Predicated region
    $region42: #{_lambda_.1} parent=1 // pred_check
      _
    $region43: #{_lambda_.1} parent=1 // pred_check_branch
      %180 = sbr.rel (0) target = $region45
    $region44: #{_lambda_.1} parent=1 // pred_region
      _
    $region45: #{_lambda_.1} parent=1 // pred_fallthru
      _
    // Predicated region
    $region46: #{_lambda_.1} parent=1 // pred_check
      _
    $region47: #{_lambda_.1} parent=1 // pred_check_branch
      %182 = sbr.rel (0) target = $region49
    $region48: #{_lambda_.1} parent=1 // pred_region
      _
    $region49: #{_lambda_.1} parent=1 // pred_fallthru
      _
    // Predicated region
    $region50: #{_lambda_.1} parent=1 // pred_check
      _
    $region51: #{_lambda_.1} parent=1 // pred_check_branch
      %184 = sbr.rel (0) target = $region53
    $region52: #{_lambda_.1} parent=1 // pred_region
      _
    $region53: #{_lambda_.1} parent=1 // pred_fallthru
      _
    // Predicated region
    $region54: #{_lambda_.1} parent=1 // pred_check
      _
    $region55: #{_lambda_.1} parent=1 // pred_check_branch
      %186 = sbr.rel (0) target = $region57
    $region56: #{_lambda_.1} parent=1 // pred_region
      _
    $region57: #{_lambda_.1} parent=1 // pred_fallthru
      _
    // Predicated region
    $region58: #{_lambda_.1} parent=1 // pred_check
      _
    $region59: #{_lambda_.1} parent=1 // pred_check_branch
      %188 = sbr.rel (0) target = $region61
    $region60: #{_lambda_.1} parent=1 // pred_region
      _
    $region61: #{_lambda_.1} parent=1 // pred_fallthru
      _
    // Predicated region
    $region62: #{_lambda_.1} parent=1 // pred_check
      _
    $region63: #{_lambda_.1} parent=1 // pred_check_branch
      %190 = sbr.rel (0) target = $region65
    $region64: #{_lambda_.1} parent=1 // pred_region
      _
    $region65: #{_lambda_.1} parent=1 // pred_fallthru
      _
    // Predicated region
    $region66: #{_lambda_.1} parent=1 // pred_check
      _
    $region67: #{_lambda_.1} parent=1 // pred_check_branch
      %192 = sbr.rel (0) target = $region69
    $region68: #{_lambda_.1} parent=1 // pred_region
      _
    $region69: #{_lambda_.1} parent=1 // pred_fallthru
      _
    // Predicated region
    $region70: #{_lambda_.1} parent=1 // pred_check
      _
    $region71: #{_lambda_.1} parent=1 // pred_check_branch
      %194 = sbr.rel (0) target = $region73
    $region72: #{_lambda_.1} parent=1 // pred_region
      _
    $region73: #{_lambda_.1} parent=1 // pred_fallthru
      _
    // Predicated region
    $region74: #{_lambda_.1} parent=1 // pred_check
      _
    $region75: #{_lambda_.1} parent=1 // pred_check_branch
      %196 = sbr.rel (0) target = $region77
    $region76: #{_lambda_.1} parent=1 // pred_region
      _
    $region77: #{_lambda_.1} parent=1 // pred_fallthru
      _
    // Predicated region
    $region78: #{_lambda_.1} parent=1 // pred_check
      _
    $region79: #{_lambda_.1} parent=1 // pred_check_branch
      %198 = sbr.rel (0) target = $region81
    $region80: #{_lambda_.1} parent=1 // pred_region
      _
    $region81: #{_lambda_.1} parent=1 // pred_fallthru
      _
    // Predicated region
    $region82: #{_lambda_.1} parent=1 // pred_check
      _
    $region83: #{_lambda_.1} parent=1 // pred_check_branch
      %200 = sbr.rel (0) target = $region85
    $region84: #{_lambda_.1} parent=1 // pred_region
      _
    $region85: #{_lambda_.1} parent=1 // pred_fallthru
      _
    // Predicated region
    $region86: #{_lambda_.1} parent=1 // pred_check
      _
    $region87: #{_lambda_.1} parent=1 // pred_check_branch
      %202 = sbr.rel (0) target = $region89
    $region88: #{_lambda_.1} parent=1 // pred_region
      _
    $region89: #{_lambda_.1} parent=1 // pred_fallthru
      _
    // Predicated region
    $region90: #{_lambda_.1} parent=1 // pred_check
      _
    $region91: #{_lambda_.1} parent=1 // pred_check_branch
      %204 = sbr.rel (0) target = $region93
    $region92: #{_lambda_.1} parent=1 // pred_region
      _
    $region93: #{_lambda_.1} parent=1 // pred_fallthru
      _
    // Predicated region
    $region94: #{_lambda_.1} parent=1 // pred_check
      _
    $region95: #{_lambda_.1} parent=1 // pred_check_branch
      %206 = sbr.rel (0) target = $region97
    $region96: #{_lambda_.1} parent=1 // pred_region
      _
    $region97: #{_lambda_.1} parent=1 // pred_fallthru
      _
    // Predicated region
    $region98: #{_lambda_.1} parent=1 // pred_check
      _
    $region99: #{_lambda_.1} parent=1 // pred_check_branch
      %208 = sbr.rel (0) target = $region101
    $region100: #{_lambda_.1} parent=1 // pred_region
      _
    $region101: #{_lambda_.1} parent=1 // pred_fallthru
      _
    // Predicated region
    $region102: #{_lambda_.1} parent=1 // pred_check
      _
    $region103: #{_lambda_.1} parent=1 // pred_check_branch
      %210 = sbr.rel (0) target = $region105
    $region104: #{_lambda_.1} parent=1 // pred_region
      _
    $region105: #{_lambda_.1} parent=1 // pred_fallthru
      _
    // Predicated region
    $region106: #{_lambda_.1} parent=1 // pred_check
      _
    $region107: #{_lambda_.1} parent=1 // pred_check_branch
      %212 = sbr.rel (0) target = $region109
    $region108: #{_lambda_.1} parent=1 // pred_region
      _
    $region109: #{_lambda_.1} parent=1 // pred_fallthru
      _
    // Predicated region
    $region110: #{_lambda_.1} parent=1 // pred_check
      _
    $region111: #{_lambda_.1} parent=1 // pred_check_branch
      %214 = sbr.rel (0) target = $region113
    $region112: #{_lambda_.1} parent=1 // pred_region
      _
    $region113: #{_lambda_.1} parent=1 // pred_fallthru
      _
    // Predicated region
    $region114: #{_lambda_.1} parent=1 // pred_check
      _
    $region115: #{_lambda_.1} parent=1 // pred_check_branch
      %216 = sbr.rel (0) target = $region117
    $region116: #{_lambda_.1} parent=1 // pred_region
      _
    $region117: #{_lambda_.1} parent=1 // pred_fallthru
      _
    // Predicated region
    $region118: #{_lambda_.1} parent=1 // pred_check
      _
    $region119: #{_lambda_.1} parent=1 // pred_check_branch
      %218 = sbr.rel (0) target = $region121
    $region120: #{_lambda_.1} parent=1 // pred_region
      _
    $region121: #{_lambda_.1} parent=1 // pred_fallthru
      _
    // Predicated region
    $region122: #{_lambda_.1} parent=1 // pred_check
      _
    $region123: #{_lambda_.1} parent=1 // pred_check_branch
      %220 = sbr.rel (0) target = $region125
    $region124: #{_lambda_.1} parent=1 // pred_region
      _
    $region125: #{_lambda_.1} parent=1 // pred_fallthru
      _
    // Predicated region
    $region126: #{_lambda_.1} parent=1 // pred_check
      _
    $region127: #{_lambda_.1} parent=1 // pred_check_branch
      %222 = sbr.rel (0) target = $region129
    $region128: #{_lambda_.1} parent=1 // pred_region
      _
    $region129: #{_lambda_.1} parent=1 // pred_fallthru
      _
    // Predicated region
    $region130: #{_lambda_.1} parent=1 // pred_check
      _
    $region131: #{_lambda_.1} parent=1 // pred_check_branch
      %224 = sbr.rel (0) target = $region133
    $region132: #{_lambda_.1} parent=1 // pred_region
      _
    $region133: #{_lambda_.1} parent=1 // pred_fallthru
      _
    // Predicated region
    $region134: #{_lambda_.1} parent=1 // pred_check
      _
    $region135: #{_lambda_.1} parent=1 // pred_check_branch
      %226 = sbr.rel (0) target = $region137
    $region136: #{_lambda_.1} parent=1 // pred_region
      _
    $region137: #{_lambda_.1} parent=1 // pred_fallthru
      _
    // Predicated region
    $region138: #{_lambda_.1} parent=1 // pred_check
      _
    $region139: #{_lambda_.1} parent=1 // pred_check_branch
      %228 = sbr.rel (0) target = $region141
    $region140: #{_lambda_.1} parent=1 // pred_region
      _
    $region141: #{_lambda_.1} parent=1 // pred_fallthru
      _
    // Predicated region
    $region142: #{_lambda_.1} parent=1 // pred_check
      _
    $region143: #{_lambda_.1} parent=1 // pred_check_branch
      %230 = sbr.rel (0) target = $region145
    $region144: #{_lambda_.1} parent=1 // pred_region
      _
    $region145: #{_lambda_.1} parent=1 // pred_fallthru
      _
    // Predicated region
    $region146: #{_lambda_.1} parent=1 // pred_check
      _
    $region147: #{_lambda_.1} parent=1 // pred_check_branch
      %232 = sbr.rel (0) target = $region149
    $region148: #{_lambda_.1} parent=1 // pred_region
      %s234 = ssub.s32 16, 16
      %235 = vsyncadd [#allocation4], %s234
      %s237 = sshll.u32 [#allocation8], 4
      %s238 = int_to_ptr.vmem [resolvable:$true] %s237
      %240 = dma.hbm_to_vmem [thread:$0]  %s73, 16, %s238, [#allocation4]
    $region149: #{_lambda_.1} parent=1 // pred_fallthru
      _
    // Predicated region
    $region150: #{_lambda_.1} parent=1 // pred_check
      _
    $region151: #{_lambda_.1} parent=1 // pred_check_branch
      %242 = sbr.rel (0) target = $region153
    $region152: #{_lambda_.1} parent=1 // pred_region
      _
    $region153: #{_lambda_.1} parent=1 // pred_fallthru
      _
    // Predicated region
    $region154: #{_lambda_.1} parent=1 // pred_check
      _
    $region155: #{_lambda_.1} parent=1 // pred_check_branch
      %244 = sbr.rel (0) target = $region157
    $region156: #{_lambda_.1} parent=1 // pred_region
      %s246 = ssub.s32 16, 16
      %247 = vsyncadd [#allocation10], %s246
      %s249 = sshll.u32 [#allocation9], 4
      %s250 = int_to_ptr.vmem [resolvable:$true] %s249
      %252 = dma.hbm_to_vmem [thread:$0]  %s77, 16, %s250, [#allocation10]
    $region157: #{_lambda_.1} parent=1 // pred_fallthru
      _
    // Predicated region
    $region158: #{_lambda_.1} parent=1 // pred_check
      _
    $region159: #{_lambda_.1} parent=1 // pred_check_branch
      %254 = sbr.rel (0) target = $region161
    $region160: #{_lambda_.1} parent=1 // pred_region
      _
    $region161: #{_lambda_.1} parent=1 // pred_fallthru
      _
    // Predicated region
    $region162: #{_lambda_.1} parent=1 // pred_check
      _
    $region163: #{_lambda_.1} parent=1 // pred_check_branch
      %256 = sbr.rel (0) target = $region165
    $region164: #{_lambda_.1} parent=1 // pred_region
      %s258 = ssub.s32 16, 16
      %259 = vsyncadd [#allocation10], %s258
      %s261 = sshll.u32 [#allocation11], 4
      %s262 = int_to_ptr.vmem [resolvable:$true] %s261
      %264 = dma.hbm_to_vmem [thread:$0]  %s81, 16, %s262, [#allocation10]
    $region165: #{_lambda_.1} parent=1 // pred_fallthru
      _
    // Predicated region
    $region166: #{_lambda_.1} parent=1 // pred_check
      _
    $region167: #{_lambda_.1} parent=1 // pred_check_branch
      %266 = sbr.rel (0) target = $region169
    $region168: #{_lambda_.1} parent=1 // pred_region
      _
    $region169: #{_lambda_.1} parent=1 // pred_fallthru
      _
    // Predicated region
    $region170: #{_lambda_.1} parent=1 // pred_check
      _
    $region171: #{_lambda_.1} parent=1 // pred_check_branch
      %268 = sbr.rel (0) target = $region173
    $region172: #{_lambda_.1} parent=1 // pred_region
      %s270 = ssub.s32 16, 16
      %271 = vsyncadd [#allocation13], %s270
      %s273 = sshll.u32 [#allocation12], 4
      %s274 = int_to_ptr.vmem [resolvable:$true] %s273
      %276 = dma.hbm_to_vmem [thread:$0]  %s85, 16, %s274, [#allocation13]
    $region173: #{_lambda_.1} parent=1 // pred_fallthru
      _
    // Predicated region
    $region174: #{_lambda_.1} parent=1 // pred_check
      _
    $region175: #{_lambda_.1} parent=1 // pred_check_branch
      %278 = sbr.rel (0) target = $region177
    $region176: #{_lambda_.1} parent=1 // pred_region
      %s280 = ssub.s32 16, 16
      %281 = vsyncadd [#allocation13], %s280
      %s283 = sshll.u32 [#allocation14], 4
      %s284 = int_to_ptr.vmem [resolvable:$true] %s283
      %286 = dma.hbm_to_vmem [thread:$0]  %s87, 16, %s284, [#allocation13]
    $region177: #{_lambda_.1} parent=1 // pred_fallthru
      _
    // Predicated region
    $region178: #{_lambda_.1} parent=1 // pred_check
      _
    $region179: #{_lambda_.1} parent=1 // pred_check_branch
      %288 = sbr.rel (0) target = $region181
    $region180: #{_lambda_.1} parent=1 // pred_region
      %s290 = ssub.s32 16, 16
      %291 = vsyncadd [#allocation16], %s290
      %s293 = sshll.u32 [#allocation15], 4
      %s294 = int_to_ptr.vmem [resolvable:$true] %s293
      %296 = dma.hbm_to_vmem [thread:$0]  %s89, 16, %s294, [#allocation16]
    $region181: #{_lambda_.1} parent=1 // pred_fallthru
      _
    // Predicated region
    $region182: #{_lambda_.1} parent=1 // pred_check
      _
    $region183: #{_lambda_.1} parent=1 // pred_check_branch
      %298 = sbr.rel (0) target = $region185
    $region184: #{_lambda_.1} parent=1 // pred_region
      _
    $region185: #{_lambda_.1} parent=1 // pred_fallthru
      _
    // Predicated region
    $region186: #{_lambda_.1} parent=1 // pred_check
      _
    $region187: #{_lambda_.1} parent=1 // pred_check_branch
      %300 = sbr.rel (0) target = $region189
    $region188: #{_lambda_.1} parent=1 // pred_region
      %s302 = ssub.s32 16, 16
      %303 = vsyncadd [#allocation16], %s302
      %s305 = sshll.u32 [#allocation17], 4
      %s306 = int_to_ptr.vmem [resolvable:$true] %s305
      %308 = dma.hbm_to_vmem [thread:$0]  %s93, 16, %s306, [#allocation16]
    $region189: #{_lambda_.1} parent=1 // pred_fallthru
      _
    // Predicated region
    $region190: #{_lambda_.1} parent=1 // pred_check
      _
    $region191: #{_lambda_.1} parent=1 // pred_check_branch
      %310 = sbr.rel (0) target = $region193
    $region192: #{_lambda_.1} parent=1 // pred_region
      _
    $region193: #{_lambda_.1} parent=1 // pred_fallthru
      _
    // Predicated region
    $region194: #{_lambda_.1} parent=1 // pred_check
      _
    $region195: #{_lambda_.1} parent=1 // pred_check_branch
      %312 = sbr.rel (0) target = $region197
    $region196: #{_lambda_.1} parent=1 // pred_region
      %s314 = ssub.s32 16, 16
      %315 = vsyncadd [#allocation19], %s314
      %s317 = sshll.u32 [#allocation18], 4
      %s318 = int_to_ptr.vmem [resolvable:$true] %s317
      %320 = dma.hbm_to_vmem [thread:$0]  %s97, 16, %s318, [#allocation19]
    $region197: #{_lambda_.1} parent=1 // pred_fallthru
      _
    // Predicated region
    $region198: #{_lambda_.1} parent=1 // pred_check
      _
    $region199: #{_lambda_.1} parent=1 // pred_check_branch
      %322 = sbr.rel (0) target = $region201
    $region200: #{_lambda_.1} parent=1 // pred_region
      _
    $region201: #{_lambda_.1} parent=1 // pred_fallthru
      _
    // Predicated region
    $region202: #{_lambda_.1} parent=1 // pred_check
      _
    $region203: #{_lambda_.1} parent=1 // pred_check_branch
      %324 = sbr.rel (0) target = $region205
    $region204: #{_lambda_.1} parent=1 // pred_region
      %s326 = ssub.s32 16, 16
      %327 = vsyncadd [#allocation19], %s326
      %s329 = sshll.u32 [#allocation20], 4
      %s330 = int_to_ptr.vmem [resolvable:$true] %s329
      %332 = dma.hbm_to_vmem [thread:$0]  %s101, 16, %s330, [#allocation19]
    $region205: #{_lambda_.1} parent=1 // pred_fallthru
      _
    // Predicated region
    $region206: #{_lambda_.1} parent=1 // pred_check
      _
    $region207: #{_lambda_.1} parent=1 // pred_check_branch
      %334 = sbr.rel (0) target = $region209
    $region208: #{_lambda_.1} parent=1 // pred_region
      %s336 = ssub.s32 16, 16
      %337 = vsyncadd [#allocation22], %s336
      %s339 = sshll.u32 [#allocation21], 4
      %s340 = int_to_ptr.vmem [resolvable:$true] %s339
      %342 = dma.hbm_to_vmem [thread:$0]  %s103, 16, %s340, [#allocation22]
    $region209: #{_lambda_.1} parent=1 // pred_fallthru
      _
    // Predicated region
    $region210: #{_lambda_.1} parent=1 // pred_check
      _
    $region211: #{_lambda_.1} parent=1 // pred_check_branch
      %344 = sbr.rel (0) target = $region213
    $region212: #{_lambda_.1} parent=1 // pred_region
      %s346 = ssub.s32 16, 16
      %347 = vsyncadd [#allocation22], %s346
      %s349 = sshll.u32 [#allocation23], 4
      %s350 = int_to_ptr.vmem [resolvable:$true] %s349
      %352 = dma.hbm_to_vmem [thread:$0]  %s105, 16, %s350, [#allocation22]
    $region213: #{_lambda_.1} parent=1 // pred_fallthru
      _
    // Predicated region
    $region214: #{_lambda_.1} parent=1 // pred_check
      _
    $region215: #{_lambda_.1} parent=1 // pred_check_branch
      %354 = sbr.rel (0) target = $region217
    $region216: #{_lambda_.1} parent=1 // pred_region
      _
    $region217: #{_lambda_.1} parent=1 // pred_fallthru
      _
    // Predicated region
    $region218: #{_lambda_.1} parent=1 // pred_check
      _
    $region219: #{_lambda_.1} parent=1 // pred_check_branch
      %356 = sbr.rel (0) target = $region221
    $region220: #{_lambda_.1} parent=1 // pred_region
      _
    $region221: #{_lambda_.1} parent=1 // pred_fallthru
      _
    // Predicated region
    $region222: #{_lambda_.1} parent=1 // pred_check
      _
    $region223: #{_lambda_.1} parent=1 // pred_check_branch
      %358 = sbr.rel (0) target = $region225
    $region224: #{_lambda_.1} parent=1 // pred_region
      %s360 = ssub.s32 16, 16
      %361 = vsyncadd [#allocation25], %s360
      %s363 = sshll.u32 [#allocation24], 4
      %s364 = int_to_ptr.vmem [resolvable:$true] %s363
      %366 = dma.hbm_to_vmem [thread:$0]  %s111, 16, %s364, [#allocation25]
    $region225: #{_lambda_.1} parent=1 // pred_fallthru
      _
    // Predicated region
    $region226: #{_lambda_.1} parent=1 // pred_check
      _
    $region227: #{_lambda_.1} parent=1 // pred_check_branch
      %368 = sbr.rel (0) target = $region229
    $region228: #{_lambda_.1} parent=1 // pred_region
      _
    $region229: #{_lambda_.1} parent=1 // pred_fallthru
      _
    // Predicated region
    $region230: #{_lambda_.1} parent=1 // pred_check
      _
    $region231: #{_lambda_.1} parent=1 // pred_check_branch
      %370 = sbr.rel (0) target = $region233
    $region232: #{_lambda_.1} parent=1 // pred_region
      %s372 = ssub.s32 16, 16
      %373 = vsyncadd [#allocation25], %s372
      %s375 = sshll.u32 [#allocation26], 4
      %s376 = int_to_ptr.vmem [resolvable:$true] %s375
      %378 = dma.hbm_to_vmem [thread:$0]  %s115, 16, %s376, [#allocation25]
    $region233: #{_lambda_.1} parent=1 // pred_fallthru
      _
    // Predicated region
    $region234: #{_lambda_.1} parent=1 // pred_check
      _
    $region235: #{_lambda_.1} parent=1 // pred_check_branch
      %380 = sbr.rel (0) target = $region237
    $region236: #{_lambda_.1} parent=1 // pred_region
      _
    $region237: #{_lambda_.1} parent=1 // pred_fallthru
      _
    // Predicated region
    $region238: #{_lambda_.1} parent=1 // pred_check
      _
    $region239: #{_lambda_.1} parent=1 // pred_check_branch
      %382 = sbr.rel (0) target = $region241
    $region240: #{_lambda_.1} parent=1 // pred_region
      _
    $region241: #{_lambda_.1} parent=1 // pred_fallthru
      _
    // Predicated region
    $region242: #{_lambda_.1} parent=1 // pred_check
      _
    $region243: #{_lambda_.1} parent=1 // pred_check_branch
      %384 = sbr.rel (0) target = $region245
    $region244: #{_lambda_.1} parent=1 // pred_region
      %s386 = ssub.s32 16, 16
      %387 = vsyncadd [#allocation28], %s386
      %s389 = sshll.u32 [#allocation27], 4
      %s390 = int_to_ptr.vmem [resolvable:$true] %s389
      %392 = dma.hbm_to_vmem [thread:$0]  %s121, 16, %s390, [#allocation28]
    $region245: #{_lambda_.1} parent=1 // pred_fallthru
      _
    // Predicated region
    $region246: #{_lambda_.1} parent=1 // pred_check
      _
    $region247: #{_lambda_.1} parent=1 // pred_check_branch
      %394 = sbr.rel (0) target = $region249
    $region248: #{_lambda_.1} parent=1 // pred_region
      %s396 = ssub.s32 16, 16
      %397 = vsyncadd [#allocation28], %s396
      %s399 = sshll.u32 [#allocation29], 4
      %s400 = int_to_ptr.vmem [resolvable:$true] %s399
      %402 = dma.hbm_to_vmem [thread:$0]  %s123, 16, %s400, [#allocation28]
    $region249: #{_lambda_.1} parent=1 // pred_fallthru
      _
    // Predicated region
    $region250: #{_lambda_.1} parent=1 // pred_check
      _
    $region251: #{_lambda_.1} parent=1 // pred_check_branch
      %404 = sbr.rel (0) target = $region253
    $region252: #{_lambda_.1} parent=1 // pred_region
      %s406 = ssub.s32 16, 16
      %407 = vsyncadd [#allocation31], %s406
      %s409 = sshll.u32 [#allocation30], 4
      %s410 = int_to_ptr.vmem [resolvable:$true] %s409
      %412 = dma.hbm_to_vmem [thread:$0]  %s125, 16, %s410, [#allocation31]
    $region253: #{_lambda_.1} parent=1 // pred_fallthru
      _
    // Predicated region
    $region254: #{_lambda_.1} parent=1 // pred_check
      _
    $region255: #{_lambda_.1} parent=1 // pred_check_branch
      %414 = sbr.rel (0) target = $region257
    $region256: #{_lambda_.1} parent=1 // pred_region
      %415 = dma.done [#allocation5], 128
    $region257: #{_lambda_.1} parent=1 // pred_fallthru
      _
    // Predicated region
    $region258: #{_lambda_.1} parent=1 // pred_check
      _
    $region259: #{_lambda_.1} parent=1 // pred_check_branch
      %417 = sbr.rel (0) target = $region261
    $region260: #{_lambda_.1} parent=1 // pred_region
      %418 = dma.done [#allocation7], 16
    $region261: #{_lambda_.1} parent=1 // pred_fallthru
      _
    // Predicated region
    $region262: #{_lambda_.1} parent=1 // pred_check
      _
    $region263: #{_lambda_.1} parent=1 // pred_check_branch
      %420 = sbr.rel (0) target = $region265
    $region264: #{_lambda_.1} parent=1 // pred_region
      %421 = dma.done [#allocation4], 16
    $region265: #{_lambda_.1} parent=1 // pred_fallthru
      _
    // Predicated region
    $region266: #{_lambda_.1} parent=1 // pred_check
      _
    $region267: #{_lambda_.1} parent=1 // pred_check_branch
      %423 = sbr.rel (0) target = $region269
    $region268: #{_lambda_.1} parent=1 // pred_region
      %424 = dma.done [#allocation10], 16
    $region269: #{_lambda_.1} parent=1 // pred_fallthru
      _
    // Predicated region
    $region270: #{_lambda_.1} parent=1 // pred_check
      _
    $region271: #{_lambda_.1} parent=1 // pred_check_branch
      %426 = sbr.rel (0) target = $region273
    $region272: #{_lambda_.1} parent=1 // pred_region
      %427 = dma.done [#allocation10], 16
    $region273: #{_lambda_.1} parent=1 // pred_fallthru
      _
    // Predicated region
    $region274: #{_lambda_.1} parent=1 // pred_check
      _
    $region275: #{_lambda_.1} parent=1 // pred_check_branch
      %429 = sbr.rel (0) target = $region277
    $region276: #{_lambda_.1} parent=1 // pred_region
      %430 = dma.done [#allocation13], 16
    $region277: #{_lambda_.1} parent=1 // pred_fallthru
      _
    // Predicated region
    $region278: #{_lambda_.1} parent=1 // pred_check
      _
    $region279: #{_lambda_.1} parent=1 // pred_check_branch
      %432 = sbr.rel (0) target = $region281
    $region280: #{_lambda_.1} parent=1 // pred_region
      %433 = dma.done [#allocation13], 16
    $region281: #{_lambda_.1} parent=1 // pred_fallthru
      _
    // Predicated region
    $region282: #{_lambda_.1} parent=1 // pred_check
      _
    $region283: #{_lambda_.1} parent=1 // pred_check_branch
      %435 = sbr.rel (0) target = $region285
    $region284: #{_lambda_.1} parent=1 // pred_region
      %436 = dma.done [#allocation16], 16
    $region285: #{_lambda_.1} parent=1 // pred_fallthru
      _
    // Predicated region
    $region286: #{_lambda_.1} parent=1 // pred_check
      _
    $region287: #{_lambda_.1} parent=1 // pred_check_branch
      %438 = sbr.rel (0) target = $region289
    $region288: #{_lambda_.1} parent=1 // pred_region
      %439 = dma.done [#allocation16], 16
    $region289: #{_lambda_.1} parent=1 // pred_fallthru
      _
    // Predicated region
    $region290: #{_lambda_.1} parent=1 // pred_check
      _
    $region291: #{_lambda_.1} parent=1 // pred_check_branch
      %441 = sbr.rel (0) target = $region293
    $region292: #{_lambda_.1} parent=1 // pred_region
      %442 = dma.done [#allocation19], 16
    $region293: #{_lambda_.1} parent=1 // pred_fallthru
      _
    // Predicated region
    $region294: #{_lambda_.1} parent=1 // pred_check
      _
    $region295: #{_lambda_.1} parent=1 // pred_check_branch
      %444 = sbr.rel (0) target = $region297
    $region296: #{_lambda_.1} parent=1 // pred_region
      %445 = dma.done [#allocation19], 16
    $region297: #{_lambda_.1} parent=1 // pred_fallthru
      _
    // Predicated region
    $region298: #{_lambda_.1} parent=1 // pred_check
      _
    $region299: #{_lambda_.1} parent=1 // pred_check_branch
      %447 = sbr.rel (0) target = $region301
    $region300: #{_lambda_.1} parent=1 // pred_region
      %448 = dma.done [#allocation22], 16
    $region301: #{_lambda_.1} parent=1 // pred_fallthru
      _
    // Predicated region
    $region302: #{_lambda_.1} parent=1 // pred_check
      _
    $region303: #{_lambda_.1} parent=1 // pred_check_branch
      %450 = sbr.rel (0) target = $region305
    $region304: #{_lambda_.1} parent=1 // pred_region
      %451 = dma.done [#allocation22], 16
    $region305: #{_lambda_.1} parent=1 // pred_fallthru
      _
    // Predicated region
    $region306: #{_lambda_.1} parent=1 // pred_check
      _
    $region307: #{_lambda_.1} parent=1 // pred_check_branch
      %453 = sbr.rel (0) target = $region309
    $region308: #{_lambda_.1} parent=1 // pred_region
      %454 = dma.done [#allocation25], 16
    $region309: #{_lambda_.1} parent=1 // pred_fallthru
      _
    // Predicated region
    $region310: #{_lambda_.1} parent=1 // pred_check
      _
    $region311: #{_lambda_.1} parent=1 // pred_check_branch
      %456 = sbr.rel (0) target = $region313
    $region312: #{_lambda_.1} parent=1 // pred_region
      %457 = dma.done [#allocation25], 16
    $region313: #{_lambda_.1} parent=1 // pred_fallthru
      _
    // Predicated region
    $region314: #{_lambda_.1} parent=1 // pred_check
      _
    $region315: #{_lambda_.1} parent=1 // pred_check_branch
      %459 = sbr.rel (0) target = $region317
    $region316: #{_lambda_.1} parent=1 // pred_region
      %460 = dma.done [#allocation28], 16
    $region317: #{_lambda_.1} parent=1 // pred_fallthru
      _
    // Predicated region
    $region318: #{_lambda_.1} parent=1 // pred_check
      _
    $region319: #{_lambda_.1} parent=1 // pred_check_branch
      %462 = sbr.rel (0) target = $region321
    $region320: #{_lambda_.1} parent=1 // pred_region
      %463 = dma.done [#allocation28], 16
    $region321: #{_lambda_.1} parent=1 // pred_fallthru
      _
    // Predicated region
    $region322: #{_lambda_.1} parent=1 // pred_check
      _
    $region323: #{_lambda_.1} parent=1 // pred_check_branch
      %465 = sbr.rel (0) target = $region325
    $region324: #{_lambda_.1} parent=1 // pred_region
      %466 = dma.done [#allocation31], 16
    $region325: #{_lambda_.1} parent=1 // pred_fallthru
      _
    %467 = sfence
    %v468 = vld [vmem:[%s1] sm:$0x3]
    %v469 = vld [vmem:[%s3] sm:$0xff]
    %v470 = vld [vmem:[%s3 + $0x8] sm:$0xff]
    %v471 = vld [vmem:[%s11] sm:$0x7]
    %v472 = vld [vmem:[%s13] sm:$0x1]
    %v473 = vld [vmem:[%s15] sm:$0xff]
    %v474 = vld [vmem:[%s15 + $0x8] sm:$0xff]
    %v475 = vld [vmem:[%s15 + $0x10] sm:$0xff]
    %v476 = vld [vmem:[%s15 + $0x18] sm:$0xff]
    %v477 = vld [vmem:[%s17] sm:$0x1]
    %v478 = vld [vmem:[%s19] sm:$0x7]
    %v479 = vld [vmem:[%s21] sm:$0x1]
    %v480 = vld [vmem:[%s23] sm:$0x1]
    %v481 = vld [vmem:[%s25] sm:$0x1]
    %v483 = vlaneseq
    %v484 = vshrl.u32 %v483, 7
    %v485 = vsub.s32 0, %v484
    %v486 = vrot.slane %v472, %v485
    %vm488 = vcmask 23552
    %v490 = vsel %vm488, %v469, 0
    %v493 = vsel %vm488, %v470, 0
    %vm495 = vcmask 1042432
    %v497 = vsel %vm495, %v471, 0
    %499 = vmatprep.subr.mxu0 0.0
    %500 = vmatpush1.msra.mxu0 %v497
    %501 = vmatprep.subr.mxu0 0.0
    %502 = vmatpush1.msra.mxu0 0.0
    %503 = vmatprep.subr.mxu0 0.0
    %504 = vmatpush1.msra.mxu0 0.0
    %505 = vmatprep.subr.mxu0 0.0
    %506 = vmatpush1.msra.mxu0 0.0
    %507 = vmatprep.subr.mxu0 0.0
    %508 = vmatpush1.msra.mxu0 0.0
    %509 = vmatprep.subr.mxu0 0.0
    %510 = vmatpush1.msra.mxu0 0.0
    %511 = vmatprep.subr.mxu0 0.0
    %512 = vmatpush1.msra.mxu0 0.0
    %513 = vmatprep.subr.mxu0 0.0
    %514 = vmatpush1.msra.mxu0 0.0
    %515 = vmatprep.subr.mxu0 0.0
    %516 = vmatpush1.msra.mxu0 0.0
    %517 = vmatprep.subr.mxu0 0.0
    %518 = vmatpush1.msra.mxu0 0.0
    %519 = vmatprep.subr.mxu0 0.0
    %520 = vmatpush1.msra.mxu0 0.0
    %521 = vmatprep.subr.mxu0 0.0
    %522 = vmatpush1.msra.mxu0 0.0
    %523 = vmatprep.subr.mxu0 0.0
    %524 = vmatpush1.msra.mxu0 0.0
    %525 = vmatprep.subr.mxu0 0.0
    %526 = vmatpush1.msra.mxu0 0.0
    %527 = vmatprep.subr.mxu0 0.0
    %528 = vmatpush1.msra.mxu0 0.0
    %529 = vmatprep.subr.mxu0 0.0
    %530 = vmatpush1.msra.mxu0 0.0
    %531 = vmatprep.subr.mxu0 0.0
    %532 = vmatpush1.msra.mxu0 0.0
    %533 = vmatprep.subr.mxu0 0.0
    %534 = vmatpush1.msra.mxu0 0.0
    %535 = vmatprep.subr.mxu0 0.0
    %536 = vmatpush1.msra.mxu0 0.0
    %537 = vmatprep.subr.mxu0 0.0
    %538 = vmatpush1.msra.mxu0 0.0
    %539 = vmatprep.subr.mxu0 0.0
    %540 = vmatpush1.msra.mxu0 0.0
    %541 = vmatprep.subr.mxu0 0.0
    %542 = vmatpush1.msra.mxu0 0.0
    %543 = vmatprep.subr.mxu0 0.0
    %544 = vmatpush1.msra.mxu0 0.0
    %545 = vmatprep.subr.mxu0 0.0
    %546 = vmatpush1.msra.mxu0 0.0
    %547 = vmatprep.subr.mxu0 0.0
    %548 = vmatpush1.msra.mxu0 0.0
    %549 = vmatprep.subr.mxu0 0.0
    %550 = vmatpush1.msra.mxu0 0.0
    %551 = vmatprep.subr.mxu0 0.0
    %552 = vmatpush1.msra.mxu0 0.0
    %553 = vmatprep.subr.mxu0 0.0
    %554 = vmatpush1.msra.mxu0 0.0
    %555 = vmatprep.subr.mxu0 0.0
    %556 = vmatpush1.msra.mxu0 0.0
    %557 = vmatprep.subr.mxu0 0.0
    %558 = vmatpush1.msra.mxu0 0.0
    %559 = vmatprep.subr.mxu0 0.0
    %560 = vmatpush1.msra.mxu0 0.0
    %561 = vmatprep.subr.mxu0 0.0
    %562 = vmatpush1.msra.mxu0 0.0
    %563 = vmatprep.mubr.f32.mxu0 0.0
    %564 = vmatmul.mubr.f32.gmra.mrb[0].mxu0 %v490
    %v565 = vpop.f32.mrb[0].mxu0
    %v566 = vadd.f32 %v486, %v565
    %v567 = vpop.f32.mrb[0].mxu0
    %568 = vmatprep.mubr.f32.mxu0 0.0
    %569 = vmatmul.mubr.f32.gmra.mrb[0].mxu0 %v493
    %v570 = vpop.f32.mrb[0].mxu0
    %v571 = vadd.f32 %v486, %v570
    %v572 = vpop.f32.mrb[0].mxu0
    %573 = vdwg.mxu0
    %v574 = vmax.f32 %v566, 0.0
    %v575 = vmax.f32 %v571, 0.0
    %v577 = vlaneseq
    %v578 = vshrl.u32 %v577, 7
    %v579 = vsub.s32 0, %v578
    %v580 = vrot.slane %v477, %v579
    %vm582 = vcmask 261120
    %v584 = vsel %vm582, %v574, 0
    %v587 = vsel %vm582, %v575, 0
    %589 = vmatprep.subr.mxu0 0.0
    %590 = vmatpush1.msra.mxu0 %v473
    %591 = vmatprep.subr.mxu0 0.0
    %592 = vmatpush1.msra.mxu0 %v474
    %593 = vmatprep.subr.mxu0 0.0
    %594 = vmatpush1.msra.mxu0 %v475
    %595 = vmatprep.subr.mxu0 0.0
    %596 = vmatpush1.msra.mxu0 %v476
    %597 = vmatprep.subr.mxu0 0.0
    %598 = vmatpush1.msra.mxu0 0.0
    %599 = vmatprep.subr.mxu0 0.0
    %600 = vmatpush1.msra.mxu0 0.0
    %601 = vmatprep.subr.mxu0 0.0
    %602 = vmatpush1.msra.mxu0 0.0
    %603 = vmatprep.subr.mxu0 0.0
    %604 = vmatpush1.msra.mxu0 0.0
    %605 = vmatprep.subr.mxu0 0.0
    %606 = vmatpush1.msra.mxu0 0.0
    %607 = vmatprep.subr.mxu0 0.0
    %608 = vmatpush1.msra.mxu0 0.0
    %609 = vmatprep.subr.mxu0 0.0
    %610 = vmatpush1.msra.mxu0 0.0
    %611 = vmatprep.subr.mxu0 0.0
    %612 = vmatpush1.msra.mxu0 0.0
    %613 = vmatprep.subr.mxu0 0.0
    %614 = vmatpush1.msra.mxu0 0.0
    %615 = vmatprep.subr.mxu0 0.0
    %616 = vmatpush1.msra.mxu0 0.0
    %617 = vmatprep.subr.mxu0 0.0
    %618 = vmatpush1.msra.mxu0 0.0
    %619 = vmatprep.subr.mxu0 0.0
    %620 = vmatpush1.msra.mxu0 0.0
    %621 = vmatprep.subr.mxu0 0.0
    %622 = vmatpush1.msra.mxu0 0.0
    %623 = vmatprep.subr.mxu0 0.0
    %624 = vmatpush1.msra.mxu0 0.0
    %625 = vmatprep.subr.mxu0 0.0
    %626 = vmatpush1.msra.mxu0 0.0
    %627 = vmatprep.subr.mxu0 0.0
    %628 = vmatpush1.msra.mxu0 0.0
    %629 = vmatprep.subr.mxu0 0.0
    %630 = vmatpush1.msra.mxu0 0.0
    %631 = vmatprep.subr.mxu0 0.0
    %632 = vmatpush1.msra.mxu0 0.0
    %633 = vmatprep.subr.mxu0 0.0
    %634 = vmatpush1.msra.mxu0 0.0
    %635 = vmatprep.subr.mxu0 0.0
    %636 = vmatpush1.msra.mxu0 0.0
    %637 = vmatprep.subr.mxu0 0.0
    %638 = vmatpush1.msra.mxu0 0.0
    %639 = vmatprep.subr.mxu0 0.0
    %640 = vmatpush1.msra.mxu0 0.0
    %641 = vmatprep.subr.mxu0 0.0
    %642 = vmatpush1.msra.mxu0 0.0
    %643 = vmatprep.subr.mxu0 0.0
    %644 = vmatpush1.msra.mxu0 0.0
    %645 = vmatprep.subr.mxu0 0.0
    %646 = vmatpush1.msra.mxu0 0.0
    %647 = vmatprep.subr.mxu0 0.0
    %648 = vmatpush1.msra.mxu0 0.0
    %649 = vmatprep.subr.mxu0 0.0
    %650 = vmatpush1.msra.mxu0 0.0
    %651 = vmatprep.subr.mxu0 0.0
    %652 = vmatpush1.msra.mxu0 0.0
    %653 = vmatprep.mubr.f32.mxu0 0.0
    %654 = vmatmul.mubr.f32.gmra.mrb[0].mxu0 %v584
    %v655 = vpop.f32.mrb[0].mxu0
    %v656 = vadd.f32 %v580, %v655
    %v657 = vpop.f32.mrb[0].mxu0
    %658 = vmatprep.mubr.f32.mxu0 0.0
    %659 = vmatmul.mubr.f32.gmra.mrb[0].mxu0 %v587
    %v660 = vpop.f32.mrb[0].mxu0
    %v661 = vadd.f32 %v580, %v660
    %v662 = vpop.f32.mrb[0].mxu0
    %663 = vdwg.mxu0
    %v665 = vsel %vm495, %v478, 0
    %667 = vmatprep.subr.mxu0 0.0
    %668 = vmatpush1.msra.mxu0 %v665
    %669 = vmatprep.subr.mxu0 0.0
    %670 = vmatpush1.msra.mxu0 0.0
    %671 = vmatprep.subr.mxu0 0.0
    %672 = vmatpush1.msra.mxu0 0.0
    %673 = vmatprep.subr.mxu0 0.0
    %674 = vmatpush1.msra.mxu0 0.0
    %675 = vmatprep.subr.mxu0 0.0
    %676 = vmatpush1.msra.mxu0 0.0
    %677 = vmatprep.subr.mxu0 0.0
    %678 = vmatpush1.msra.mxu0 0.0
    %679 = vmatprep.subr.mxu0 0.0
    %680 = vmatpush1.msra.mxu0 0.0
    %681 = vmatprep.subr.mxu0 0.0
    %682 = vmatpush1.msra.mxu0 0.0
    %683 = vmatprep.subr.mxu0 0.0
    %684 = vmatpush1.msra.mxu0 0.0
    %685 = vmatprep.subr.mxu0 0.0
    %686 = vmatpush1.msra.mxu0 0.0
    %687 = vmatprep.subr.mxu0 0.0
    %688 = vmatpush1.msra.mxu0 0.0
    %689 = vmatprep.subr.mxu0 0.0
    %690 = vmatpush1.msra.mxu0 0.0
    %691 = vmatprep.subr.mxu0 0.0
    %692 = vmatpush1.msra.mxu0 0.0
    %693 = vmatprep.subr.mxu0 0.0
    %694 = vmatpush1.msra.mxu0 0.0
    %695 = vmatprep.subr.mxu0 0.0
    %696 = vmatpush1.msra.mxu0 0.0
    %697 = vmatprep.subr.mxu0 0.0
    %698 = vmatpush1.msra.mxu0 0.0
    %699 = vmatprep.subr.mxu0 0.0
    %700 = vmatpush1.msra.mxu0 0.0
    %701 = vmatprep.subr.mxu0 0.0
    %702 = vmatpush1.msra.mxu0 0.0
    %703 = vmatprep.subr.mxu0 0.0
    %704 = vmatpush1.msra.mxu0 0.0
    %705 = vmatprep.subr.mxu0 0.0
    %706 = vmatpush1.msra.mxu0 0.0
    %707 = vmatprep.subr.mxu0 0.0
    %708 = vmatpush1.msra.mxu0 0.0
    %709 = vmatprep.subr.mxu0 0.0
    %710 = vmatpush1.msra.mxu0 0.0
    %711 = vmatprep.subr.mxu0 0.0
    %712 = vmatpush1.msra.mxu0 0.0
    %713 = vmatprep.subr.mxu0 0.0
    %714 = vmatpush1.msra.mxu0 0.0
    %715 = vmatprep.subr.mxu0 0.0
    %716 = vmatpush1.msra.mxu0 0.0
    %717 = vmatprep.subr.mxu0 0.0
    %718 = vmatpush1.msra.mxu0 0.0
    %719 = vmatprep.subr.mxu0 0.0
    %720 = vmatpush1.msra.mxu0 0.0
    %721 = vmatprep.subr.mxu0 0.0
    %722 = vmatpush1.msra.mxu0 0.0
    %723 = vmatprep.subr.mxu0 0.0
    %724 = vmatpush1.msra.mxu0 0.0
    %725 = vmatprep.subr.mxu0 0.0
    %726 = vmatpush1.msra.mxu0 0.0
    %727 = vmatprep.subr.mxu0 0.0
    %728 = vmatpush1.msra.mxu0 0.0
    %729 = vmatprep.subr.mxu0 0.0
    %730 = vmatpush1.msra.mxu0 0.0
    %731 = vmatprep.mubr.f32.mxu0 0.0
    %732 = vmatmul.mubr.f32.gmra.mrb[0].mxu0 %v490
    %v733 = vpop.f32.mrb[0].mxu0
    %v734 = vadd.f32 0.0, %v733
    %v735 = vpop.f32.mrb[0].mxu0
    %736 = vmatprep.mubr.f32.mxu0 0.0
    %737 = vmatmul.mubr.f32.gmra.mrb[0].mxu0 %v493
    %v738 = vpop.f32.mrb[0].mxu0
    %v739 = vadd.f32 0.0, %v738
    %v740 = vpop.f32.mrb[0].mxu0
    %741 = vdwg.mxu0
    %v742 = vadd.f32 %v656, %v734
    %v743 = vadd.f32 %v661, %v739
    %v745 = vlaneseq
    %v746 = vshrl.u32 %v745, 7
    %v747 = vsub.s32 0, %v746
    %v748 = vrot.slane %v479, %v747
    %v750 = vadd.f32 %v742, %v748
    %v751 = vadd.f32 %v743, %v748
    %vm752 = vcmask 15360
    %v753 = vsel %vm752, %v750, 0.0
    %754 = vadd.xlane.f32.xlu0 %v753
    %v755 = vpop.xlane.xlu0 %754
    %v756 = vsel %vm752, %v751, 0.0
    %757 = vadd.xlane.f32.xlu0 %v756
    %v758 = vpop.xlane.xlu0 %757
    %v759 = vrcp.pop 2.0
    %v760 = vmul.f32 %v755, %v759
    %v761 = vmul.f32 %v758, %v759
    %v762 = vsub.f32 %v750, %v760
    %v763 = vsub.f32 %v751, %v761
    %v764 = vmul.f32 %v762, %v762
    %v765 = vmul.f32 %v763, %v763
    %v766 = vsel %vm752, %v764, 0.0
    %767 = vadd.xlane.f32.xlu0 %v766
    %v768 = vpop.xlane.xlu0 %767
    %v769 = vsel %vm752, %v765, 0.0
    %770 = vadd.xlane.f32.xlu0 %v769
    %v771 = vpop.xlane.xlu0 %770
    %v772 = vmul.f32 %v768, %v759
    %v773 = vmul.f32 %v771, %v759
    %v774 = vadd.f32 %v772, 1e-05
    %v775 = vadd.f32 %v773, 1e-05
    %v776 = vrsqrt.pop %v774
    %v777 = vrsqrt.pop %v775
    %v778 = vmul.f32 %v762, %v776
    %v779 = vmul.f32 %v763, %v777
    %v781 = vlaneseq
    %v782 = vshrl.u32 %v781, 7
    %v783 = vsub.s32 0, %v782
    %v784 = vrot.slane %v480, %v783
    %v786 = vmul.f32 %v778, %v784
    %v787 = vmul.f32 %v779, %v784
    %v789 = vlaneseq
    %v790 = vshrl.u32 %v789, 7
    %v791 = vsub.s32 0, %v790
    %v792 = vrot.slane %v481, %v791
    %v794 = vadd.f32 %v786, %v792
    %v795 = vadd.f32 %v787, %v792
    %v796 = vld [vmem:[%s5] sm:$0xff]
    %v797 = vld [vmem:[%s27] sm:$0x1f]
    %v798 = vld [vmem:[%s29] sm:$0x1]
    %v799 = vld [vmem:[%s31] sm:$0xff]
    %v800 = vld [vmem:[%s31 + $0x8] sm:$0xff]
    %v801 = vld [vmem:[%s31 + $0x10] sm:$0xff]
    %v802 = vld [vmem:[%s31 + $0x18] sm:$0xff]
    %v803 = vld [vmem:[%s33] sm:$0x1]
    %v804 = vld [vmem:[%s35] sm:$0x1f]
    %v805 = vld [vmem:[%s37] sm:$0x1]
    %v806 = vld [vmem:[%s39] sm:$0x1]
    %v807 = vld [vmem:[%s41] sm:$0x1]
    %v809 = vlaneseq
    %v810 = vshrl.u32 %v809, 7
    %v811 = vsub.s32 0, %v810
    %v812 = vrot.slane %v798, %v811
    %vm814 = vcmask 39936
    %v816 = vsel %vm814, %v796, 0
    %vm818 = vcmask 1044480
    %v820 = vsel %vm818, %v797, 0
    %822 = vmatprep.subr.mxu0 0.0
    %823 = vmatpush1.msra.mxu0 %v820
    %824 = vmatprep.subr.mxu0 0.0
    %825 = vmatpush1.msra.mxu0 0.0
    %826 = vmatprep.subr.mxu0 0.0
    %827 = vmatpush1.msra.mxu0 0.0
    %828 = vmatprep.subr.mxu0 0.0
    %829 = vmatpush1.msra.mxu0 0.0
    %830 = vmatprep.subr.mxu0 0.0
    %831 = vmatpush1.msra.mxu0 0.0
    %832 = vmatprep.subr.mxu0 0.0
    %833 = vmatpush1.msra.mxu0 0.0
    %834 = vmatprep.subr.mxu0 0.0
    %835 = vmatpush1.msra.mxu0 0.0
    %836 = vmatprep.subr.mxu0 0.0
    %837 = vmatpush1.msra.mxu0 0.0
    %838 = vmatprep.subr.mxu0 0.0
    %839 = vmatpush1.msra.mxu0 0.0
    %840 = vmatprep.subr.mxu0 0.0
    %841 = vmatpush1.msra.mxu0 0.0
    %842 = vmatprep.subr.mxu0 0.0
    %843 = vmatpush1.msra.mxu0 0.0
    %844 = vmatprep.subr.mxu0 0.0
    %845 = vmatpush1.msra.mxu0 0.0
    %846 = vmatprep.subr.mxu0 0.0
    %847 = vmatpush1.msra.mxu0 0.0
    %848 = vmatprep.subr.mxu0 0.0
    %849 = vmatpush1.msra.mxu0 0.0
    %850 = vmatprep.subr.mxu0 0.0
    %851 = vmatpush1.msra.mxu0 0.0
    %852 = vmatprep.subr.mxu0 0.0
    %853 = vmatpush1.msra.mxu0 0.0
    %854 = vmatprep.subr.mxu0 0.0
    %855 = vmatpush1.msra.mxu0 0.0
    %856 = vmatprep.subr.mxu0 0.0
    %857 = vmatpush1.msra.mxu0 0.0
    %858 = vmatprep.subr.mxu0 0.0
    %859 = vmatpush1.msra.mxu0 0.0
    %860 = vmatprep.subr.mxu0 0.0
    %861 = vmatpush1.msra.mxu0 0.0
    %862 = vmatprep.subr.mxu0 0.0
    %863 = vmatpush1.msra.mxu0 0.0
    %864 = vmatprep.subr.mxu0 0.0
    %865 = vmatpush1.msra.mxu0 0.0
    %866 = vmatprep.subr.mxu0 0.0
    %867 = vmatpush1.msra.mxu0 0.0
    %868 = vmatprep.subr.mxu0 0.0
    %869 = vmatpush1.msra.mxu0 0.0
    %870 = vmatprep.subr.mxu0 0.0
    %871 = vmatpush1.msra.mxu0 0.0
    %872 = vmatprep.subr.mxu0 0.0
    %873 = vmatpush1.msra.mxu0 0.0
    %874 = vmatprep.subr.mxu0 0.0
    %875 = vmatpush1.msra.mxu0 0.0
    %876 = vmatprep.subr.mxu0 0.0
    %877 = vmatpush1.msra.mxu0 0.0
    %878 = vmatprep.subr.mxu0 0.0
    %879 = vmatpush1.msra.mxu0 0.0
    %880 = vmatprep.subr.mxu0 0.0
    %881 = vmatpush1.msra.mxu0 0.0
    %882 = vmatprep.subr.mxu0 0.0
    %883 = vmatpush1.msra.mxu0 0.0
    %884 = vmatprep.subr.mxu0 0.0
    %885 = vmatpush1.msra.mxu0 0.0
    %886 = vmatprep.mubr.f32.mxu0 0.0
    %887 = vmatmul.mubr.f32.gmra.mrb[0].mxu0 %v816
    %v888 = vpop.f32.mrb[0].mxu0
    %v889 = vadd.f32 %v812, %v888
    %v890 = vpop.f32.mrb[0].mxu0
    %891 = vdwg.mxu0
    %v892 = vmax.f32 %v889, 0.0
    %v894 = vlaneseq
    %v895 = vshrl.u32 %v894, 7
    %v896 = vsub.s32 0, %v895
    %v897 = vrot.slane %v803, %v896
    %v900 = vsel %vm582, %v892, 0
    %902 = vmatprep.subr.mxu0 0.0
    %903 = vmatpush1.msra.mxu0 %v799
    %904 = vmatprep.subr.mxu0 0.0
    %905 = vmatpush1.msra.mxu0 %v800
    %906 = vmatprep.subr.mxu0 0.0
    %907 = vmatpush1.msra.mxu0 %v801
    %908 = vmatprep.subr.mxu0 0.0
    %909 = vmatpush1.msra.mxu0 %v802
    %910 = vmatprep.subr.mxu0 0.0
    %911 = vmatpush1.msra.mxu0 0.0
    %912 = vmatprep.subr.mxu0 0.0
    %913 = vmatpush1.msra.mxu0 0.0
    %914 = vmatprep.subr.mxu0 0.0
    %915 = vmatpush1.msra.mxu0 0.0
    %916 = vmatprep.subr.mxu0 0.0
    %917 = vmatpush1.msra.mxu0 0.0
    %918 = vmatprep.subr.mxu0 0.0
    %919 = vmatpush1.msra.mxu0 0.0
    %920 = vmatprep.subr.mxu0 0.0
    %921 = vmatpush1.msra.mxu0 0.0
    %922 = vmatprep.subr.mxu0 0.0
    %923 = vmatpush1.msra.mxu0 0.0
    %924 = vmatprep.subr.mxu0 0.0
    %925 = vmatpush1.msra.mxu0 0.0
    %926 = vmatprep.subr.mxu0 0.0
    %927 = vmatpush1.msra.mxu0 0.0
    %928 = vmatprep.subr.mxu0 0.0
    %929 = vmatpush1.msra.mxu0 0.0
    %930 = vmatprep.subr.mxu0 0.0
    %931 = vmatpush1.msra.mxu0 0.0
    %932 = vmatprep.subr.mxu0 0.0
    %933 = vmatpush1.msra.mxu0 0.0
    %934 = vmatprep.subr.mxu0 0.0
    %935 = vmatpush1.msra.mxu0 0.0
    %936 = vmatprep.subr.mxu0 0.0
    %937 = vmatpush1.msra.mxu0 0.0
    %938 = vmatprep.subr.mxu0 0.0
    %939 = vmatpush1.msra.mxu0 0.0
    %940 = vmatprep.subr.mxu0 0.0
    %941 = vmatpush1.msra.mxu0 0.0
    %942 = vmatprep.subr.mxu0 0.0
    %943 = vmatpush1.msra.mxu0 0.0
    %944 = vmatprep.subr.mxu0 0.0
    %945 = vmatpush1.msra.mxu0 0.0
    %946 = vmatprep.subr.mxu0 0.0
    %947 = vmatpush1.msra.mxu0 0.0
    %948 = vmatprep.subr.mxu0 0.0
    %949 = vmatpush1.msra.mxu0 0.0
    %950 = vmatprep.subr.mxu0 0.0
    %951 = vmatpush1.msra.mxu0 0.0
    %952 = vmatprep.subr.mxu0 0.0
    %953 = vmatpush1.msra.mxu0 0.0
    %954 = vmatprep.subr.mxu0 0.0
    %955 = vmatpush1.msra.mxu0 0.0
    %956 = vmatprep.subr.mxu0 0.0
    %957 = vmatpush1.msra.mxu0 0.0
    %958 = vmatprep.subr.mxu0 0.0
    %959 = vmatpush1.msra.mxu0 0.0
    %960 = vmatprep.subr.mxu0 0.0
    %961 = vmatpush1.msra.mxu0 0.0
    %962 = vmatprep.subr.mxu0 0.0
    %963 = vmatpush1.msra.mxu0 0.0
    %964 = vmatprep.subr.mxu0 0.0
    %965 = vmatpush1.msra.mxu0 0.0
    %966 = vmatprep.mubr.f32.mxu0 0.0
    %967 = vmatmul.mubr.f32.gmra.mrb[0].mxu0 %v900
    %v968 = vpop.f32.mrb[0].mxu0
    %v969 = vadd.f32 %v897, %v968
    %v970 = vpop.f32.mrb[0].mxu0
    %971 = vdwg.mxu0
    %v973 = vsel %vm818, %v804, 0
    %975 = vmatprep.subr.mxu0 0.0
    %976 = vmatpush1.msra.mxu0 %v973
    %977 = vmatprep.subr.mxu0 0.0
    %978 = vmatpush1.msra.mxu0 0.0
    %979 = vmatprep.subr.mxu0 0.0
    %980 = vmatpush1.msra.mxu0 0.0
    %981 = vmatprep.subr.mxu0 0.0
    %982 = vmatpush1.msra.mxu0 0.0
    %983 = vmatprep.subr.mxu0 0.0
    %984 = vmatpush1.msra.mxu0 0.0
    %985 = vmatprep.subr.mxu0 0.0
    %986 = vmatpush1.msra.mxu0 0.0
    %987 = vmatprep.subr.mxu0 0.0
    %988 = vmatpush1.msra.mxu0 0.0
    %989 = vmatprep.subr.mxu0 0.0
    %990 = vmatpush1.msra.mxu0 0.0
    %991 = vmatprep.subr.mxu0 0.0
    %992 = vmatpush1.msra.mxu0 0.0
    %993 = vmatprep.subr.mxu0 0.0
    %994 = vmatpush1.msra.mxu0 0.0
    %995 = vmatprep.subr.mxu0 0.0
    %996 = vmatpush1.msra.mxu0 0.0
    %997 = vmatprep.subr.mxu0 0.0
    %998 = vmatpush1.msra.mxu0 0.0
    %999 = vmatprep.subr.mxu0 0.0
    %1000 = vmatpush1.msra.mxu0 0.0
    %1001 = vmatprep.subr.mxu0 0.0
    %1002 = vmatpush1.msra.mxu0 0.0
    %1003 = vmatprep.subr.mxu0 0.0
    %1004 = vmatpush1.msra.mxu0 0.0
    %1005 = vmatprep.subr.mxu0 0.0
    %1006 = vmatpush1.msra.mxu0 0.0
    %1007 = vmatprep.subr.mxu0 0.0
    %1008 = vmatpush1.msra.mxu0 0.0
    %1009 = vmatprep.subr.mxu0 0.0
    %1010 = vmatpush1.msra.mxu0 0.0
    %1011 = vmatprep.subr.mxu0 0.0
    %1012 = vmatpush1.msra.mxu0 0.0
    %1013 = vmatprep.subr.mxu0 0.0
    %1014 = vmatpush1.msra.mxu0 0.0
    %1015 = vmatprep.subr.mxu0 0.0
    %1016 = vmatpush1.msra.mxu0 0.0
    %1017 = vmatprep.subr.mxu0 0.0
    %1018 = vmatpush1.msra.mxu0 0.0
    %1019 = vmatprep.subr.mxu0 0.0
    %1020 = vmatpush1.msra.mxu0 0.0
    %1021 = vmatprep.subr.mxu0 0.0
    %1022 = vmatpush1.msra.mxu0 0.0
    %1023 = vmatprep.subr.mxu0 0.0
    %1024 = vmatpush1.msra.mxu0 0.0
    %1025 = vmatprep.subr.mxu0 0.0
    %1026 = vmatpush1.msra.mxu0 0.0
    %1027 = vmatprep.subr.mxu0 0.0
    %1028 = vmatpush1.msra.mxu0 0.0
    %1029 = vmatprep.subr.mxu0 0.0
    %1030 = vmatpush1.msra.mxu0 0.0
    %1031 = vmatprep.subr.mxu0 0.0
    %1032 = vmatpush1.msra.mxu0 0.0
    %1033 = vmatprep.subr.mxu0 0.0
    %1034 = vmatpush1.msra.mxu0 0.0
    %1035 = vmatprep.subr.mxu0 0.0
    %1036 = vmatpush1.msra.mxu0 0.0
    %1037 = vmatprep.subr.mxu0 0.0
    %1038 = vmatpush1.msra.mxu0 0.0
    %1039 = vmatprep.mubr.f32.mxu0 0.0
    %1040 = vmatmul.mubr.f32.gmra.mrb[0].mxu0 %v816
    %v1041 = vpop.f32.mrb[0].mxu0
    %v1042 = vadd.f32 0.0, %v1041
    %v1043 = vpop.f32.mrb[0].mxu0
    %1044 = vdwg.mxu0
    %v1045 = vadd.f32 %v969, %v1042
    %v1047 = vlaneseq
    %v1048 = vshrl.u32 %v1047, 7
    %v1049 = vsub.s32 0, %v1048
    %v1050 = vrot.slane %v805, %v1049
    %v1052 = vadd.f32 %v1045, %v1050
    %v1053 = vsel %vm752, %v1052, 0.0
    %1054 = vadd.xlane.f32.xlu0 %v1053
    %v1055 = vpop.xlane.xlu0 %1054
    %v1056 = vmul.f32 %v1055, %v759
    %v1057 = vsub.f32 %v1052, %v1056
    %v1058 = vmul.f32 %v1057, %v1057
    %v1059 = vsel %vm752, %v1058, 0.0
    %1060 = vadd.xlane.f32.xlu0 %v1059
    %v1061 = vpop.xlane.xlu0 %1060
    %v1062 = vmul.f32 %v1061, %v759
    %v1063 = vadd.f32 %v1062, 1e-05
    %v1064 = vrsqrt.pop %v1063
    %v1065 = vmul.f32 %v1057, %v1064
    %v1067 = vlaneseq
    %v1068 = vshrl.u32 %v1067, 7
    %v1069 = vsub.s32 0, %v1068
    %v1070 = vrot.slane %v806, %v1069
    %v1072 = vmul.f32 %v1065, %v1070
    %v1074 = vlaneseq
    %v1075 = vshrl.u32 %v1074, 7
    %v1076 = vsub.s32 0, %v1075
    %v1077 = vrot.slane %v807, %v1076
    %v1079 = vadd.f32 %v1072, %v1077
    %vm1080 = vcmask 254976
    %1081 = vst.msk [vmem:[#allocation2] sm:$0x3] %vm1080, %v468
    %1083 = vrot.lane.b32.xlu0 %v794, 32
    %v1084 = vpop.permute.xlu0 %1083
    %vm1086 = vcmask 271616
    %1087 = vst.msk [vmem:[#allocation2] sm:$0x3] %vm1086, %v1084
    %1088 = vrot.lane.b32.xlu0 %v794, 34
    %v1089 = vpop.permute.xlu0 %1088
    %vm1091 = vcmask 290066
    %1092 = vst.msk [vmem:[#allocation2 - $0x2] sm:$0xc] %vm1091, %v1089
    %1093 = vrot.lane.b32.xlu0 %v794, 36
    %v1094 = vpop.permute.xlu0 %1093
    %vm1096 = vcmask 308516
    %1097 = vst.msk [vmem:[#allocation2 - $0x4] sm:$0x30] %vm1096, %v1094
    %1098 = vrot.lane.b32.xlu0 %v794, 38
    %v1099 = vpop.permute.xlu0 %1098
    %vm1101 = vcmask 326966
    %1102 = vst.msk [vmem:[#allocation2 - $0x6] sm:$0xc0] %vm1101, %v1099
    %1104 = vrot.lane.b32.xlu0 %v795, 40
    %v1105 = vpop.permute.xlu0 %1104
    %vm1107 = vcmask 337216
    %1108 = vst.msk [vmem:[#allocation2] sm:$0x3] %vm1107, %v1105
    %1109 = vrot.lane.b32.xlu0 %v795, 42
    %v1110 = vpop.permute.xlu0 %1109
    %vm1112 = vcmask 355666
    %1113 = vst.msk [vmem:[#allocation2 - $0x2] sm:$0xc] %vm1112, %v1110
    %1114 = vrot.lane.b32.xlu0 %v795, 44
    %v1115 = vpop.permute.xlu0 %1114
    %vm1117 = vcmask 374116
    %1118 = vst.msk [vmem:[#allocation2 - $0x4] sm:$0x30] %vm1117, %v1115
    %1119 = vrot.lane.b32.xlu0 %v795, 46
    %v1120 = vpop.permute.xlu0 %1119
    %vm1122 = vcmask 392566
    %1123 = vst.msk [vmem:[#allocation2 - $0x6] sm:$0xc0] %vm1122, %v1120
    %1125 = vrot.lane.b32.xlu0 %v1079, 48
    %v1126 = vpop.permute.xlu0 %1125
    %vm1128 = vcmask 402816
    %1129 = vst.msk [vmem:[#allocation2] sm:$0x3] %vm1128, %v1126
    %1130 = vrot.lane.b32.xlu0 %v1079, 50
    %v1131 = vpop.permute.xlu0 %1130
    %vm1133 = vcmask 421266
    %1134 = vst.msk [vmem:[#allocation2 - $0x2] sm:$0xc] %vm1133, %v1131
    %1135 = vrot.lane.b32.xlu0 %v1079, 52
    %v1136 = vpop.permute.xlu0 %1135
    %vm1138 = vcmask 439716
    %1139 = vst.msk [vmem:[#allocation2 - $0x4] sm:$0x30] %vm1138, %v1136
    %1140 = vrot.lane.b32.xlu0 %v1079, 54
    %v1141 = vpop.permute.xlu0 %1140
    %vm1143 = vcmask 458166
    %1144 = vst.msk [vmem:[#allocation2 - $0x6] sm:$0xc0] %vm1143, %v1141
    %v1145 = vld [vmem:[#allocation2] sm:$0x3]
    %v1146 = vld [vmem:[%s43] sm:$0xff]
    %v1147 = vld [vmem:[%s43 + $0x8] sm:$0xff]
    %v1148 = vld [vmem:[%s43 + $0x10] sm:$0xff]
    %v1149 = vld [vmem:[%s43 + $0x18] sm:$0xff]
    %v1150 = vld [vmem:[%s43 + $0x20] sm:$0xff]
    %v1151 = vld [vmem:[%s43 + $0x28] sm:$0xff]
    %v1152 = vld [vmem:[%s43 + $0x30] sm:$0xff]
    %v1153 = vld [vmem:[%s45] sm:$0x1]
    %v1154 = vld [vmem:[%s47] sm:$0xff]
    %v1155 = vld [vmem:[%s47 + $0x8] sm:$0xff]
    %v1156 = vld [vmem:[%s47 + $0x10] sm:$0xff]
    %v1157 = vld [vmem:[%s47 + $0x18] sm:$0xff]
    %v1158 = vld [vmem:[%s49] sm:$0x1]
    %v1159 = vld [vmem:[%s51] sm:$0xff]
    %v1160 = vld [vmem:[%s51 + $0x8] sm:$0xff]
    %v1161 = vld [vmem:[%s51 + $0x10] sm:$0xff]
    %v1162 = vld [vmem:[%s51 + $0x18] sm:$0xff]
    %v1163 = vld [vmem:[%s51 + $0x20] sm:$0xff]
    %v1164 = vld [vmem:[%s51 + $0x28] sm:$0xff]
    %v1165 = vld [vmem:[%s51 + $0x30] sm:$0xff]
    %v1166 = vld [vmem:[%s53] sm:$0x1]
    %v1167 = vld [vmem:[%s55] sm:$0x1]
    %v1168 = vld [vmem:[%s57] sm:$0x1]
    %v1170 = vlaneseq
    %v1171 = vshrl.u32 %v1170, 7
    %v1172 = vsub.s32 0, %v1171
    %v1173 = vrot.slane %v1153, %v1172
    %vm1175 = vcmask 457728
    %v1177 = vsel %vm1175, %v1145, 0
    %1179 = vmatprep.subr.mxu0 0.0
    %1180 = vmatpush1.msra.mxu0 %v1146
    %1181 = vmatprep.subr.mxu0 0.0
    %1182 = vmatpush1.msra.mxu0 %v1147
    %1183 = vmatprep.subr.mxu0 0.0
    %1184 = vmatpush1.msra.mxu0 %v1148
    %1185 = vmatprep.subr.mxu0 0.0
    %1186 = vmatpush1.msra.mxu0 %v1149
    %1187 = vmatprep.subr.mxu0 0.0
    %1188 = vmatpush1.msra.mxu0 %v1150
    %1189 = vmatprep.subr.mxu0 0.0
    %1190 = vmatpush1.msra.mxu0 %v1151
    %1191 = vmatprep.subr.mxu0 0.0
    %1192 = vmatpush1.msra.mxu0 %v1152
    %1193 = vmatprep.subr.mxu0 0.0
    %1194 = vmatpush1.msra.mxu0 0.0
    %1195 = vmatprep.subr.mxu0 0.0
    %1196 = vmatpush1.msra.mxu0 0.0
    %1197 = vmatprep.subr.mxu0 0.0
    %1198 = vmatpush1.msra.mxu0 0.0
    %1199 = vmatprep.subr.mxu0 0.0
    %1200 = vmatpush1.msra.mxu0 0.0
    %1201 = vmatprep.subr.mxu0 0.0
    %1202 = vmatpush1.msra.mxu0 0.0
    %1203 = vmatprep.subr.mxu0 0.0
    %1204 = vmatpush1.msra.mxu0 0.0
    %1205 = vmatprep.subr.mxu0 0.0
    %1206 = vmatpush1.msra.mxu0 0.0
    %1207 = vmatprep.subr.mxu0 0.0
    %1208 = vmatpush1.msra.mxu0 0.0
    %1209 = vmatprep.subr.mxu0 0.0
    %1210 = vmatpush1.msra.mxu0 0.0
    %1211 = vmatprep.subr.mxu0 0.0
    %1212 = vmatpush1.msra.mxu0 0.0
    %1213 = vmatprep.subr.mxu0 0.0
    %1214 = vmatpush1.msra.mxu0 0.0
    %1215 = vmatprep.subr.mxu0 0.0
    %1216 = vmatpush1.msra.mxu0 0.0
    %1217 = vmatprep.subr.mxu0 0.0
    %1218 = vmatpush1.msra.mxu0 0.0
    %1219 = vmatprep.subr.mxu0 0.0
    %1220 = vmatpush1.msra.mxu0 0.0
    %1221 = vmatprep.subr.mxu0 0.0
    %1222 = vmatpush1.msra.mxu0 0.0
    %1223 = vmatprep.subr.mxu0 0.0
    %1224 = vmatpush1.msra.mxu0 0.0
    %1225 = vmatprep.subr.mxu0 0.0
    %1226 = vmatpush1.msra.mxu0 0.0
    %1227 = vmatprep.subr.mxu0 0.0
    %1228 = vmatpush1.msra.mxu0 0.0
    %1229 = vmatprep.subr.mxu0 0.0
    %1230 = vmatpush1.msra.mxu0 0.0
    %1231 = vmatprep.subr.mxu0 0.0
    %1232 = vmatpush1.msra.mxu0 0.0
    %1233 = vmatprep.subr.mxu0 0.0
    %1234 = vmatpush1.msra.mxu0 0.0
    %1235 = vmatprep.subr.mxu0 0.0
    %1236 = vmatpush1.msra.mxu0 0.0
    %1237 = vmatprep.subr.mxu0 0.0
    %1238 = vmatpush1.msra.mxu0 0.0
    %1239 = vmatprep.subr.mxu0 0.0
    %1240 = vmatpush1.msra.mxu0 0.0
    %1241 = vmatprep.subr.mxu0 0.0
    %1242 = vmatpush1.msra.mxu0 0.0
    %1243 = vmatprep.mubr.f32.mxu0 0.0
    %1244 = vmatmul.mubr.f32.gmra.mrb[0].mxu0 %v1177
    %v1245 = vpop.f32.mrb[0].mxu0
    %v1246 = vadd.f32 %v1173, %v1245
    %v1247 = vpop.f32.mrb[0].mxu0
    %1248 = vdwg.mxu0
    %v1249 = vmax.f32 %v1246, 0.0
    %v1251 = vlaneseq
    %v1252 = vshrl.u32 %v1251, 7
    %v1253 = vsub.s32 0, %v1252
    %v1254 = vrot.slane %v1158, %v1253
    %v1257 = vsel %vm582, %v1249, 0
    %1259 = vmatprep.subr.mxu0 0.0
    %1260 = vmatpush1.msra.mxu0 %v1154
    %1261 = vmatprep.subr.mxu0 0.0
    %1262 = vmatpush1.msra.mxu0 %v1155
    %1263 = vmatprep.subr.mxu0 0.0
    %1264 = vmatpush1.msra.mxu0 %v1156
    %1265 = vmatprep.subr.mxu0 0.0
    %1266 = vmatpush1.msra.mxu0 %v1157
    %1267 = vmatprep.subr.mxu0 0.0
    %1268 = vmatpush1.msra.mxu0 0.0
    %1269 = vmatprep.subr.mxu0 0.0
    %1270 = vmatpush1.msra.mxu0 0.0
    %1271 = vmatprep.subr.mxu0 0.0
    %1272 = vmatpush1.msra.mxu0 0.0
    %1273 = vmatprep.subr.mxu0 0.0
    %1274 = vmatpush1.msra.mxu0 0.0
    %1275 = vmatprep.subr.mxu0 0.0
    %1276 = vmatpush1.msra.mxu0 0.0
    %1277 = vmatprep.subr.mxu0 0.0
    %1278 = vmatpush1.msra.mxu0 0.0
    %1279 = vmatprep.subr.mxu0 0.0
    %1280 = vmatpush1.msra.mxu0 0.0
    %1281 = vmatprep.subr.mxu0 0.0
    %1282 = vmatpush1.msra.mxu0 0.0
    %1283 = vmatprep.subr.mxu0 0.0
    %1284 = vmatpush1.msra.mxu0 0.0
    %1285 = vmatprep.subr.mxu0 0.0
    %1286 = vmatpush1.msra.mxu0 0.0
    %1287 = vmatprep.subr.mxu0 0.0
    %1288 = vmatpush1.msra.mxu0 0.0
    %1289 = vmatprep.subr.mxu0 0.0
    %1290 = vmatpush1.msra.mxu0 0.0
    %1291 = vmatprep.subr.mxu0 0.0
    %1292 = vmatpush1.msra.mxu0 0.0
    %1293 = vmatprep.subr.mxu0 0.0
    %1294 = vmatpush1.msra.mxu0 0.0
    %1295 = vmatprep.subr.mxu0 0.0
    %1296 = vmatpush1.msra.mxu0 0.0
    %1297 = vmatprep.subr.mxu0 0.0
    %1298 = vmatpush1.msra.mxu0 0.0
    %1299 = vmatprep.subr.mxu0 0.0
    %1300 = vmatpush1.msra.mxu0 0.0
    %1301 = vmatprep.subr.mxu0 0.0
    %1302 = vmatpush1.msra.mxu0 0.0
    %1303 = vmatprep.subr.mxu0 0.0
    %1304 = vmatpush1.msra.mxu0 0.0
    %1305 = vmatprep.subr.mxu0 0.0
    %1306 = vmatpush1.msra.mxu0 0.0
    %1307 = vmatprep.subr.mxu0 0.0
    %1308 = vmatpush1.msra.mxu0 0.0
    %1309 = vmatprep.subr.mxu0 0.0
    %1310 = vmatpush1.msra.mxu0 0.0
    %1311 = vmatprep.subr.mxu0 0.0
    %1312 = vmatpush1.msra.mxu0 0.0
    %1313 = vmatprep.subr.mxu0 0.0
    %1314 = vmatpush1.msra.mxu0 0.0
    %1315 = vmatprep.subr.mxu0 0.0
    %1316 = vmatpush1.msra.mxu0 0.0
    %1317 = vmatprep.subr.mxu0 0.0
    %1318 = vmatpush1.msra.mxu0 0.0
    %1319 = vmatprep.subr.mxu0 0.0
    %1320 = vmatpush1.msra.mxu0 0.0
    %1321 = vmatprep.subr.mxu0 0.0
    %1322 = vmatpush1.msra.mxu0 0.0
    %1323 = vmatprep.mubr.f32.mxu0 0.0
    %1324 = vmatmul.mubr.f32.gmra.mrb[0].mxu0 %v1257
    %v1325 = vpop.f32.mrb[0].mxu0
    %v1326 = vadd.f32 %v1254, %v1325
    %v1327 = vpop.f32.mrb[0].mxu0
    %1328 = vdwg.mxu0
    %1329 = vmatprep.subr.mxu0 0.0
    %1330 = vmatpush1.msra.mxu0 %v1159
    %1331 = vmatprep.subr.mxu0 0.0
    %1332 = vmatpush1.msra.mxu0 %v1160
    %1333 = vmatprep.subr.mxu0 0.0
    %1334 = vmatpush1.msra.mxu0 %v1161
    %1335 = vmatprep.subr.mxu0 0.0
    %1336 = vmatpush1.msra.mxu0 %v1162
    %1337 = vmatprep.subr.mxu0 0.0
    %1338 = vmatpush1.msra.mxu0 %v1163
    %1339 = vmatprep.subr.mxu0 0.0
    %1340 = vmatpush1.msra.mxu0 %v1164
    %1341 = vmatprep.subr.mxu0 0.0
    %1342 = vmatpush1.msra.mxu0 %v1165
    %1343 = vmatprep.subr.mxu0 0.0
    %1344 = vmatpush1.msra.mxu0 0.0
    %1345 = vmatprep.subr.mxu0 0.0
    %1346 = vmatpush1.msra.mxu0 0.0
    %1347 = vmatprep.subr.mxu0 0.0
    %1348 = vmatpush1.msra.mxu0 0.0
    %1349 = vmatprep.subr.mxu0 0.0
    %1350 = vmatpush1.msra.mxu0 0.0
    %1351 = vmatprep.subr.mxu0 0.0
    %1352 = vmatpush1.msra.mxu0 0.0
    %1353 = vmatprep.subr.mxu0 0.0
    %1354 = vmatpush1.msra.mxu0 0.0
    %1355 = vmatprep.subr.mxu0 0.0
    %1356 = vmatpush1.msra.mxu0 0.0
    %1357 = vmatprep.subr.mxu0 0.0
    %1358 = vmatpush1.msra.mxu0 0.0
    %1359 = vmatprep.subr.mxu0 0.0
    %1360 = vmatpush1.msra.mxu0 0.0
    %1361 = vmatprep.subr.mxu0 0.0
    %1362 = vmatpush1.msra.mxu0 0.0
    %1363 = vmatprep.subr.mxu0 0.0
    %1364 = vmatpush1.msra.mxu0 0.0
    %1365 = vmatprep.subr.mxu0 0.0
    %1366 = vmatpush1.msra.mxu0 0.0
    %1367 = vmatprep.subr.mxu0 0.0
    %1368 = vmatpush1.msra.mxu0 0.0
    %1369 = vmatprep.subr.mxu0 0.0
    %1370 = vmatpush1.msra.mxu0 0.0
    %1371 = vmatprep.subr.mxu0 0.0
    %1372 = vmatpush1.msra.mxu0 0.0
    %1373 = vmatprep.subr.mxu0 0.0
    %1374 = vmatpush1.msra.mxu0 0.0
    %1375 = vmatprep.subr.mxu0 0.0
    %1376 = vmatpush1.msra.mxu0 0.0
    %1377 = vmatprep.subr.mxu0 0.0
    %1378 = vmatpush1.msra.mxu0 0.0
    %1379 = vmatprep.subr.mxu0 0.0
    %1380 = vmatpush1.msra.mxu0 0.0
    %1381 = vmatprep.subr.mxu0 0.0
    %1382 = vmatpush1.msra.mxu0 0.0
    %1383 = vmatprep.subr.mxu0 0.0
    %1384 = vmatpush1.msra.mxu0 0.0
    %1385 = vmatprep.subr.mxu0 0.0
    %1386 = vmatpush1.msra.mxu0 0.0
    %1387 = vmatprep.subr.mxu0 0.0
    %1388 = vmatpush1.msra.mxu0 0.0
    %1389 = vmatprep.subr.mxu0 0.0
    %1390 = vmatpush1.msra.mxu0 0.0
    %1391 = vmatprep.subr.mxu0 0.0
    %1392 = vmatpush1.msra.mxu0 0.0
    %1393 = vmatprep.mubr.f32.mxu0 0.0
    %1394 = vmatmul.mubr.f32.gmra.mrb[0].mxu0 %v1177
    %v1395 = vpop.f32.mrb[0].mxu0
    %v1396 = vadd.f32 0.0, %v1395
    %v1397 = vpop.f32.mrb[0].mxu0
    %1398 = vdwg.mxu0
    %v1399 = vadd.f32 %v1326, %v1396
    %v1401 = vlaneseq
    %v1402 = vshrl.u32 %v1401, 7
    %v1403 = vsub.s32 0, %v1402
    %v1404 = vrot.slane %v1166, %v1403
    %v1406 = vadd.f32 %v1399, %v1404
    %v1407 = vsel %vm1080, %v1406, 0.0
    %1408 = vadd.xlane.f32.xlu0 %v1407
    %v1409 = vpop.xlane.xlu0 %1408
    %v1410 = vrcp.pop 32.0
    %v1411 = vmul.f32 %v1409, %v1410
    %v1412 = vsub.f32 %v1406, %v1411
    %v1413 = vmul.f32 %v1412, %v1412
    %v1414 = vsel %vm1080, %v1413, 0.0
    %1415 = vadd.xlane.f32.xlu0 %v1414
    %v1416 = vpop.xlane.xlu0 %1415
    %v1417 = vmul.f32 %v1416, %v1410
    %v1418 = vadd.f32 %v1417, 1e-05
    %v1419 = vrsqrt.pop %v1418
    %v1420 = vmul.f32 %v1412, %v1419
    %v1422 = vlaneseq
    %v1423 = vshrl.u32 %v1422, 7
    %v1424 = vsub.s32 0, %v1423
    %v1425 = vrot.slane %v1167, %v1424
    %v1427 = vmul.f32 %v1420, %v1425
    %v1429 = vlaneseq
    %v1430 = vshrl.u32 %v1429, 7
    %v1431 = vsub.s32 0, %v1430
    %v1432 = vrot.slane %v1168, %v1431
    %v1434 = vadd.f32 %v1427, %v1432
    %v1435 = vld [vmem:[%s59] sm:$0xff]
    %v1436 = vld [vmem:[%s59 + $0x8] sm:$0xff]
    %v1437 = vld [vmem:[%s59 + $0x10] sm:$0xff]
    %v1438 = vld [vmem:[%s59 + $0x18] sm:$0xff]
    %v1439 = vld [vmem:[%s61] sm:$0x1]
    %v1440 = vld [vmem:[%s63] sm:$0xff]
    %v1441 = vld [vmem:[%s63 + $0x8] sm:$0xff]
    %v1442 = vld [vmem:[%s63 + $0x10] sm:$0xff]
    %v1443 = vld [vmem:[%s63 + $0x18] sm:$0xff]
    %v1444 = vld [vmem:[%s65] sm:$0x1]
    %v1445 = vld [vmem:[%s67] sm:$0xff]
    %v1446 = vld [vmem:[%s67 + $0x8] sm:$0xff]
    %v1447 = vld [vmem:[%s67 + $0x10] sm:$0xff]
    %v1448 = vld [vmem:[%s67 + $0x18] sm:$0xff]
    %v1449 = vld [vmem:[%s69] sm:$0x1]
    %v1450 = vld [vmem:[%s71] sm:$0x1]
    %v1451 = vld [vmem:[#allocation8] sm:$0x1]
    %v1453 = vlaneseq
    %v1454 = vshrl.u32 %v1453, 7
    %v1455 = vsub.s32 0, %v1454
    %v1456 = vrot.slane %v1439, %v1455
    %v1459 = vsel %vm582, %v1434, 0
    %1461 = vmatprep.subr.mxu0 0.0
    %1462 = vmatpush1.msra.mxu0 %v1435
    %1463 = vmatprep.subr.mxu0 0.0
    %1464 = vmatpush1.msra.mxu0 %v1436
    %1465 = vmatprep.subr.mxu0 0.0
    %1466 = vmatpush1.msra.mxu0 %v1437
    %1467 = vmatprep.subr.mxu0 0.0
    %1468 = vmatpush1.msra.mxu0 %v1438
    %1469 = vmatprep.subr.mxu0 0.0
    %1470 = vmatpush1.msra.mxu0 0.0
    %1471 = vmatprep.subr.mxu0 0.0
    %1472 = vmatpush1.msra.mxu0 0.0
    %1473 = vmatprep.subr.mxu0 0.0
    %1474 = vmatpush1.msra.mxu0 0.0
    %1475 = vmatprep.subr.mxu0 0.0
    %1476 = vmatpush1.msra.mxu0 0.0
    %1477 = vmatprep.subr.mxu0 0.0
    %1478 = vmatpush1.msra.mxu0 0.0
    %1479 = vmatprep.subr.mxu0 0.0
    %1480 = vmatpush1.msra.mxu0 0.0
    %1481 = vmatprep.subr.mxu0 0.0
    %1482 = vmatpush1.msra.mxu0 0.0
    %1483 = vmatprep.subr.mxu0 0.0
    %1484 = vmatpush1.msra.mxu0 0.0
    %1485 = vmatprep.subr.mxu0 0.0
    %1486 = vmatpush1.msra.mxu0 0.0
    %1487 = vmatprep.subr.mxu0 0.0
    %1488 = vmatpush1.msra.mxu0 0.0
    %1489 = vmatprep.subr.mxu0 0.0
    %1490 = vmatpush1.msra.mxu0 0.0
    %1491 = vmatprep.subr.mxu0 0.0
    %1492 = vmatpush1.msra.mxu0 0.0
    %1493 = vmatprep.subr.mxu0 0.0
    %1494 = vmatpush1.msra.mxu0 0.0
    %1495 = vmatprep.subr.mxu0 0.0
    %1496 = vmatpush1.msra.mxu0 0.0
    %1497 = vmatprep.subr.mxu0 0.0
    %1498 = vmatpush1.msra.mxu0 0.0
    %1499 = vmatprep.subr.mxu0 0.0
    %1500 = vmatpush1.msra.mxu0 0.0
    %1501 = vmatprep.subr.mxu0 0.0
    %1502 = vmatpush1.msra.mxu0 0.0
    %1503 = vmatprep.subr.mxu0 0.0
    %1504 = vmatpush1.msra.mxu0 0.0
    %1505 = vmatprep.subr.mxu0 0.0
    %1506 = vmatpush1.msra.mxu0 0.0
    %1507 = vmatprep.subr.mxu0 0.0
    %1508 = vmatpush1.msra.mxu0 0.0
    %1509 = vmatprep.subr.mxu0 0.0
    %1510 = vmatpush1.msra.mxu0 0.0
    %1511 = vmatprep.subr.mxu0 0.0
    %1512 = vmatpush1.msra.mxu0 0.0
    %1513 = vmatprep.subr.mxu0 0.0
    %1514 = vmatpush1.msra.mxu0 0.0
    %1515 = vmatprep.subr.mxu0 0.0
    %1516 = vmatpush1.msra.mxu0 0.0
    %1517 = vmatprep.subr.mxu0 0.0
    %1518 = vmatpush1.msra.mxu0 0.0
    %1519 = vmatprep.subr.mxu0 0.0
    %1520 = vmatpush1.msra.mxu0 0.0
    %1521 = vmatprep.subr.mxu0 0.0
    %1522 = vmatpush1.msra.mxu0 0.0
    %1523 = vmatprep.subr.mxu0 0.0
    %1524 = vmatpush1.msra.mxu0 0.0
    %1525 = vmatprep.mubr.f32.mxu0 0.0
    %1526 = vmatmul.mubr.f32.gmra.mrb[0].mxu0 %v1459
    %v1527 = vpop.f32.mrb[0].mxu0
    %v1528 = vadd.f32 %v1456, %v1527
    %v1529 = vpop.f32.mrb[0].mxu0
    %1530 = vdwg.mxu0
    %v1531 = vmax.f32 %v1528, 0.0
    %v1533 = vlaneseq
    %v1534 = vshrl.u32 %v1533, 7
    %v1535 = vsub.s32 0, %v1534
    %v1536 = vrot.slane %v1444, %v1535
    %v1539 = vsel %vm582, %v1531, 0
    %1541 = vmatprep.subr.mxu0 0.0
    %1542 = vmatpush1.msra.mxu0 %v1440
    %1543 = vmatprep.subr.mxu0 0.0
    %1544 = vmatpush1.msra.mxu0 %v1441
    %1545 = vmatprep.subr.mxu0 0.0
    %1546 = vmatpush1.msra.mxu0 %v1442
    %1547 = vmatprep.subr.mxu0 0.0
    %1548 = vmatpush1.msra.mxu0 %v1443
    %1549 = vmatprep.subr.mxu0 0.0
    %1550 = vmatpush1.msra.mxu0 0.0
    %1551 = vmatprep.subr.mxu0 0.0
    %1552 = vmatpush1.msra.mxu0 0.0
    %1553 = vmatprep.subr.mxu0 0.0
    %1554 = vmatpush1.msra.mxu0 0.0
    %1555 = vmatprep.subr.mxu0 0.0
    %1556 = vmatpush1.msra.mxu0 0.0
    %1557 = vmatprep.subr.mxu0 0.0
    %1558 = vmatpush1.msra.mxu0 0.0
    %1559 = vmatprep.subr.mxu0 0.0
    %1560 = vmatpush1.msra.mxu0 0.0
    %1561 = vmatprep.subr.mxu0 0.0
    %1562 = vmatpush1.msra.mxu0 0.0
    %1563 = vmatprep.subr.mxu0 0.0
    %1564 = vmatpush1.msra.mxu0 0.0
    %1565 = vmatprep.subr.mxu0 0.0
    %1566 = vmatpush1.msra.mxu0 0.0
    %1567 = vmatprep.subr.mxu0 0.0
    %1568 = vmatpush1.msra.mxu0 0.0
    %1569 = vmatprep.subr.mxu0 0.0
    %1570 = vmatpush1.msra.mxu0 0.0
    %1571 = vmatprep.subr.mxu0 0.0
    %1572 = vmatpush1.msra.mxu0 0.0
    %1573 = vmatprep.subr.mxu0 0.0
    %1574 = vmatpush1.msra.mxu0 0.0
    %1575 = vmatprep.subr.mxu0 0.0
    %1576 = vmatpush1.msra.mxu0 0.0
    %1577 = vmatprep.subr.mxu0 0.0
    %1578 = vmatpush1.msra.mxu0 0.0
    %1579 = vmatprep.subr.mxu0 0.0
    %1580 = vmatpush1.msra.mxu0 0.0
    %1581 = vmatprep.subr.mxu0 0.0
    %1582 = vmatpush1.msra.mxu0 0.0
    %1583 = vmatprep.subr.mxu0 0.0
    %1584 = vmatpush1.msra.mxu0 0.0
    %1585 = vmatprep.subr.mxu0 0.0
    %1586 = vmatpush1.msra.mxu0 0.0
    %1587 = vmatprep.subr.mxu0 0.0
    %1588 = vmatpush1.msra.mxu0 0.0
    %1589 = vmatprep.subr.mxu0 0.0
    %1590 = vmatpush1.msra.mxu0 0.0
    %1591 = vmatprep.subr.mxu0 0.0
    %1592 = vmatpush1.msra.mxu0 0.0
    %1593 = vmatprep.subr.mxu0 0.0
    %1594 = vmatpush1.msra.mxu0 0.0
    %1595 = vmatprep.subr.mxu0 0.0
    %1596 = vmatpush1.msra.mxu0 0.0
    %1597 = vmatprep.subr.mxu0 0.0
    %1598 = vmatpush1.msra.mxu0 0.0
    %1599 = vmatprep.subr.mxu0 0.0
    %1600 = vmatpush1.msra.mxu0 0.0
    %1601 = vmatprep.subr.mxu0 0.0
    %1602 = vmatpush1.msra.mxu0 0.0
    %1603 = vmatprep.subr.mxu0 0.0
    %1604 = vmatpush1.msra.mxu0 0.0
    %1605 = vmatprep.mubr.f32.mxu0 0.0
    %1606 = vmatmul.mubr.f32.gmra.mrb[0].mxu0 %v1539
    %v1607 = vpop.f32.mrb[0].mxu0
    %v1608 = vadd.f32 %v1536, %v1607
    %v1609 = vpop.f32.mrb[0].mxu0
    %1610 = vdwg.mxu0
    %1611 = vmatprep.subr.mxu0 0.0
    %1612 = vmatpush1.msra.mxu0 %v1445
    %1613 = vmatprep.subr.mxu0 0.0
    %1614 = vmatpush1.msra.mxu0 %v1446
    %1615 = vmatprep.subr.mxu0 0.0
    %1616 = vmatpush1.msra.mxu0 %v1447
    %1617 = vmatprep.subr.mxu0 0.0
    %1618 = vmatpush1.msra.mxu0 %v1448
    %1619 = vmatprep.subr.mxu0 0.0
    %1620 = vmatpush1.msra.mxu0 0.0
    %1621 = vmatprep.subr.mxu0 0.0
    %1622 = vmatpush1.msra.mxu0 0.0
    %1623 = vmatprep.subr.mxu0 0.0
    %1624 = vmatpush1.msra.mxu0 0.0
    %1625 = vmatprep.subr.mxu0 0.0
    %1626 = vmatpush1.msra.mxu0 0.0
    %1627 = vmatprep.subr.mxu0 0.0
    %1628 = vmatpush1.msra.mxu0 0.0
    %1629 = vmatprep.subr.mxu0 0.0
    %1630 = vmatpush1.msra.mxu0 0.0
    %1631 = vmatprep.subr.mxu0 0.0
    %1632 = vmatpush1.msra.mxu0 0.0
    %1633 = vmatprep.subr.mxu0 0.0
    %1634 = vmatpush1.msra.mxu0 0.0
    %1635 = vmatprep.subr.mxu0 0.0
    %1636 = vmatpush1.msra.mxu0 0.0
    %1637 = vmatprep.subr.mxu0 0.0
    %1638 = vmatpush1.msra.mxu0 0.0
    %1639 = vmatprep.subr.mxu0 0.0
    %1640 = vmatpush1.msra.mxu0 0.0
    %1641 = vmatprep.subr.mxu0 0.0
    %1642 = vmatpush1.msra.mxu0 0.0
    %1643 = vmatprep.subr.mxu0 0.0
    %1644 = vmatpush1.msra.mxu0 0.0
    %1645 = vmatprep.subr.mxu0 0.0
    %1646 = vmatpush1.msra.mxu0 0.0
    %1647 = vmatprep.subr.mxu0 0.0
    %1648 = vmatpush1.msra.mxu0 0.0
    %1649 = vmatprep.subr.mxu0 0.0
    %1650 = vmatpush1.msra.mxu0 0.0
    %1651 = vmatprep.subr.mxu0 0.0
    %1652 = vmatpush1.msra.mxu0 0.0
    %1653 = vmatprep.subr.mxu0 0.0
    %1654 = vmatpush1.msra.mxu0 0.0
    %1655 = vmatprep.subr.mxu0 0.0
    %1656 = vmatpush1.msra.mxu0 0.0
    %1657 = vmatprep.subr.mxu0 0.0
    %1658 = vmatpush1.msra.mxu0 0.0
    %1659 = vmatprep.subr.mxu0 0.0
    %1660 = vmatpush1.msra.mxu0 0.0
    %1661 = vmatprep.subr.mxu0 0.0
    %1662 = vmatpush1.msra.mxu0 0.0
    %1663 = vmatprep.subr.mxu0 0.0
    %1664 = vmatpush1.msra.mxu0 0.0
    %1665 = vmatprep.subr.mxu0 0.0
    %1666 = vmatpush1.msra.mxu0 0.0
    %1667 = vmatprep.subr.mxu0 0.0
    %1668 = vmatpush1.msra.mxu0 0.0
    %1669 = vmatprep.subr.mxu0 0.0
    %1670 = vmatpush1.msra.mxu0 0.0
    %1671 = vmatprep.subr.mxu0 0.0
    %1672 = vmatpush1.msra.mxu0 0.0
    %1673 = vmatprep.subr.mxu0 0.0
    %1674 = vmatpush1.msra.mxu0 0.0
    %1675 = vmatprep.mubr.f32.mxu0 0.0
    %1676 = vmatmul.mubr.f32.gmra.mrb[0].mxu0 %v1459
    %v1677 = vpop.f32.mrb[0].mxu0
    %v1678 = vadd.f32 0.0, %v1677
    %v1679 = vpop.f32.mrb[0].mxu0
    %1680 = vdwg.mxu0
    %v1681 = vadd.f32 %v1608, %v1678
    %v1683 = vlaneseq
    %v1684 = vshrl.u32 %v1683, 7
    %v1685 = vsub.s32 0, %v1684
    %v1686 = vrot.slane %v1449, %v1685
    %v1688 = vadd.f32 %v1681, %v1686
    %v1689 = vsel %vm1080, %v1688, 0.0
    %1690 = vadd.xlane.f32.xlu0 %v1689
    %v1691 = vpop.xlane.xlu0 %1690
    %v1692 = vmul.f32 %v1691, %v1410
    %v1693 = vsub.f32 %v1688, %v1692
    %v1694 = vmul.f32 %v1693, %v1693
    %v1695 = vsel %vm1080, %v1694, 0.0
    %1696 = vadd.xlane.f32.xlu0 %v1695
    %v1697 = vpop.xlane.xlu0 %1696
    %v1698 = vmul.f32 %v1697, %v1410
    %v1699 = vadd.f32 %v1698, 1e-05
    %v1700 = vrsqrt.pop %v1699
    %v1701 = vmul.f32 %v1693, %v1700
    %v1703 = vlaneseq
    %v1704 = vshrl.u32 %v1703, 7
    %v1705 = vsub.s32 0, %v1704
    %v1706 = vrot.slane %v1450, %v1705
    %v1708 = vmul.f32 %v1701, %v1706
    %v1710 = vlaneseq
    %v1711 = vshrl.u32 %v1710, 7
    %v1712 = vsub.s32 0, %v1711
    %v1713 = vrot.slane %v1451, %v1712
    %v1715 = vadd.f32 %v1708, %v1713
    %v1716 = vld [vmem:[%s75] sm:$0xff]
    %v1717 = vld [vmem:[%s75 + $0x8] sm:$0xff]
    %v1718 = vld [vmem:[%s75 + $0x10] sm:$0xff]
    %v1719 = vld [vmem:[%s75 + $0x18] sm:$0xff]
    %v1720 = vld [vmem:[#allocation9] sm:$0x1]
    %v1721 = vld [vmem:[%s79] sm:$0xff]
    %v1722 = vld [vmem:[%s79 + $0x8] sm:$0xff]
    %v1723 = vld [vmem:[%s79 + $0x10] sm:$0xff]
    %v1724 = vld [vmem:[%s79 + $0x18] sm:$0xff]
    %v1725 = vld [vmem:[#allocation11] sm:$0x1]
    %v1726 = vld [vmem:[%s83] sm:$0xff]
    %v1727 = vld [vmem:[%s83 + $0x8] sm:$0xff]
    %v1728 = vld [vmem:[%s83 + $0x10] sm:$0xff]
    %v1729 = vld [vmem:[%s83 + $0x18] sm:$0xff]
    %v1730 = vld [vmem:[#allocation12] sm:$0x1]
    %v1731 = vld [vmem:[#allocation14] sm:$0x1]
    %v1732 = vld [vmem:[#allocation15] sm:$0x1]
    %v1734 = vlaneseq
    %v1735 = vshrl.u32 %v1734, 7
    %v1736 = vsub.s32 0, %v1735
    %v1737 = vrot.slane %v1720, %v1736
    %v1740 = vsel %vm582, %v1715, 0
    %1742 = vmatprep.subr.mxu0 0.0
    %1743 = vmatpush1.msra.mxu0 %v1716
    %1744 = vmatprep.subr.mxu0 0.0
    %1745 = vmatpush1.msra.mxu0 %v1717
    %1746 = vmatprep.subr.mxu0 0.0
    %1747 = vmatpush1.msra.mxu0 %v1718
    %1748 = vmatprep.subr.mxu0 0.0
    %1749 = vmatpush1.msra.mxu0 %v1719
    %1750 = vmatprep.subr.mxu0 0.0
    %1751 = vmatpush1.msra.mxu0 0.0
    %1752 = vmatprep.subr.mxu0 0.0
    %1753 = vmatpush1.msra.mxu0 0.0
    %1754 = vmatprep.subr.mxu0 0.0
    %1755 = vmatpush1.msra.mxu0 0.0
    %1756 = vmatprep.subr.mxu0 0.0
    %1757 = vmatpush1.msra.mxu0 0.0
    %1758 = vmatprep.subr.mxu0 0.0
    %1759 = vmatpush1.msra.mxu0 0.0
    %1760 = vmatprep.subr.mxu0 0.0
    %1761 = vmatpush1.msra.mxu0 0.0
    %1762 = vmatprep.subr.mxu0 0.0
    %1763 = vmatpush1.msra.mxu0 0.0
    %1764 = vmatprep.subr.mxu0 0.0
    %1765 = vmatpush1.msra.mxu0 0.0
    %1766 = vmatprep.subr.mxu0 0.0
    %1767 = vmatpush1.msra.mxu0 0.0
    %1768 = vmatprep.subr.mxu0 0.0
    %1769 = vmatpush1.msra.mxu0 0.0
    %1770 = vmatprep.subr.mxu0 0.0
    %1771 = vmatpush1.msra.mxu0 0.0
    %1772 = vmatprep.subr.mxu0 0.0
    %1773 = vmatpush1.msra.mxu0 0.0
    %1774 = vmatprep.subr.mxu0 0.0
    %1775 = vmatpush1.msra.mxu0 0.0
    %1776 = vmatprep.subr.mxu0 0.0
    %1777 = vmatpush1.msra.mxu0 0.0
    %1778 = vmatprep.subr.mxu0 0.0
    %1779 = vmatpush1.msra.mxu0 0.0
    %1780 = vmatprep.subr.mxu0 0.0
    %1781 = vmatpush1.msra.mxu0 0.0
    %1782 = vmatprep.subr.mxu0 0.0
    %1783 = vmatpush1.msra.mxu0 0.0
    %1784 = vmatprep.subr.mxu0 0.0
    %1785 = vmatpush1.msra.mxu0 0.0
    %1786 = vmatprep.subr.mxu0 0.0
    %1787 = vmatpush1.msra.mxu0 0.0
    %1788 = vmatprep.subr.mxu0 0.0
    %1789 = vmatpush1.msra.mxu0 0.0
    %1790 = vmatprep.subr.mxu0 0.0
    %1791 = vmatpush1.msra.mxu0 0.0
    %1792 = vmatprep.subr.mxu0 0.0
    %1793 = vmatpush1.msra.mxu0 0.0
    %1794 = vmatprep.subr.mxu0 0.0
    %1795 = vmatpush1.msra.mxu0 0.0
    %1796 = vmatprep.subr.mxu0 0.0
    %1797 = vmatpush1.msra.mxu0 0.0
    %1798 = vmatprep.subr.mxu0 0.0
    %1799 = vmatpush1.msra.mxu0 0.0
    %1800 = vmatprep.subr.mxu0 0.0
    %1801 = vmatpush1.msra.mxu0 0.0
    %1802 = vmatprep.subr.mxu0 0.0
    %1803 = vmatpush1.msra.mxu0 0.0
    %1804 = vmatprep.subr.mxu0 0.0
    %1805 = vmatpush1.msra.mxu0 0.0
    %1806 = vmatprep.mubr.f32.mxu0 0.0
    %1807 = vmatmul.mubr.f32.gmra.mrb[0].mxu0 %v1740
    %v1808 = vpop.f32.mrb[0].mxu0
    %v1809 = vadd.f32 %v1737, %v1808
    %v1810 = vpop.f32.mrb[0].mxu0
    %1811 = vdwg.mxu0
    %v1812 = vmax.f32 %v1809, 0.0
    %v1814 = vlaneseq
    %v1815 = vshrl.u32 %v1814, 7
    %v1816 = vsub.s32 0, %v1815
    %v1817 = vrot.slane %v1725, %v1816
    %v1820 = vsel %vm582, %v1812, 0
    %1822 = vmatprep.subr.mxu0 0.0
    %1823 = vmatpush1.msra.mxu0 %v1721
    %1824 = vmatprep.subr.mxu0 0.0
    %1825 = vmatpush1.msra.mxu0 %v1722
    %1826 = vmatprep.subr.mxu0 0.0
    %1827 = vmatpush1.msra.mxu0 %v1723
    %1828 = vmatprep.subr.mxu0 0.0
    %1829 = vmatpush1.msra.mxu0 %v1724
    %1830 = vmatprep.subr.mxu0 0.0
    %1831 = vmatpush1.msra.mxu0 0.0
    %1832 = vmatprep.subr.mxu0 0.0
    %1833 = vmatpush1.msra.mxu0 0.0
    %1834 = vmatprep.subr.mxu0 0.0
    %1835 = vmatpush1.msra.mxu0 0.0
    %1836 = vmatprep.subr.mxu0 0.0
    %1837 = vmatpush1.msra.mxu0 0.0
    %1838 = vmatprep.subr.mxu0 0.0
    %1839 = vmatpush1.msra.mxu0 0.0
    %1840 = vmatprep.subr.mxu0 0.0
    %1841 = vmatpush1.msra.mxu0 0.0
    %1842 = vmatprep.subr.mxu0 0.0
    %1843 = vmatpush1.msra.mxu0 0.0
    %1844 = vmatprep.subr.mxu0 0.0
    %1845 = vmatpush1.msra.mxu0 0.0
    %1846 = vmatprep.subr.mxu0 0.0
    %1847 = vmatpush1.msra.mxu0 0.0
    %1848 = vmatprep.subr.mxu0 0.0
    %1849 = vmatpush1.msra.mxu0 0.0
    %1850 = vmatprep.subr.mxu0 0.0
    %1851 = vmatpush1.msra.mxu0 0.0
    %1852 = vmatprep.subr.mxu0 0.0
    %1853 = vmatpush1.msra.mxu0 0.0
    %1854 = vmatprep.subr.mxu0 0.0
    %1855 = vmatpush1.msra.mxu0 0.0
    %1856 = vmatprep.subr.mxu0 0.0
    %1857 = vmatpush1.msra.mxu0 0.0
    %1858 = vmatprep.subr.mxu0 0.0
    %1859 = vmatpush1.msra.mxu0 0.0
    %1860 = vmatprep.subr.mxu0 0.0
    %1861 = vmatpush1.msra.mxu0 0.0
    %1862 = vmatprep.subr.mxu0 0.0
    %1863 = vmatpush1.msra.mxu0 0.0
    %1864 = vmatprep.subr.mxu0 0.0
    %1865 = vmatpush1.msra.mxu0 0.0
    %1866 = vmatprep.subr.mxu0 0.0
    %1867 = vmatpush1.msra.mxu0 0.0
    %1868 = vmatprep.subr.mxu0 0.0
    %1869 = vmatpush1.msra.mxu0 0.0
    %1870 = vmatprep.subr.mxu0 0.0
    %1871 = vmatpush1.msra.mxu0 0.0
    %1872 = vmatprep.subr.mxu0 0.0
    %1873 = vmatpush1.msra.mxu0 0.0
    %1874 = vmatprep.subr.mxu0 0.0
    %1875 = vmatpush1.msra.mxu0 0.0
    %1876 = vmatprep.subr.mxu0 0.0
    %1877 = vmatpush1.msra.mxu0 0.0
    %1878 = vmatprep.subr.mxu0 0.0
    %1879 = vmatpush1.msra.mxu0 0.0
    %1880 = vmatprep.subr.mxu0 0.0
    %1881 = vmatpush1.msra.mxu0 0.0
    %1882 = vmatprep.subr.mxu0 0.0
    %1883 = vmatpush1.msra.mxu0 0.0
    %1884 = vmatprep.subr.mxu0 0.0
    %1885 = vmatpush1.msra.mxu0 0.0
    %1886 = vmatprep.mubr.f32.mxu0 0.0
    %1887 = vmatmul.mubr.f32.gmra.mrb[0].mxu0 %v1820
    %v1888 = vpop.f32.mrb[0].mxu0
    %v1889 = vadd.f32 %v1817, %v1888
    %v1890 = vpop.f32.mrb[0].mxu0
    %1891 = vdwg.mxu0
    %1892 = vmatprep.subr.mxu0 0.0
    %1893 = vmatpush1.msra.mxu0 %v1726
    %1894 = vmatprep.subr.mxu0 0.0
    %1895 = vmatpush1.msra.mxu0 %v1727
    %1896 = vmatprep.subr.mxu0 0.0
    %1897 = vmatpush1.msra.mxu0 %v1728
    %1898 = vmatprep.subr.mxu0 0.0
    %1899 = vmatpush1.msra.mxu0 %v1729
    %1900 = vmatprep.subr.mxu0 0.0
    %1901 = vmatpush1.msra.mxu0 0.0
    %1902 = vmatprep.subr.mxu0 0.0
    %1903 = vmatpush1.msra.mxu0 0.0
    %1904 = vmatprep.subr.mxu0 0.0
    %1905 = vmatpush1.msra.mxu0 0.0
    %1906 = vmatprep.subr.mxu0 0.0
    %1907 = vmatpush1.msra.mxu0 0.0
    %1908 = vmatprep.subr.mxu0 0.0
    %1909 = vmatpush1.msra.mxu0 0.0
    %1910 = vmatprep.subr.mxu0 0.0
    %1911 = vmatpush1.msra.mxu0 0.0
    %1912 = vmatprep.subr.mxu0 0.0
    %1913 = vmatpush1.msra.mxu0 0.0
    %1914 = vmatprep.subr.mxu0 0.0
    %1915 = vmatpush1.msra.mxu0 0.0
    %1916 = vmatprep.subr.mxu0 0.0
    %1917 = vmatpush1.msra.mxu0 0.0
    %1918 = vmatprep.subr.mxu0 0.0
    %1919 = vmatpush1.msra.mxu0 0.0
    %1920 = vmatprep.subr.mxu0 0.0
    %1921 = vmatpush1.msra.mxu0 0.0
    %1922 = vmatprep.subr.mxu0 0.0
    %1923 = vmatpush1.msra.mxu0 0.0
    %1924 = vmatprep.subr.mxu0 0.0
    %1925 = vmatpush1.msra.mxu0 0.0
    %1926 = vmatprep.subr.mxu0 0.0
    %1927 = vmatpush1.msra.mxu0 0.0
    %1928 = vmatprep.subr.mxu0 0.0
    %1929 = vmatpush1.msra.mxu0 0.0
    %1930 = vmatprep.subr.mxu0 0.0
    %1931 = vmatpush1.msra.mxu0 0.0
    %1932 = vmatprep.subr.mxu0 0.0
    %1933 = vmatpush1.msra.mxu0 0.0
    %1934 = vmatprep.subr.mxu0 0.0
    %1935 = vmatpush1.msra.mxu0 0.0
    %1936 = vmatprep.subr.mxu0 0.0
    %1937 = vmatpush1.msra.mxu0 0.0
    %1938 = vmatprep.subr.mxu0 0.0
    %1939 = vmatpush1.msra.mxu0 0.0
    %1940 = vmatprep.subr.mxu0 0.0
    %1941 = vmatpush1.msra.mxu0 0.0
    %1942 = vmatprep.subr.mxu0 0.0
    %1943 = vmatpush1.msra.mxu0 0.0
    %1944 = vmatprep.subr.mxu0 0.0
    %1945 = vmatpush1.msra.mxu0 0.0
    %1946 = vmatprep.subr.mxu0 0.0
    %1947 = vmatpush1.msra.mxu0 0.0
    %1948 = vmatprep.subr.mxu0 0.0
    %1949 = vmatpush1.msra.mxu0 0.0
    %1950 = vmatprep.subr.mxu0 0.0
    %1951 = vmatpush1.msra.mxu0 0.0
    %1952 = vmatprep.subr.mxu0 0.0
    %1953 = vmatpush1.msra.mxu0 0.0
    %1954 = vmatprep.subr.mxu0 0.0
    %1955 = vmatpush1.msra.mxu0 0.0
    %1956 = vmatprep.mubr.f32.mxu0 0.0
    %1957 = vmatmul.mubr.f32.gmra.mrb[0].mxu0 %v1740
    %v1958 = vpop.f32.mrb[0].mxu0
    %v1959 = vadd.f32 0.0, %v1958
    %v1960 = vpop.f32.mrb[0].mxu0
    %1961 = vdwg.mxu0
    %v1962 = vadd.f32 %v1889, %v1959
    %v1964 = vlaneseq
    %v1965 = vshrl.u32 %v1964, 7
    %v1966 = vsub.s32 0, %v1965
    %v1967 = vrot.slane %v1730, %v1966
    %v1969 = vadd.f32 %v1962, %v1967
    %v1970 = vsel %vm1080, %v1969, 0.0
    %1971 = vadd.xlane.f32.xlu0 %v1970
    %v1972 = vpop.xlane.xlu0 %1971
    %v1973 = vmul.f32 %v1972, %v1410
    %v1974 = vsub.f32 %v1969, %v1973
    %v1975 = vmul.f32 %v1974, %v1974
    %v1976 = vsel %vm1080, %v1975, 0.0
    %1977 = vadd.xlane.f32.xlu0 %v1976
    %v1978 = vpop.xlane.xlu0 %1977
    %v1979 = vmul.f32 %v1978, %v1410
    %v1980 = vadd.f32 %v1979, 1e-05
    %v1981 = vrsqrt.pop %v1980
    %v1982 = vmul.f32 %v1974, %v1981
    %v1984 = vlaneseq
    %v1985 = vshrl.u32 %v1984, 7
    %v1986 = vsub.s32 0, %v1985
    %v1987 = vrot.slane %v1731, %v1986
    %v1989 = vmul.f32 %v1982, %v1987
    %v1991 = vlaneseq
    %v1992 = vshrl.u32 %v1991, 7
    %v1993 = vsub.s32 0, %v1992
    %v1994 = vrot.slane %v1732, %v1993
    %v1996 = vadd.f32 %v1989, %v1994
    %v1997 = vld [vmem:[%s91] sm:$0xff]
    %v1998 = vld [vmem:[%s91 + $0x8] sm:$0xff]
    %v1999 = vld [vmem:[%s91 + $0x10] sm:$0xff]
    %v2000 = vld [vmem:[%s91 + $0x18] sm:$0xff]
    %v2001 = vld [vmem:[#allocation17] sm:$0x1]
    %v2002 = vld [vmem:[%s95] sm:$0xff]
    %v2003 = vld [vmem:[%s95 + $0x8] sm:$0xff]
    %v2004 = vld [vmem:[%s95 + $0x10] sm:$0xff]
    %v2005 = vld [vmem:[%s95 + $0x18] sm:$0xff]
    %v2006 = vld [vmem:[#allocation18] sm:$0x1]
    %v2007 = vld [vmem:[%s99] sm:$0xff]
    %v2008 = vld [vmem:[%s99 + $0x8] sm:$0xff]
    %v2009 = vld [vmem:[%s99 + $0x10] sm:$0xff]
    %v2010 = vld [vmem:[%s99 + $0x18] sm:$0xff]
    %v2011 = vld [vmem:[#allocation20] sm:$0x1]
    %v2012 = vld [vmem:[#allocation21] sm:$0x1]
    %v2013 = vld [vmem:[#allocation23] sm:$0x1]
    %v2015 = vlaneseq
    %v2016 = vshrl.u32 %v2015, 7
    %v2017 = vsub.s32 0, %v2016
    %v2018 = vrot.slane %v2001, %v2017
    %v2021 = vsel %vm582, %v1996, 0
    %2023 = vmatprep.subr.mxu0 0.0
    %2024 = vmatpush1.msra.mxu0 %v1997
    %2025 = vmatprep.subr.mxu0 0.0
    %2026 = vmatpush1.msra.mxu0 %v1998
    %2027 = vmatprep.subr.mxu0 0.0
    %2028 = vmatpush1.msra.mxu0 %v1999
    %2029 = vmatprep.subr.mxu0 0.0
    %2030 = vmatpush1.msra.mxu0 %v2000
    %2031 = vmatprep.subr.mxu0 0.0
    %2032 = vmatpush1.msra.mxu0 0.0
    %2033 = vmatprep.subr.mxu0 0.0
    %2034 = vmatpush1.msra.mxu0 0.0
    %2035 = vmatprep.subr.mxu0 0.0
    %2036 = vmatpush1.msra.mxu0 0.0
    %2037 = vmatprep.subr.mxu0 0.0
    %2038 = vmatpush1.msra.mxu0 0.0
    %2039 = vmatprep.subr.mxu0 0.0
    %2040 = vmatpush1.msra.mxu0 0.0
    %2041 = vmatprep.subr.mxu0 0.0
    %2042 = vmatpush1.msra.mxu0 0.0
    %2043 = vmatprep.subr.mxu0 0.0
    %2044 = vmatpush1.msra.mxu0 0.0
    %2045 = vmatprep.subr.mxu0 0.0
    %2046 = vmatpush1.msra.mxu0 0.0
    %2047 = vmatprep.subr.mxu0 0.0
    %2048 = vmatpush1.msra.mxu0 0.0
    %2049 = vmatprep.subr.mxu0 0.0
    %2050 = vmatpush1.msra.mxu0 0.0
    %2051 = vmatprep.subr.mxu0 0.0
    %2052 = vmatpush1.msra.mxu0 0.0
    %2053 = vmatprep.subr.mxu0 0.0
    %2054 = vmatpush1.msra.mxu0 0.0
    %2055 = vmatprep.subr.mxu0 0.0
    %2056 = vmatpush1.msra.mxu0 0.0
    %2057 = vmatprep.subr.mxu0 0.0
    %2058 = vmatpush1.msra.mxu0 0.0
    %2059 = vmatprep.subr.mxu0 0.0
    %2060 = vmatpush1.msra.mxu0 0.0
    %2061 = vmatprep.subr.mxu0 0.0
    %2062 = vmatpush1.msra.mxu0 0.0
    %2063 = vmatprep.subr.mxu0 0.0
    %2064 = vmatpush1.msra.mxu0 0.0
    %2065 = vmatprep.subr.mxu0 0.0
    %2066 = vmatpush1.msra.mxu0 0.0
    %2067 = vmatprep.subr.mxu0 0.0
    %2068 = vmatpush1.msra.mxu0 0.0
    %2069 = vmatprep.subr.mxu0 0.0
    %2070 = vmatpush1.msra.mxu0 0.0
    %2071 = vmatprep.subr.mxu0 0.0
    %2072 = vmatpush1.msra.mxu0 0.0
    %2073 = vmatprep.subr.mxu0 0.0
    %2074 = vmatpush1.msra.mxu0 0.0
    %2075 = vmatprep.subr.mxu0 0.0
    %2076 = vmatpush1.msra.mxu0 0.0
    %2077 = vmatprep.subr.mxu0 0.0
    %2078 = vmatpush1.msra.mxu0 0.0
    %2079 = vmatprep.subr.mxu0 0.0
    %2080 = vmatpush1.msra.mxu0 0.0
    %2081 = vmatprep.subr.mxu0 0.0
    %2082 = vmatpush1.msra.mxu0 0.0
    %2083 = vmatprep.subr.mxu0 0.0
    %2084 = vmatpush1.msra.mxu0 0.0
    %2085 = vmatprep.subr.mxu0 0.0
    %2086 = vmatpush1.msra.mxu0 0.0
    %2087 = vmatprep.mubr.f32.mxu0 0.0
    %2088 = vmatmul.mubr.f32.gmra.mrb[0].mxu0 %v2021
    %v2089 = vpop.f32.mrb[0].mxu0
    %v2090 = vadd.f32 %v2018, %v2089
    %v2091 = vpop.f32.mrb[0].mxu0
    %2092 = vdwg.mxu0
    %v2093 = vmax.f32 %v2090, 0.0
    %v2095 = vlaneseq
    %v2096 = vshrl.u32 %v2095, 7
    %v2097 = vsub.s32 0, %v2096
    %v2098 = vrot.slane %v2006, %v2097
    %v2101 = vsel %vm582, %v2093, 0
    %2103 = vmatprep.subr.mxu0 0.0
    %2104 = vmatpush1.msra.mxu0 %v2002
    %2105 = vmatprep.subr.mxu0 0.0
    %2106 = vmatpush1.msra.mxu0 %v2003
    %2107 = vmatprep.subr.mxu0 0.0
    %2108 = vmatpush1.msra.mxu0 %v2004
    %2109 = vmatprep.subr.mxu0 0.0
    %2110 = vmatpush1.msra.mxu0 %v2005
    %2111 = vmatprep.subr.mxu0 0.0
    %2112 = vmatpush1.msra.mxu0 0.0
    %2113 = vmatprep.subr.mxu0 0.0
    %2114 = vmatpush1.msra.mxu0 0.0
    %2115 = vmatprep.subr.mxu0 0.0
    %2116 = vmatpush1.msra.mxu0 0.0
    %2117 = vmatprep.subr.mxu0 0.0
    %2118 = vmatpush1.msra.mxu0 0.0
    %2119 = vmatprep.subr.mxu0 0.0
    %2120 = vmatpush1.msra.mxu0 0.0
    %2121 = vmatprep.subr.mxu0 0.0
    %2122 = vmatpush1.msra.mxu0 0.0
    %2123 = vmatprep.subr.mxu0 0.0
    %2124 = vmatpush1.msra.mxu0 0.0
    %2125 = vmatprep.subr.mxu0 0.0
    %2126 = vmatpush1.msra.mxu0 0.0
    %2127 = vmatprep.subr.mxu0 0.0
    %2128 = vmatpush1.msra.mxu0 0.0
    %2129 = vmatprep.subr.mxu0 0.0
    %2130 = vmatpush1.msra.mxu0 0.0
    %2131 = vmatprep.subr.mxu0 0.0
    %2132 = vmatpush1.msra.mxu0 0.0
    %2133 = vmatprep.subr.mxu0 0.0
    %2134 = vmatpush1.msra.mxu0 0.0
    %2135 = vmatprep.subr.mxu0 0.0
    %2136 = vmatpush1.msra.mxu0 0.0
    %2137 = vmatprep.subr.mxu0 0.0
    %2138 = vmatpush1.msra.mxu0 0.0
    %2139 = vmatprep.subr.mxu0 0.0
    %2140 = vmatpush1.msra.mxu0 0.0
    %2141 = vmatprep.subr.mxu0 0.0
    %2142 = vmatpush1.msra.mxu0 0.0
    %2143 = vmatprep.subr.mxu0 0.0
    %2144 = vmatpush1.msra.mxu0 0.0
    %2145 = vmatprep.subr.mxu0 0.0
    %2146 = vmatpush1.msra.mxu0 0.0
    %2147 = vmatprep.subr.mxu0 0.0
    %2148 = vmatpush1.msra.mxu0 0.0
    %2149 = vmatprep.subr.mxu0 0.0
    %2150 = vmatpush1.msra.mxu0 0.0
    %2151 = vmatprep.subr.mxu0 0.0
    %2152 = vmatpush1.msra.mxu0 0.0
    %2153 = vmatprep.subr.mxu0 0.0
    %2154 = vmatpush1.msra.mxu0 0.0
    %2155 = vmatprep.subr.mxu0 0.0
    %2156 = vmatpush1.msra.mxu0 0.0
    %2157 = vmatprep.subr.mxu0 0.0
    %2158 = vmatpush1.msra.mxu0 0.0
    %2159 = vmatprep.subr.mxu0 0.0
    %2160 = vmatpush1.msra.mxu0 0.0
    %2161 = vmatprep.subr.mxu0 0.0
    %2162 = vmatpush1.msra.mxu0 0.0
    %2163 = vmatprep.subr.mxu0 0.0
    %2164 = vmatpush1.msra.mxu0 0.0
    %2165 = vmatprep.subr.mxu0 0.0
    %2166 = vmatpush1.msra.mxu0 0.0
    %2167 = vmatprep.mubr.f32.mxu0 0.0
    %2168 = vmatmul.mubr.f32.gmra.mrb[0].mxu0 %v2101
    %v2169 = vpop.f32.mrb[0].mxu0
    %v2170 = vadd.f32 %v2098, %v2169
    %v2171 = vpop.f32.mrb[0].mxu0
    %2172 = vdwg.mxu0
    %2173 = vmatprep.subr.mxu0 0.0
    %2174 = vmatpush1.msra.mxu0 %v2007
    %2175 = vmatprep.subr.mxu0 0.0
    %2176 = vmatpush1.msra.mxu0 %v2008
    %2177 = vmatprep.subr.mxu0 0.0
    %2178 = vmatpush1.msra.mxu0 %v2009
    %2179 = vmatprep.subr.mxu0 0.0
    %2180 = vmatpush1.msra.mxu0 %v2010
    %2181 = vmatprep.subr.mxu0 0.0
    %2182 = vmatpush1.msra.mxu0 0.0
    %2183 = vmatprep.subr.mxu0 0.0
    %2184 = vmatpush1.msra.mxu0 0.0
    %2185 = vmatprep.subr.mxu0 0.0
    %2186 = vmatpush1.msra.mxu0 0.0
    %2187 = vmatprep.subr.mxu0 0.0
    %2188 = vmatpush1.msra.mxu0 0.0
    %2189 = vmatprep.subr.mxu0 0.0
    %2190 = vmatpush1.msra.mxu0 0.0
    %2191 = vmatprep.subr.mxu0 0.0
    %2192 = vmatpush1.msra.mxu0 0.0
    %2193 = vmatprep.subr.mxu0 0.0
    %2194 = vmatpush1.msra.mxu0 0.0
    %2195 = vmatprep.subr.mxu0 0.0
    %2196 = vmatpush1.msra.mxu0 0.0
    %2197 = vmatprep.subr.mxu0 0.0
    %2198 = vmatpush1.msra.mxu0 0.0
    %2199 = vmatprep.subr.mxu0 0.0
    %2200 = vmatpush1.msra.mxu0 0.0
    %2201 = vmatprep.subr.mxu0 0.0
    %2202 = vmatpush1.msra.mxu0 0.0
    %2203 = vmatprep.subr.mxu0 0.0
    %2204 = vmatpush1.msra.mxu0 0.0
    %2205 = vmatprep.subr.mxu0 0.0
    %2206 = vmatpush1.msra.mxu0 0.0
    %2207 = vmatprep.subr.mxu0 0.0
    %2208 = vmatpush1.msra.mxu0 0.0
    %2209 = vmatprep.subr.mxu0 0.0
    %2210 = vmatpush1.msra.mxu0 0.0
    %2211 = vmatprep.subr.mxu0 0.0
    %2212 = vmatpush1.msra.mxu0 0.0
    %2213 = vmatprep.subr.mxu0 0.0
    %2214 = vmatpush1.msra.mxu0 0.0
    %2215 = vmatprep.subr.mxu0 0.0
    %2216 = vmatpush1.msra.mxu0 0.0
    %2217 = vmatprep.subr.mxu0 0.0
    %2218 = vmatpush1.msra.mxu0 0.0
    %2219 = vmatprep.subr.mxu0 0.0
    %2220 = vmatpush1.msra.mxu0 0.0
    %2221 = vmatprep.subr.mxu0 0.0
    %2222 = vmatpush1.msra.mxu0 0.0
    %2223 = vmatprep.subr.mxu0 0.0
    %2224 = vmatpush1.msra.mxu0 0.0
    %2225 = vmatprep.subr.mxu0 0.0
    %2226 = vmatpush1.msra.mxu0 0.0
    %2227 = vmatprep.subr.mxu0 0.0
    %2228 = vmatpush1.msra.mxu0 0.0
    %2229 = vmatprep.subr.mxu0 0.0
    %2230 = vmatpush1.msra.mxu0 0.0
    %2231 = vmatprep.subr.mxu0 0.0
    %2232 = vmatpush1.msra.mxu0 0.0
    %2233 = vmatprep.subr.mxu0 0.0
    %2234 = vmatpush1.msra.mxu0 0.0
    %2235 = vmatprep.subr.mxu0 0.0
    %2236 = vmatpush1.msra.mxu0 0.0
    %2237 = vmatprep.mubr.f32.mxu0 0.0
    %2238 = vmatmul.mubr.f32.gmra.mrb[0].mxu0 %v2021
    %v2239 = vpop.f32.mrb[0].mxu0
    %v2240 = vadd.f32 0.0, %v2239
    %v2241 = vpop.f32.mrb[0].mxu0
    %2242 = vdwg.mxu0
    %v2243 = vadd.f32 %v2170, %v2240
    %v2245 = vlaneseq
    %v2246 = vshrl.u32 %v2245, 7
    %v2247 = vsub.s32 0, %v2246
    %v2248 = vrot.slane %v2011, %v2247
    %v2250 = vadd.f32 %v2243, %v2248
    %vm2251 = vcmask 91136
    %v2252 = vsel %vm2251, %v2250, 0.0
    %2253 = vadd.xlane.f32.xlu0 %v2252
    %v2254 = vpop.xlane.xlu0 %2253
    %v2255 = vrcp.pop 12.0
    %v2256 = vmul.f32 %v2254, %v2255
    %v2257 = vsub.f32 %v2250, %v2256
    %v2258 = vmul.f32 %v2257, %v2257
    %v2259 = vsel %vm2251, %v2258, 0.0
    %2260 = vadd.xlane.f32.xlu0 %v2259
    %v2261 = vpop.xlane.xlu0 %2260
    %v2262 = vmul.f32 %v2261, %v2255
    %v2263 = vadd.f32 %v2262, 1e-05
    %v2264 = vrsqrt.pop %v2263
    %v2265 = vmul.f32 %v2257, %v2264
    %v2267 = vlaneseq
    %v2268 = vshrl.u32 %v2267, 7
    %v2269 = vsub.s32 0, %v2268
    %v2270 = vrot.slane %v2012, %v2269
    %v2272 = vmul.f32 %v2265, %v2270
    %v2274 = vlaneseq
    %v2275 = vshrl.u32 %v2274, 7
    %v2276 = vsub.s32 0, %v2275
    %v2277 = vrot.slane %v2013, %v2276
    %v2279 = vadd.f32 %v2272, %v2277
    %v2280 = vld [vmem:[%s107] sm:$0x7]
    %v2281 = vld [vmem:[%s109] sm:$0x3]
    %v2282 = vld [vmem:[#allocation24] sm:$0x1]
    %v2283 = vld [vmem:[%s113] sm:$0xff]
    %v2284 = vld [vmem:[%s113 + $0x8] sm:$0xff]
    %v2285 = vld [vmem:[#allocation26] sm:$0x1]
    %v2286 = vld [vmem:[%s117] sm:$0x7]
    %v2287 = vld [vmem:[%s119] sm:$0x3]
    %v2288 = vld [vmem:[#allocation27] sm:$0x1]
    %v2289 = vld [vmem:[#allocation29] sm:$0x1]
    %v2290 = vld [vmem:[#allocation30] sm:$0x1]
    %v2291 = vsel %vm752, %v1079, 0
    %vm2293 = vcmask 1041408
    %v2295 = vsel %vm2293, %v2281, 0
    %2297 = vmatprep.subr.mxu0 0.0
    %2298 = vmatpush1.msra.mxu0 %v2295
    %2299 = vmatprep.subr.mxu0 0.0
    %2300 = vmatpush1.msra.mxu0 0.0
    %2301 = vmatprep.subr.mxu0 0.0
    %2302 = vmatpush1.msra.mxu0 0.0
    %2303 = vmatprep.subr.mxu0 0.0
    %2304 = vmatpush1.msra.mxu0 0.0
    %2305 = vmatprep.subr.mxu0 0.0
    %2306 = vmatpush1.msra.mxu0 0.0
    %2307 = vmatprep.subr.mxu0 0.0
    %2308 = vmatpush1.msra.mxu0 0.0
    %2309 = vmatprep.subr.mxu0 0.0
    %2310 = vmatpush1.msra.mxu0 0.0
    %2311 = vmatprep.subr.mxu0 0.0
    %2312 = vmatpush1.msra.mxu0 0.0
    %2313 = vmatprep.subr.mxu0 0.0
    %2314 = vmatpush1.msra.mxu0 0.0
    %2315 = vmatprep.subr.mxu0 0.0
    %2316 = vmatpush1.msra.mxu0 0.0
    %2317 = vmatprep.subr.mxu0 0.0
    %2318 = vmatpush1.msra.mxu0 0.0
    %2319 = vmatprep.subr.mxu0 0.0
    %2320 = vmatpush1.msra.mxu0 0.0
    %2321 = vmatprep.subr.mxu0 0.0
    %2322 = vmatpush1.msra.mxu0 0.0
    %2323 = vmatprep.subr.mxu0 0.0
    %2324 = vmatpush1.msra.mxu0 0.0
    %2325 = vmatprep.subr.mxu0 0.0
    %2326 = vmatpush1.msra.mxu0 0.0
    %2327 = vmatprep.subr.mxu0 0.0
    %2328 = vmatpush1.msra.mxu0 0.0
    %2329 = vmatprep.subr.mxu0 0.0
    %2330 = vmatpush1.msra.mxu0 0.0
    %2331 = vmatprep.subr.mxu0 0.0
    %2332 = vmatpush1.msra.mxu0 0.0
    %2333 = vmatprep.subr.mxu0 0.0
    %2334 = vmatpush1.msra.mxu0 0.0
    %2335 = vmatprep.subr.mxu0 0.0
    %2336 = vmatpush1.msra.mxu0 0.0
    %2337 = vmatprep.subr.mxu0 0.0
    %2338 = vmatpush1.msra.mxu0 0.0
    %2339 = vmatprep.subr.mxu0 0.0
    %2340 = vmatpush1.msra.mxu0 0.0
    %2341 = vmatprep.subr.mxu0 0.0
    %2342 = vmatpush1.msra.mxu0 0.0
    %2343 = vmatprep.subr.mxu0 0.0
    %2344 = vmatpush1.msra.mxu0 0.0
    %2345 = vmatprep.subr.mxu0 0.0
    %2346 = vmatpush1.msra.mxu0 0.0
    %2347 = vmatprep.subr.mxu0 0.0
    %2348 = vmatpush1.msra.mxu0 0.0
    %2349 = vmatprep.subr.mxu0 0.0
    %2350 = vmatpush1.msra.mxu0 0.0
    %2351 = vmatprep.subr.mxu0 0.0
    %2352 = vmatpush1.msra.mxu0 0.0
    %2353 = vmatprep.subr.mxu0 0.0
    %2354 = vmatpush1.msra.mxu0 0.0
    %2355 = vmatprep.subr.mxu0 0.0
    %2356 = vmatpush1.msra.mxu0 0.0
    %2357 = vmatprep.subr.mxu0 0.0
    %2358 = vmatpush1.msra.mxu0 0.0
    %2359 = vmatprep.subr.mxu0 0.0
    %2360 = vmatpush1.msra.mxu0 0.0
    %2361 = vmatprep.mubr.f32.mxu0 0.0
    %2362 = vmatmul.mubr.f32.gmra.mrb[0].mxu0 %v2291
    %v2363 = vpop.f32.mrb[0].mxu0
    %v2364 = vadd.f32 0.0, %v2363
    %v2365 = vpop.f32.mrb[0].mxu0
    %2366 = vdwg.mxu0
    %v2368 = vsel %vm488, %v2279, 0
    %v2371 = vsel %vm495, %v2280, 0
    %2373 = vmatprep.subr.mxu0 0.0
    %2374 = vmatpush1.msra.mxu0 %v2371
    %2375 = vmatprep.subr.mxu0 0.0
    %2376 = vmatpush1.msra.mxu0 0.0
    %2377 = vmatprep.subr.mxu0 0.0
    %2378 = vmatpush1.msra.mxu0 0.0
    %2379 = vmatprep.subr.mxu0 0.0
    %2380 = vmatpush1.msra.mxu0 0.0
    %2381 = vmatprep.subr.mxu0 0.0
    %2382 = vmatpush1.msra.mxu0 0.0
    %2383 = vmatprep.subr.mxu0 0.0
    %2384 = vmatpush1.msra.mxu0 0.0
    %2385 = vmatprep.subr.mxu0 0.0
    %2386 = vmatpush1.msra.mxu0 0.0
    %2387 = vmatprep.subr.mxu0 0.0
    %2388 = vmatpush1.msra.mxu0 0.0
    %2389 = vmatprep.subr.mxu0 0.0
    %2390 = vmatpush1.msra.mxu0 0.0
    %2391 = vmatprep.subr.mxu0 0.0
    %2392 = vmatpush1.msra.mxu0 0.0
    %2393 = vmatprep.subr.mxu0 0.0
    %2394 = vmatpush1.msra.mxu0 0.0
    %2395 = vmatprep.subr.mxu0 0.0
    %2396 = vmatpush1.msra.mxu0 0.0
    %2397 = vmatprep.subr.mxu0 0.0
    %2398 = vmatpush1.msra.mxu0 0.0
    %2399 = vmatprep.subr.mxu0 0.0
    %2400 = vmatpush1.msra.mxu0 0.0
    %2401 = vmatprep.subr.mxu0 0.0
    %2402 = vmatpush1.msra.mxu0 0.0
    %2403 = vmatprep.subr.mxu0 0.0
    %2404 = vmatpush1.msra.mxu0 0.0
    %2405 = vmatprep.subr.mxu0 0.0
    %2406 = vmatpush1.msra.mxu0 0.0
    %2407 = vmatprep.subr.mxu0 0.0
    %2408 = vmatpush1.msra.mxu0 0.0
    %2409 = vmatprep.subr.mxu0 0.0
    %2410 = vmatpush1.msra.mxu0 0.0
    %2411 = vmatprep.subr.mxu0 0.0
    %2412 = vmatpush1.msra.mxu0 0.0
    %2413 = vmatprep.subr.mxu0 0.0
    %2414 = vmatpush1.msra.mxu0 0.0
    %2415 = vmatprep.subr.mxu0 0.0
    %2416 = vmatpush1.msra.mxu0 0.0
    %2417 = vmatprep.subr.mxu0 0.0
    %2418 = vmatpush1.msra.mxu0 0.0
    %2419 = vmatprep.subr.mxu0 0.0
    %2420 = vmatpush1.msra.mxu0 0.0
    %2421 = vmatprep.subr.mxu0 0.0
    %2422 = vmatpush1.msra.mxu0 0.0
    %2423 = vmatprep.subr.mxu0 0.0
    %2424 = vmatpush1.msra.mxu0 0.0
    %2425 = vmatprep.subr.mxu0 0.0
    %2426 = vmatpush1.msra.mxu0 0.0
    %2427 = vmatprep.subr.mxu0 0.0
    %2428 = vmatpush1.msra.mxu0 0.0
    %2429 = vmatprep.subr.mxu0 0.0
    %2430 = vmatpush1.msra.mxu0 0.0
    %2431 = vmatprep.subr.mxu0 0.0
    %2432 = vmatpush1.msra.mxu0 0.0
    %2433 = vmatprep.subr.mxu0 0.0
    %2434 = vmatpush1.msra.mxu0 0.0
    %2435 = vmatprep.subr.mxu0 0.0
    %2436 = vmatpush1.msra.mxu0 0.0
    %2437 = vmatprep.mubr.f32.mxu0 0.0
    %2438 = vmatmul.mubr.f32.gmra.mrb[0].mxu0 %v2368
    %v2439 = vpop.f32.mrb[0].mxu0
    %v2440 = vadd.f32 %v2364, %v2439
    %v2441 = vpop.f32.mrb[0].mxu0
    %2442 = vdwg.mxu0
    %v2444 = vlaneseq
    %v2445 = vshrl.u32 %v2444, 7
    %v2446 = vsub.s32 0, %v2445
    %v2447 = vrot.slane %v2282, %v2446
    %v2449 = vadd.f32 %v2440, %v2447
    %v2450 = vmax.f32 %v2449, 0.0
    %v2452 = vlaneseq
    %v2453 = vshrl.u32 %v2452, 7
    %v2454 = vsub.s32 0, %v2453
    %v2455 = vrot.slane %v2285, %v2454
    %vm2457 = vcmask 130048
    %v2459 = vsel %vm2457, %v2450, 0
    %2461 = vmatprep.subr.mxu0 0.0
    %2462 = vmatpush1.msra.mxu0 %v2283
    %2463 = vmatprep.subr.mxu0 0.0
    %2464 = vmatpush1.msra.mxu0 %v2284
    %2465 = vmatprep.subr.mxu0 0.0
    %2466 = vmatpush1.msra.mxu0 0.0
    %2467 = vmatprep.subr.mxu0 0.0
    %2468 = vmatpush1.msra.mxu0 0.0
    %2469 = vmatprep.subr.mxu0 0.0
    %2470 = vmatpush1.msra.mxu0 0.0
    %2471 = vmatprep.subr.mxu0 0.0
    %2472 = vmatpush1.msra.mxu0 0.0
    %2473 = vmatprep.subr.mxu0 0.0
    %2474 = vmatpush1.msra.mxu0 0.0
    %2475 = vmatprep.subr.mxu0 0.0
    %2476 = vmatpush1.msra.mxu0 0.0
    %2477 = vmatprep.subr.mxu0 0.0
    %2478 = vmatpush1.msra.mxu0 0.0
    %2479 = vmatprep.subr.mxu0 0.0
    %2480 = vmatpush1.msra.mxu0 0.0
    %2481 = vmatprep.subr.mxu0 0.0
    %2482 = vmatpush1.msra.mxu0 0.0
    %2483 = vmatprep.subr.mxu0 0.0
    %2484 = vmatpush1.msra.mxu0 0.0
    %2485 = vmatprep.subr.mxu0 0.0
    %2486 = vmatpush1.msra.mxu0 0.0
    %2487 = vmatprep.subr.mxu0 0.0
    %2488 = vmatpush1.msra.mxu0 0.0
    %2489 = vmatprep.subr.mxu0 0.0
    %2490 = vmatpush1.msra.mxu0 0.0
    %2491 = vmatprep.subr.mxu0 0.0
    %2492 = vmatpush1.msra.mxu0 0.0
    %2493 = vmatprep.subr.mxu0 0.0
    %2494 = vmatpush1.msra.mxu0 0.0
    %2495 = vmatprep.subr.mxu0 0.0
    %2496 = vmatpush1.msra.mxu0 0.0
    %2497 = vmatprep.subr.mxu0 0.0
    %2498 = vmatpush1.msra.mxu0 0.0
    %2499 = vmatprep.subr.mxu0 0.0
    %2500 = vmatpush1.msra.mxu0 0.0
    %2501 = vmatprep.subr.mxu0 0.0
    %2502 = vmatpush1.msra.mxu0 0.0
    %2503 = vmatprep.subr.mxu0 0.0
    %2504 = vmatpush1.msra.mxu0 0.0
    %2505 = vmatprep.subr.mxu0 0.0
    %2506 = vmatpush1.msra.mxu0 0.0
    %2507 = vmatprep.subr.mxu0 0.0
    %2508 = vmatpush1.msra.mxu0 0.0
    %2509 = vmatprep.subr.mxu0 0.0
    %2510 = vmatpush1.msra.mxu0 0.0
    %2511 = vmatprep.subr.mxu0 0.0
    %2512 = vmatpush1.msra.mxu0 0.0
    %2513 = vmatprep.subr.mxu0 0.0
    %2514 = vmatpush1.msra.mxu0 0.0
    %2515 = vmatprep.subr.mxu0 0.0
    %2516 = vmatpush1.msra.mxu0 0.0
    %2517 = vmatprep.subr.mxu0 0.0
    %2518 = vmatpush1.msra.mxu0 0.0
    %2519 = vmatprep.subr.mxu0 0.0
    %2520 = vmatpush1.msra.mxu0 0.0
    %2521 = vmatprep.subr.mxu0 0.0
    %2522 = vmatpush1.msra.mxu0 0.0
    %2523 = vmatprep.subr.mxu0 0.0
    %2524 = vmatpush1.msra.mxu0 0.0
    %2525 = vmatprep.mubr.f32.mxu0 0.0
    %2526 = vmatmul.mubr.f32.gmra.mrb[0].mxu0 %v2459
    %v2527 = vpop.f32.mrb[0].mxu0
    %v2528 = vadd.f32 %v2455, %v2527
    %v2529 = vpop.f32.mrb[0].mxu0
    %2530 = vdwg.mxu0
    %v2532 = vsel %vm495, %v2286, 0
    %2534 = vmatprep.subr.mxu0 0.0
    %2535 = vmatpush1.msra.mxu0 %v2532
    %2536 = vmatprep.subr.mxu0 0.0
    %2537 = vmatpush1.msra.mxu0 0.0
    %2538 = vmatprep.subr.mxu0 0.0
    %2539 = vmatpush1.msra.mxu0 0.0
    %2540 = vmatprep.subr.mxu0 0.0
    %2541 = vmatpush1.msra.mxu0 0.0
    %2542 = vmatprep.subr.mxu0 0.0
    %2543 = vmatpush1.msra.mxu0 0.0
    %2544 = vmatprep.subr.mxu0 0.0
    %2545 = vmatpush1.msra.mxu0 0.0
    %2546 = vmatprep.subr.mxu0 0.0
    %2547 = vmatpush1.msra.mxu0 0.0
    %2548 = vmatprep.subr.mxu0 0.0
    %2549 = vmatpush1.msra.mxu0 0.0
    %2550 = vmatprep.subr.mxu0 0.0
    %2551 = vmatpush1.msra.mxu0 0.0
    %2552 = vmatprep.subr.mxu0 0.0
    %2553 = vmatpush1.msra.mxu0 0.0
    %2554 = vmatprep.subr.mxu0 0.0
    %2555 = vmatpush1.msra.mxu0 0.0
    %2556 = vmatprep.subr.mxu0 0.0
    %2557 = vmatpush1.msra.mxu0 0.0
    %2558 = vmatprep.subr.mxu0 0.0
    %2559 = vmatpush1.msra.mxu0 0.0
    %2560 = vmatprep.subr.mxu0 0.0
    %2561 = vmatpush1.msra.mxu0 0.0
    %2562 = vmatprep.subr.mxu0 0.0
    %2563 = vmatpush1.msra.mxu0 0.0
    %2564 = vmatprep.subr.mxu0 0.0
    %2565 = vmatpush1.msra.mxu0 0.0
    %2566 = vmatprep.subr.mxu0 0.0
    %2567 = vmatpush1.msra.mxu0 0.0
    %2568 = vmatprep.subr.mxu0 0.0
    %2569 = vmatpush1.msra.mxu0 0.0
    %2570 = vmatprep.subr.mxu0 0.0
    %2571 = vmatpush1.msra.mxu0 0.0
    %2572 = vmatprep.subr.mxu0 0.0
    %2573 = vmatpush1.msra.mxu0 0.0
    %2574 = vmatprep.subr.mxu0 0.0
    %2575 = vmatpush1.msra.mxu0 0.0
    %2576 = vmatprep.subr.mxu0 0.0
    %2577 = vmatpush1.msra.mxu0 0.0
    %2578 = vmatprep.subr.mxu0 0.0
    %2579 = vmatpush1.msra.mxu0 0.0
    %2580 = vmatprep.subr.mxu0 0.0
    %2581 = vmatpush1.msra.mxu0 0.0
    %2582 = vmatprep.subr.mxu0 0.0
    %2583 = vmatpush1.msra.mxu0 0.0
    %2584 = vmatprep.subr.mxu0 0.0
    %2585 = vmatpush1.msra.mxu0 0.0
    %2586 = vmatprep.subr.mxu0 0.0
    %2587 = vmatpush1.msra.mxu0 0.0
    %2588 = vmatprep.subr.mxu0 0.0
    %2589 = vmatpush1.msra.mxu0 0.0
    %2590 = vmatprep.subr.mxu0 0.0
    %2591 = vmatpush1.msra.mxu0 0.0
    %2592 = vmatprep.subr.mxu0 0.0
    %2593 = vmatpush1.msra.mxu0 0.0
    %2594 = vmatprep.subr.mxu0 0.0
    %2595 = vmatpush1.msra.mxu0 0.0
    %2596 = vmatprep.subr.mxu0 0.0
    %2597 = vmatpush1.msra.mxu0 0.0
    %2598 = vmatprep.mubr.f32.mxu0 0.0
    %2599 = vmatmul.mubr.f32.gmra.mrb[0].mxu0 %v2368
    %v2600 = vpop.f32.mrb[0].mxu0
    %v2601 = vadd.f32 0.0, %v2600
    %v2602 = vpop.f32.mrb[0].mxu0
    %2603 = vdwg.mxu0
    %v2604 = vadd.f32 %v2528, %v2601
    %v2606 = vsel %vm2293, %v2287, 0
    %2608 = vmatprep.subr.mxu0 0.0
    %2609 = vmatpush1.msra.mxu0 %v2606
    %2610 = vmatprep.subr.mxu0 0.0
    %2611 = vmatpush1.msra.mxu0 0.0
    %2612 = vmatprep.subr.mxu0 0.0
    %2613 = vmatpush1.msra.mxu0 0.0
    %2614 = vmatprep.subr.mxu0 0.0
    %2615 = vmatpush1.msra.mxu0 0.0
    %2616 = vmatprep.subr.mxu0 0.0
    %2617 = vmatpush1.msra.mxu0 0.0
    %2618 = vmatprep.subr.mxu0 0.0
    %2619 = vmatpush1.msra.mxu0 0.0
    %2620 = vmatprep.subr.mxu0 0.0
    %2621 = vmatpush1.msra.mxu0 0.0
    %2622 = vmatprep.subr.mxu0 0.0
    %2623 = vmatpush1.msra.mxu0 0.0
    %2624 = vmatprep.subr.mxu0 0.0
    %2625 = vmatpush1.msra.mxu0 0.0
    %2626 = vmatprep.subr.mxu0 0.0
    %2627 = vmatpush1.msra.mxu0 0.0
    %2628 = vmatprep.subr.mxu0 0.0
    %2629 = vmatpush1.msra.mxu0 0.0
    %2630 = vmatprep.subr.mxu0 0.0
    %2631 = vmatpush1.msra.mxu0 0.0
    %2632 = vmatprep.subr.mxu0 0.0
    %2633 = vmatpush1.msra.mxu0 0.0
    %2634 = vmatprep.subr.mxu0 0.0
    %2635 = vmatpush1.msra.mxu0 0.0
    %2636 = vmatprep.subr.mxu0 0.0
    %2637 = vmatpush1.msra.mxu0 0.0
    %2638 = vmatprep.subr.mxu0 0.0
    %2639 = vmatpush1.msra.mxu0 0.0
    %2640 = vmatprep.subr.mxu0 0.0
    %2641 = vmatpush1.msra.mxu0 0.0
    %2642 = vmatprep.subr.mxu0 0.0
    %2643 = vmatpush1.msra.mxu0 0.0
    %2644 = vmatprep.subr.mxu0 0.0
    %2645 = vmatpush1.msra.mxu0 0.0
    %2646 = vmatprep.subr.mxu0 0.0
    %2647 = vmatpush1.msra.mxu0 0.0
    %2648 = vmatprep.subr.mxu0 0.0
    %2649 = vmatpush1.msra.mxu0 0.0
    %2650 = vmatprep.subr.mxu0 0.0
    %2651 = vmatpush1.msra.mxu0 0.0
    %2652 = vmatprep.subr.mxu0 0.0
    %2653 = vmatpush1.msra.mxu0 0.0
    %2654 = vmatprep.subr.mxu0 0.0
    %2655 = vmatpush1.msra.mxu0 0.0
    %2656 = vmatprep.subr.mxu0 0.0
    %2657 = vmatpush1.msra.mxu0 0.0
    %2658 = vmatprep.subr.mxu0 0.0
    %2659 = vmatpush1.msra.mxu0 0.0
    %2660 = vmatprep.subr.mxu0 0.0
    %2661 = vmatpush1.msra.mxu0 0.0
    %2662 = vmatprep.subr.mxu0 0.0
    %2663 = vmatpush1.msra.mxu0 0.0
    %2664 = vmatprep.subr.mxu0 0.0
    %2665 = vmatpush1.msra.mxu0 0.0
    %2666 = vmatprep.subr.mxu0 0.0
    %2667 = vmatpush1.msra.mxu0 0.0
    %2668 = vmatprep.subr.mxu0 0.0
    %2669 = vmatpush1.msra.mxu0 0.0
    %2670 = vmatprep.subr.mxu0 0.0
    %2671 = vmatpush1.msra.mxu0 0.0
    %2672 = vmatprep.mubr.f32.mxu0 0.0
    %2673 = vmatmul.mubr.f32.gmra.mrb[0].mxu0 %v2291
    %v2674 = vpop.f32.mrb[0].mxu0
    %v2675 = vadd.f32 0.0, %v2674
    %v2676 = vpop.f32.mrb[0].mxu0
    %2677 = vdwg.mxu0
    %v2678 = vadd.f32 %v2604, %v2675
    %v2680 = vlaneseq
    %v2681 = vshrl.u32 %v2680, 7
    %v2682 = vsub.s32 0, %v2681
    %v2683 = vrot.slane %v2288, %v2682
    %v2685 = vadd.f32 %v2678, %v2683
    %vm2686 = vcmask 25600
    %v2687 = vsel %vm2686, %v2685, 0.0
    %2688 = vadd.xlane.f32.xlu0 %v2687
    %v2689 = vpop.xlane.xlu0 %2688
    %v2690 = vrcp.pop 4.0
    %v2691 = vmul.f32 %v2689, %v2690
    %v2692 = vsub.f32 %v2685, %v2691
    %v2693 = vmul.f32 %v2692, %v2692
    %v2694 = vsel %vm2686, %v2693, 0.0
    %2695 = vadd.xlane.f32.xlu0 %v2694
    %v2696 = vpop.xlane.xlu0 %2695
    %v2697 = vmul.f32 %v2696, %v2690
    %v2698 = vadd.f32 %v2697, 1e-05
    %v2699 = vrsqrt.pop %v2698
    %v2700 = vmul.f32 %v2692, %v2699
    %v2702 = vlaneseq
    %v2703 = vshrl.u32 %v2702, 7
    %v2704 = vsub.s32 0, %v2703
    %v2705 = vrot.slane %v2289, %v2704
    %v2707 = vmul.f32 %v2700, %v2705
    %v2709 = vlaneseq
    %v2710 = vshrl.u32 %v2709, 7
    %v2711 = vsub.s32 0, %v2710
    %v2712 = vrot.slane %v2290, %v2711
    %v2714 = vadd.f32 %v2707, %v2712
    %s2715 = sld [smem:[#allocation3]]
    %v2716 = vstv %s2715
    %v2717 = vmul.f32 %v468, %v2716
    %s2718 = sld [smem:[#allocation3 + $0x80]]
    %v2719 = vstv %s2718
    %v2720 = vmul.f32 %v468, %v2719
    %2722 = vrot.lane.b32.xlu0 %v2720, 124
    %v2723 = vpop.permute.xlu0 %2722
    %v2725 = vadd.f32 %v2717, %v2723
    %s2726 = sld [smem:[#allocation3 + $0x100]]
    %v2727 = vstv %s2726
    %v2728 = vmul.f32 %v468, %v2727
    %2730 = vrot.lane.b32.xlu0 %v2728, 120
    %v2731 = vpop.permute.xlu0 %2730
    %v2733 = vadd.f32 %v2725, %v2731
    %s2734 = sld [smem:[#allocation3 + $0x180]]
    %v2735 = vstv %s2734
    %v2736 = vmul.f32 %v468, %v2735
    %2738 = vrot.lane.b32.xlu0 %v2736, 116
    %v2739 = vpop.permute.xlu0 %2738
    %v2741 = vadd.f32 %v2733, %v2739
    %s2742 = sld [smem:[#allocation3 + $0x200]]
    %v2743 = vstv %s2742
    %v2744 = vmul.f32 %v468, %v2743
    %2746 = vrot.lane.b32.xlu0 %v2744, 112
    %v2747 = vpop.permute.xlu0 %2746
    %v2749 = vadd.f32 %v2741, %v2747
    %s2750 = sld [smem:[#allocation3 + $0x280]]
    %v2751 = vstv %s2750
    %v2752 = vmul.f32 %v468, %v2751
    %2754 = vrot.lane.b32.xlu0 %v2752, 108
    %v2755 = vpop.permute.xlu0 %2754
    %v2757 = vadd.f32 %v2749, %v2755
    %s2758 = sld [smem:[#allocation3 + $0x300]]
    %v2759 = vstv %s2758
    %v2760 = vmul.f32 %v468, %v2759
    %2762 = vrot.lane.b32.xlu0 %v2760, 104
    %v2763 = vpop.permute.xlu0 %2762
    %v2765 = vadd.f32 %v2757, %v2763
    %s2766 = sld [smem:[#allocation3 + $0x380]]
    %v2767 = vstv %s2766
    %v2768 = vmul.f32 %v468, %v2767
    %2770 = vrot.lane.b32.xlu0 %v2768, 100
    %v2771 = vpop.permute.xlu0 %2770
    %v2773 = vadd.f32 %v2765, %v2771
    %v2774 = vadd.f32 %v2714, %v2773
    %s2775 = sld [smem:[#allocation6]]
    %v2776 = vstv %s2775
    %v2777 = vadd.f32 %v2774, %v2776
    %2778 = vst.msk [vmem:[%s127] sm:$0x3] %vm2686, %v2777
    %v2779 = vrot.slane %v1079, 2
    %v2780 = vsel %vm752, %v2779, 0
    %2782 = vmatprep.subr.mxu0 0.0
    %2783 = vmatpush1.msra.mxu0 %v2295
    %2784 = vmatprep.subr.mxu0 0.0
    %2785 = vmatpush1.msra.mxu0 0.0
    %2786 = vmatprep.subr.mxu0 0.0
    %2787 = vmatpush1.msra.mxu0 0.0
    %2788 = vmatprep.subr.mxu0 0.0
    %2789 = vmatpush1.msra.mxu0 0.0
    %2790 = vmatprep.subr.mxu0 0.0
    %2791 = vmatpush1.msra.mxu0 0.0
    %2792 = vmatprep.subr.mxu0 0.0
    %2793 = vmatpush1.msra.mxu0 0.0
    %2794 = vmatprep.subr.mxu0 0.0
    %2795 = vmatpush1.msra.mxu0 0.0
    %2796 = vmatprep.subr.mxu0 0.0
    %2797 = vmatpush1.msra.mxu0 0.0
    %2798 = vmatprep.subr.mxu0 0.0
    %2799 = vmatpush1.msra.mxu0 0.0
    %2800 = vmatprep.subr.mxu0 0.0
    %2801 = vmatpush1.msra.mxu0 0.0
    %2802 = vmatprep.subr.mxu0 0.0
    %2803 = vmatpush1.msra.mxu0 0.0
    %2804 = vmatprep.subr.mxu0 0.0
    %2805 = vmatpush1.msra.mxu0 0.0
    %2806 = vmatprep.subr.mxu0 0.0
    %2807 = vmatpush1.msra.mxu0 0.0
    %2808 = vmatprep.subr.mxu0 0.0
    %2809 = vmatpush1.msra.mxu0 0.0
    %2810 = vmatprep.subr.mxu0 0.0
    %2811 = vmatpush1.msra.mxu0 0.0
    %2812 = vmatprep.subr.mxu0 0.0
    %2813 = vmatpush1.msra.mxu0 0.0
    %2814 = vmatprep.subr.mxu0 0.0
    %2815 = vmatpush1.msra.mxu0 0.0
    %2816 = vmatprep.subr.mxu0 0.0
    %2817 = vmatpush1.msra.mxu0 0.0
    %2818 = vmatprep.subr.mxu0 0.0
    %2819 = vmatpush1.msra.mxu0 0.0
    %2820 = vmatprep.subr.mxu0 0.0
    %2821 = vmatpush1.msra.mxu0 0.0
    %2822 = vmatprep.subr.mxu0 0.0
    %2823 = vmatpush1.msra.mxu0 0.0
    %2824 = vmatprep.subr.mxu0 0.0
    %2825 = vmatpush1.msra.mxu0 0.0
    %2826 = vmatprep.subr.mxu0 0.0
    %2827 = vmatpush1.msra.mxu0 0.0
    %2828 = vmatprep.subr.mxu0 0.0
    %2829 = vmatpush1.msra.mxu0 0.0
    %2830 = vmatprep.subr.mxu0 0.0
    %2831 = vmatpush1.msra.mxu0 0.0
    %2832 = vmatprep.subr.mxu0 0.0
    %2833 = vmatpush1.msra.mxu0 0.0
    %2834 = vmatprep.subr.mxu0 0.0
    %2835 = vmatpush1.msra.mxu0 0.0
    %2836 = vmatprep.subr.mxu0 0.0
    %2837 = vmatpush1.msra.mxu0 0.0
    %2838 = vmatprep.subr.mxu0 0.0
    %2839 = vmatpush1.msra.mxu0 0.0
    %2840 = vmatprep.subr.mxu0 0.0
    %2841 = vmatpush1.msra.mxu0 0.0
    %2842 = vmatprep.subr.mxu0 0.0
    %2843 = vmatpush1.msra.mxu0 0.0
    %2844 = vmatprep.subr.mxu0 0.0
    %2845 = vmatpush1.msra.mxu0 0.0
    %2846 = vmatprep.mubr.f32.mxu0 0.0
    %2847 = vmatmul.mubr.f32.gmra.mrb[0].mxu0 %v2780
    %v2848 = vpop.f32.mrb[0].mxu0
    %v2849 = vadd.f32 0.0, %v2848
    %v2850 = vpop.f32.mrb[0].mxu0
    %2851 = vdwg.mxu0
    %2852 = vrot.lane.b32.xlu0 %v2279, 125
    %v2853 = vpop.permute.xlu0 %2852
    %v2854 = vsel %vm488, %v2853, 0
    %2856 = vmatprep.subr.mxu0 0.0
    %2857 = vmatpush1.msra.mxu0 %v2371
    %2858 = vmatprep.subr.mxu0 0.0
    %2859 = vmatpush1.msra.mxu0 0.0
    %2860 = vmatprep.subr.mxu0 0.0
    %2861 = vmatpush1.msra.mxu0 0.0
    %2862 = vmatprep.subr.mxu0 0.0
    %2863 = vmatpush1.msra.mxu0 0.0
    %2864 = vmatprep.subr.mxu0 0.0
    %2865 = vmatpush1.msra.mxu0 0.0
    %2866 = vmatprep.subr.mxu0 0.0
    %2867 = vmatpush1.msra.mxu0 0.0
    %2868 = vmatprep.subr.mxu0 0.0
    %2869 = vmatpush1.msra.mxu0 0.0
    %2870 = vmatprep.subr.mxu0 0.0
    %2871 = vmatpush1.msra.mxu0 0.0
    %2872 = vmatprep.subr.mxu0 0.0
    %2873 = vmatpush1.msra.mxu0 0.0
    %2874 = vmatprep.subr.mxu0 0.0
    %2875 = vmatpush1.msra.mxu0 0.0
    %2876 = vmatprep.subr.mxu0 0.0
    %2877 = vmatpush1.msra.mxu0 0.0
    %2878 = vmatprep.subr.mxu0 0.0
    %2879 = vmatpush1.msra.mxu0 0.0
    %2880 = vmatprep.subr.mxu0 0.0
    %2881 = vmatpush1.msra.mxu0 0.0
    %2882 = vmatprep.subr.mxu0 0.0
    %2883 = vmatpush1.msra.mxu0 0.0
    %2884 = vmatprep.subr.mxu0 0.0
    %2885 = vmatpush1.msra.mxu0 0.0
    %2886 = vmatprep.subr.mxu0 0.0
    %2887 = vmatpush1.msra.mxu0 0.0
    %2888 = vmatprep.subr.mxu0 0.0
    %2889 = vmatpush1.msra.mxu0 0.0
    %2890 = vmatprep.subr.mxu0 0.0
    %2891 = vmatpush1.msra.mxu0 0.0
    %2892 = vmatprep.subr.mxu0 0.0
    %2893 = vmatpush1.msra.mxu0 0.0
    %2894 = vmatprep.subr.mxu0 0.0
    %2895 = vmatpush1.msra.mxu0 0.0
    %2896 = vmatprep.subr.mxu0 0.0
    %2897 = vmatpush1.msra.mxu0 0.0
    %2898 = vmatprep.subr.mxu0 0.0
    %2899 = vmatpush1.msra.mxu0 0.0
    %2900 = vmatprep.subr.mxu0 0.0
    %2901 = vmatpush1.msra.mxu0 0.0
    %2902 = vmatprep.subr.mxu0 0.0
    %2903 = vmatpush1.msra.mxu0 0.0
    %2904 = vmatprep.subr.mxu0 0.0
    %2905 = vmatpush1.msra.mxu0 0.0
    %2906 = vmatprep.subr.mxu0 0.0
    %2907 = vmatpush1.msra.mxu0 0.0
    %2908 = vmatprep.subr.mxu0 0.0
    %2909 = vmatpush1.msra.mxu0 0.0
    %2910 = vmatprep.subr.mxu0 0.0
    %2911 = vmatpush1.msra.mxu0 0.0
    %2912 = vmatprep.subr.mxu0 0.0
    %2913 = vmatpush1.msra.mxu0 0.0
    %2914 = vmatprep.subr.mxu0 0.0
    %2915 = vmatpush1.msra.mxu0 0.0
    %2916 = vmatprep.subr.mxu0 0.0
    %2917 = vmatpush1.msra.mxu0 0.0
    %2918 = vmatprep.subr.mxu0 0.0
    %2919 = vmatpush1.msra.mxu0 0.0
    %2920 = vmatprep.mubr.f32.mxu0 0.0
    %2921 = vmatmul.mubr.f32.gmra.mrb[0].mxu0 %v2854
    %v2922 = vpop.f32.mrb[0].mxu0
    %v2923 = vadd.f32 %v2849, %v2922
    %v2924 = vpop.f32.mrb[0].mxu0
    %2925 = vdwg.mxu0
    %v2926 = vadd.f32 %v2923, %v2447
    %v2927 = vmax.f32 %v2926, 0.0
    %v2929 = vsel %vm2457, %v2927, 0
    %2931 = vmatprep.subr.mxu0 0.0
    %2932 = vmatpush1.msra.mxu0 %v2283
    %2933 = vmatprep.subr.mxu0 0.0
    %2934 = vmatpush1.msra.mxu0 %v2284
    %2935 = vmatprep.subr.mxu0 0.0
    %2936 = vmatpush1.msra.mxu0 0.0
    %2937 = vmatprep.subr.mxu0 0.0
    %2938 = vmatpush1.msra.mxu0 0.0
    %2939 = vmatprep.subr.mxu0 0.0
    %2940 = vmatpush1.msra.mxu0 0.0
    %2941 = vmatprep.subr.mxu0 0.0
    %2942 = vmatpush1.msra.mxu0 0.0
    %2943 = vmatprep.subr.mxu0 0.0
    %2944 = vmatpush1.msra.mxu0 0.0
    %2945 = vmatprep.subr.mxu0 0.0
    %2946 = vmatpush1.msra.mxu0 0.0
    %2947 = vmatprep.subr.mxu0 0.0
    %2948 = vmatpush1.msra.mxu0 0.0
    %2949 = vmatprep.subr.mxu0 0.0
    %2950 = vmatpush1.msra.mxu0 0.0
    %2951 = vmatprep.subr.mxu0 0.0
    %2952 = vmatpush1.msra.mxu0 0.0
    %2953 = vmatprep.subr.mxu0 0.0
    %2954 = vmatpush1.msra.mxu0 0.0
    %2955 = vmatprep.subr.mxu0 0.0
    %2956 = vmatpush1.msra.mxu0 0.0
    %2957 = vmatprep.subr.mxu0 0.0
    %2958 = vmatpush1.msra.mxu0 0.0
    %2959 = vmatprep.subr.mxu0 0.0
    %2960 = vmatpush1.msra.mxu0 0.0
    %2961 = vmatprep.subr.mxu0 0.0
    %2962 = vmatpush1.msra.mxu0 0.0
    %2963 = vmatprep.subr.mxu0 0.0
    %2964 = vmatpush1.msra.mxu0 0.0
    %2965 = vmatprep.subr.mxu0 0.0
    %2966 = vmatpush1.msra.mxu0 0.0
    %2967 = vmatprep.subr.mxu0 0.0
    %2968 = vmatpush1.msra.mxu0 0.0
    %2969 = vmatprep.subr.mxu0 0.0
    %2970 = vmatpush1.msra.mxu0 0.0
    %2971 = vmatprep.subr.mxu0 0.0
    %2972 = vmatpush1.msra.mxu0 0.0
    %2973 = vmatprep.subr.mxu0 0.0
    %2974 = vmatpush1.msra.mxu0 0.0
    %2975 = vmatprep.subr.mxu0 0.0
    %2976 = vmatpush1.msra.mxu0 0.0
    %2977 = vmatprep.subr.mxu0 0.0
    %2978 = vmatpush1.msra.mxu0 0.0
    %2979 = vmatprep.subr.mxu0 0.0
    %2980 = vmatpush1.msra.mxu0 0.0
    %2981 = vmatprep.subr.mxu0 0.0
    %2982 = vmatpush1.msra.mxu0 0.0
    %2983 = vmatprep.subr.mxu0 0.0
    %2984 = vmatpush1.msra.mxu0 0.0
    %2985 = vmatprep.subr.mxu0 0.0
    %2986 = vmatpush1.msra.mxu0 0.0
    %2987 = vmatprep.subr.mxu0 0.0
    %2988 = vmatpush1.msra.mxu0 0.0
    %2989 = vmatprep.subr.mxu0 0.0
    %2990 = vmatpush1.msra.mxu0 0.0
    %2991 = vmatprep.subr.mxu0 0.0
    %2992 = vmatpush1.msra.mxu0 0.0
    %2993 = vmatprep.subr.mxu0 0.0
    %2994 = vmatpush1.msra.mxu0 0.0
    %2995 = vmatprep.mubr.f32.mxu0 0.0
    %2996 = vmatmul.mubr.f32.gmra.mrb[0].mxu0 %v2929
    %v2997 = vpop.f32.mrb[0].mxu0
    %v2998 = vadd.f32 %v2455, %v2997
    %v2999 = vpop.f32.mrb[0].mxu0
    %3000 = vdwg.mxu0
    %3001 = vmatprep.subr.mxu0 0.0
    %3002 = vmatpush1.msra.mxu0 %v2532
    %3003 = vmatprep.subr.mxu0 0.0
    %3004 = vmatpush1.msra.mxu0 0.0
    %3005 = vmatprep.subr.mxu0 0.0
    %3006 = vmatpush1.msra.mxu0 0.0
    %3007 = vmatprep.subr.mxu0 0.0
    %3008 = vmatpush1.msra.mxu0 0.0
    %3009 = vmatprep.subr.mxu0 0.0
    %3010 = vmatpush1.msra.mxu0 0.0
    %3011 = vmatprep.subr.mxu0 0.0
    %3012 = vmatpush1.msra.mxu0 0.0
    %3013 = vmatprep.subr.mxu0 0.0
    %3014 = vmatpush1.msra.mxu0 0.0
    %3015 = vmatprep.subr.mxu0 0.0
    %3016 = vmatpush1.msra.mxu0 0.0
    %3017 = vmatprep.subr.mxu0 0.0
    %3018 = vmatpush1.msra.mxu0 0.0
    %3019 = vmatprep.subr.mxu0 0.0
    %3020 = vmatpush1.msra.mxu0 0.0
    %3021 = vmatprep.subr.mxu0 0.0
    %3022 = vmatpush1.msra.mxu0 0.0
    %3023 = vmatprep.subr.mxu0 0.0
    %3024 = vmatpush1.msra.mxu0 0.0
    %3025 = vmatprep.subr.mxu0 0.0
    %3026 = vmatpush1.msra.mxu0 0.0
    %3027 = vmatprep.subr.mxu0 0.0
    %3028 = vmatpush1.msra.mxu0 0.0
    %3029 = vmatprep.subr.mxu0 0.0
    %3030 = vmatpush1.msra.mxu0 0.0
    %3031 = vmatprep.subr.mxu0 0.0
    %3032 = vmatpush1.msra.mxu0 0.0
    %3033 = vmatprep.subr.mxu0 0.0
    %3034 = vmatpush1.msra.mxu0 0.0
    %3035 = vmatprep.subr.mxu0 0.0
    %3036 = vmatpush1.msra.mxu0 0.0
    %3037 = vmatprep.subr.mxu0 0.0
    %3038 = vmatpush1.msra.mxu0 0.0
    %3039 = vmatprep.subr.mxu0 0.0
    %3040 = vmatpush1.msra.mxu0 0.0
    %3041 = vmatprep.subr.mxu0 0.0
    %3042 = vmatpush1.msra.mxu0 0.0
    %3043 = vmatprep.subr.mxu0 0.0
    %3044 = vmatpush1.msra.mxu0 0.0
    %3045 = vmatprep.subr.mxu0 0.0
    %3046 = vmatpush1.msra.mxu0 0.0
    %3047 = vmatprep.subr.mxu0 0.0
    %3048 = vmatpush1.msra.mxu0 0.0
    %3049 = vmatprep.subr.mxu0 0.0
    %3050 = vmatpush1.msra.mxu0 0.0
    %3051 = vmatprep.subr.mxu0 0.0
    %3052 = vmatpush1.msra.mxu0 0.0
    %3053 = vmatprep.subr.mxu0 0.0
    %3054 = vmatpush1.msra.mxu0 0.0
    %3055 = vmatprep.subr.mxu0 0.0
    %3056 = vmatpush1.msra.mxu0 0.0
    %3057 = vmatprep.subr.mxu0 0.0
    %3058 = vmatpush1.msra.mxu0 0.0
    %3059 = vmatprep.subr.mxu0 0.0
    %3060 = vmatpush1.msra.mxu0 0.0
    %3061 = vmatprep.subr.mxu0 0.0
    %3062 = vmatpush1.msra.mxu0 0.0
    %3063 = vmatprep.subr.mxu0 0.0
    %3064 = vmatpush1.msra.mxu0 0.0
    %3065 = vmatprep.mubr.f32.mxu0 0.0
    %3066 = vmatmul.mubr.f32.gmra.mrb[0].mxu0 %v2854
    %v3067 = vpop.f32.mrb[0].mxu0
    %v3068 = vadd.f32 0.0, %v3067
    %v3069 = vpop.f32.mrb[0].mxu0
    %3070 = vdwg.mxu0
    %v3071 = vadd.f32 %v2998, %v3068
    %3072 = vmatprep.subr.mxu0 0.0
    %3073 = vmatpush1.msra.mxu0 %v2606
    %3074 = vmatprep.subr.mxu0 0.0
    %3075 = vmatpush1.msra.mxu0 0.0
    %3076 = vmatprep.subr.mxu0 0.0
    %3077 = vmatpush1.msra.mxu0 0.0
    %3078 = vmatprep.subr.mxu0 0.0
    %3079 = vmatpush1.msra.mxu0 0.0
    %3080 = vmatprep.subr.mxu0 0.0
    %3081 = vmatpush1.msra.mxu0 0.0
    %3082 = vmatprep.subr.mxu0 0.0
    %3083 = vmatpush1.msra.mxu0 0.0
    %3084 = vmatprep.subr.mxu0 0.0
    %3085 = vmatpush1.msra.mxu0 0.0
    %3086 = vmatprep.subr.mxu0 0.0
    %3087 = vmatpush1.msra.mxu0 0.0
    %3088 = vmatprep.subr.mxu0 0.0
    %3089 = vmatpush1.msra.mxu0 0.0
    %3090 = vmatprep.subr.mxu0 0.0
    %3091 = vmatpush1.msra.mxu0 0.0
    %3092 = vmatprep.subr.mxu0 0.0
    %3093 = vmatpush1.msra.mxu0 0.0
    %3094 = vmatprep.subr.mxu0 0.0
    %3095 = vmatpush1.msra.mxu0 0.0
    %3096 = vmatprep.subr.mxu0 0.0
    %3097 = vmatpush1.msra.mxu0 0.0
    %3098 = vmatprep.subr.mxu0 0.0
    %3099 = vmatpush1.msra.mxu0 0.0
    %3100 = vmatprep.subr.mxu0 0.0
    %3101 = vmatpush1.msra.mxu0 0.0
    %3102 = vmatprep.subr.mxu0 0.0
    %3103 = vmatpush1.msra.mxu0 0.0
    %3104 = vmatprep.subr.mxu0 0.0
    %3105 = vmatpush1.msra.mxu0 0.0
    %3106 = vmatprep.subr.mxu0 0.0
    %3107 = vmatpush1.msra.mxu0 0.0
    %3108 = vmatprep.subr.mxu0 0.0
    %3109 = vmatpush1.msra.mxu0 0.0
    %3110 = vmatprep.subr.mxu0 0.0
    %3111 = vmatpush1.msra.mxu0 0.0
    %3112 = vmatprep.subr.mxu0 0.0
    %3113 = vmatpush1.msra.mxu0 0.0
    %3114 = vmatprep.subr.mxu0 0.0
    %3115 = vmatpush1.msra.mxu0 0.0
    %3116 = vmatprep.subr.mxu0 0.0
    %3117 = vmatpush1.msra.mxu0 0.0
    %3118 = vmatprep.subr.mxu0 0.0
    %3119 = vmatpush1.msra.mxu0 0.0
    %3120 = vmatprep.subr.mxu0 0.0
    %3121 = vmatpush1.msra.mxu0 0.0
    %3122 = vmatprep.subr.mxu0 0.0
    %3123 = vmatpush1.msra.mxu0 0.0
    %3124 = vmatprep.subr.mxu0 0.0
    %3125 = vmatpush1.msra.mxu0 0.0
    %3126 = vmatprep.subr.mxu0 0.0
    %3127 = vmatpush1.msra.mxu0 0.0
    %3128 = vmatprep.subr.mxu0 0.0
    %3129 = vmatpush1.msra.mxu0 0.0
    %3130 = vmatprep.subr.mxu0 0.0
    %3131 = vmatpush1.msra.mxu0 0.0
    %3132 = vmatprep.subr.mxu0 0.0
    %3133 = vmatpush1.msra.mxu0 0.0
    %3134 = vmatprep.subr.mxu0 0.0
    %3135 = vmatpush1.msra.mxu0 0.0
    %3136 = vmatprep.mubr.f32.mxu0 0.0
    %3137 = vmatmul.mubr.f32.gmra.mrb[0].mxu0 %v2780
    %v3138 = vpop.f32.mrb[0].mxu0
    %v3139 = vadd.f32 0.0, %v3138
    %v3140 = vpop.f32.mrb[0].mxu0
    %3141 = vdwg.mxu0
    %v3142 = vadd.f32 %v3071, %v3139
    %v3143 = vadd.f32 %v3142, %v2683
    %v3144 = vsel %vm2686, %v3143, 0.0
    %3145 = vadd.xlane.f32.xlu0 %v3144
    %v3146 = vpop.xlane.xlu0 %3145
    %v3147 = vmul.f32 %v3146, %v2690
    %v3148 = vsub.f32 %v3143, %v3147
    %v3149 = vmul.f32 %v3148, %v3148
    %v3150 = vsel %vm2686, %v3149, 0.0
    %3151 = vadd.xlane.f32.xlu0 %v3150
    %v3152 = vpop.xlane.xlu0 %3151
    %v3153 = vmul.f32 %v3152, %v2690
    %v3154 = vadd.f32 %v3153, 1e-05
    %v3155 = vrsqrt.pop %v3154
    %v3156 = vmul.f32 %v3148, %v3155
    %v3157 = vmul.f32 %v3156, %v2705
    %v3158 = vadd.f32 %v3157, %v2712
    %s3159 = sld [smem:[#allocation3 + $0x1]]
    %v3160 = vstv %s3159
    %v3161 = vmul.f32 %v468, %v3160
    %s3162 = sld [smem:[#allocation3 + $0x81]]
    %v3163 = vstv %s3162
    %v3164 = vmul.f32 %v468, %v3163
    %3166 = vrot.lane.b32.xlu0 %v3164, 124
    %v3167 = vpop.permute.xlu0 %3166
    %v3169 = vadd.f32 %v3161, %v3167
    %s3170 = sld [smem:[#allocation3 + $0x101]]
    %v3171 = vstv %s3170
    %v3172 = vmul.f32 %v468, %v3171
    %3174 = vrot.lane.b32.xlu0 %v3172, 120
    %v3175 = vpop.permute.xlu0 %3174
    %v3177 = vadd.f32 %v3169, %v3175
    %s3178 = sld [smem:[#allocation3 + $0x181]]
    %v3179 = vstv %s3178
    %v3180 = vmul.f32 %v468, %v3179
    %3182 = vrot.lane.b32.xlu0 %v3180, 116
    %v3183 = vpop.permute.xlu0 %3182
    %v3185 = vadd.f32 %v3177, %v3183
    %s3186 = sld [smem:[#allocation3 + $0x201]]
    %v3187 = vstv %s3186
    %v3188 = vmul.f32 %v468, %v3187
    %3190 = vrot.lane.b32.xlu0 %v3188, 112
    %v3191 = vpop.permute.xlu0 %3190
    %v3193 = vadd.f32 %v3185, %v3191
    %s3194 = sld [smem:[#allocation3 + $0x281]]
    %v3195 = vstv %s3194
    %v3196 = vmul.f32 %v468, %v3195
    %3198 = vrot.lane.b32.xlu0 %v3196, 108
    %v3199 = vpop.permute.xlu0 %3198
    %v3201 = vadd.f32 %v3193, %v3199
    %s3202 = sld [smem:[#allocation3 + $0x301]]
    %v3203 = vstv %s3202
    %v3204 = vmul.f32 %v468, %v3203
    %3206 = vrot.lane.b32.xlu0 %v3204, 104
    %v3207 = vpop.permute.xlu0 %3206
    %v3209 = vadd.f32 %v3201, %v3207
    %s3210 = sld [smem:[#allocation3 + $0x381]]
    %v3211 = vstv %s3210
    %v3212 = vmul.f32 %v468, %v3211
    %3214 = vrot.lane.b32.xlu0 %v3212, 100
    %v3215 = vpop.permute.xlu0 %3214
    %v3217 = vadd.f32 %v3209, %v3215
    %v3218 = vadd.f32 %v3158, %v3217
    %s3219 = sld [smem:[#allocation6 + $0x1]]
    %v3220 = vstv %s3219
    %v3221 = vadd.f32 %v3218, %v3220
    %s3222 = scalar_lea.vmem %s127, 2
    %3223 = vst.msk [vmem:[%s3222] sm:$0x3] %vm2686, %v3221
    %v3224 = vrot.slane %v1079, 4
    %v3225 = vsel %vm752, %v3224, 0
    %3227 = vmatprep.subr.mxu0 0.0
    %3228 = vmatpush1.msra.mxu0 %v2295
    %3229 = vmatprep.subr.mxu0 0.0
    %3230 = vmatpush1.msra.mxu0 0.0
    %3231 = vmatprep.subr.mxu0 0.0
    %3232 = vmatpush1.msra.mxu0 0.0
    %3233 = vmatprep.subr.mxu0 0.0
    %3234 = vmatpush1.msra.mxu0 0.0
    %3235 = vmatprep.subr.mxu0 0.0
    %3236 = vmatpush1.msra.mxu0 0.0
    %3237 = vmatprep.subr.mxu0 0.0
    %3238 = vmatpush1.msra.mxu0 0.0
    %3239 = vmatprep.subr.mxu0 0.0
    %3240 = vmatpush1.msra.mxu0 0.0
    %3241 = vmatprep.subr.mxu0 0.0
    %3242 = vmatpush1.msra.mxu0 0.0
    %3243 = vmatprep.subr.mxu0 0.0
    %3244 = vmatpush1.msra.mxu0 0.0
    %3245 = vmatprep.subr.mxu0 0.0
    %3246 = vmatpush1.msra.mxu0 0.0
    %3247 = vmatprep.subr.mxu0 0.0
    %3248 = vmatpush1.msra.mxu0 0.0
    %3249 = vmatprep.subr.mxu0 0.0
    %3250 = vmatpush1.msra.mxu0 0.0
    %3251 = vmatprep.subr.mxu0 0.0
    %3252 = vmatpush1.msra.mxu0 0.0
    %3253 = vmatprep.subr.mxu0 0.0
    %3254 = vmatpush1.msra.mxu0 0.0
    %3255 = vmatprep.subr.mxu0 0.0
    %3256 = vmatpush1.msra.mxu0 0.0
    %3257 = vmatprep.subr.mxu0 0.0
    %3258 = vmatpush1.msra.mxu0 0.0
    %3259 = vmatprep.subr.mxu0 0.0
    %3260 = vmatpush1.msra.mxu0 0.0
    %3261 = vmatprep.subr.mxu0 0.0
    %3262 = vmatpush1.msra.mxu0 0.0
    %3263 = vmatprep.subr.mxu0 0.0
    %3264 = vmatpush1.msra.mxu0 0.0
    %3265 = vmatprep.subr.mxu0 0.0
    %3266 = vmatpush1.msra.mxu0 0.0
    %3267 = vmatprep.subr.mxu0 0.0
    %3268 = vmatpush1.msra.mxu0 0.0
    %3269 = vmatprep.subr.mxu0 0.0
    %3270 = vmatpush1.msra.mxu0 0.0
    %3271 = vmatprep.subr.mxu0 0.0
    %3272 = vmatpush1.msra.mxu0 0.0
    %3273 = vmatprep.subr.mxu0 0.0
    %3274 = vmatpush1.msra.mxu0 0.0
    %3275 = vmatprep.subr.mxu0 0.0
    %3276 = vmatpush1.msra.mxu0 0.0
    %3277 = vmatprep.subr.mxu0 0.0
    %3278 = vmatpush1.msra.mxu0 0.0
    %3279 = vmatprep.subr.mxu0 0.0
    %3280 = vmatpush1.msra.mxu0 0.0
    %3281 = vmatprep.subr.mxu0 0.0
    %3282 = vmatpush1.msra.mxu0 0.0
    %3283 = vmatprep.subr.mxu0 0.0
    %3284 = vmatpush1.msra.mxu0 0.0
    %3285 = vmatprep.subr.mxu0 0.0
    %3286 = vmatpush1.msra.mxu0 0.0
    %3287 = vmatprep.subr.mxu0 0.0
    %3288 = vmatpush1.msra.mxu0 0.0
    %3289 = vmatprep.subr.mxu0 0.0
    %3290 = vmatpush1.msra.mxu0 0.0
    %3291 = vmatprep.mubr.f32.mxu0 0.0
    %3292 = vmatmul.mubr.f32.gmra.mrb[0].mxu0 %v3225
    %v3293 = vpop.f32.mrb[0].mxu0
    %v3294 = vadd.f32 0.0, %v3293
    %v3295 = vpop.f32.mrb[0].mxu0
    %3296 = vdwg.mxu0
    %3297 = vrot.lane.b32.xlu0 %v2279, 122
    %v3298 = vpop.permute.xlu0 %3297
    %v3299 = vsel %vm488, %v3298, 0
    %3301 = vmatprep.subr.mxu0 0.0
    %3302 = vmatpush1.msra.mxu0 %v2371
    %3303 = vmatprep.subr.mxu0 0.0
    %3304 = vmatpush1.msra.mxu0 0.0
    %3305 = vmatprep.subr.mxu0 0.0
    %3306 = vmatpush1.msra.mxu0 0.0
    %3307 = vmatprep.subr.mxu0 0.0
    %3308 = vmatpush1.msra.mxu0 0.0
    %3309 = vmatprep.subr.mxu0 0.0
    %3310 = vmatpush1.msra.mxu0 0.0
    %3311 = vmatprep.subr.mxu0 0.0
    %3312 = vmatpush1.msra.mxu0 0.0
    %3313 = vmatprep.subr.mxu0 0.0
    %3314 = vmatpush1.msra.mxu0 0.0
    %3315 = vmatprep.subr.mxu0 0.0
    %3316 = vmatpush1.msra.mxu0 0.0
    %3317 = vmatprep.subr.mxu0 0.0
    %3318 = vmatpush1.msra.mxu0 0.0
    %3319 = vmatprep.subr.mxu0 0.0
    %3320 = vmatpush1.msra.mxu0 0.0
    %3321 = vmatprep.subr.mxu0 0.0
    %3322 = vmatpush1.msra.mxu0 0.0
    %3323 = vmatprep.subr.mxu0 0.0
    %3324 = vmatpush1.msra.mxu0 0.0
    %3325 = vmatprep.subr.mxu0 0.0
    %3326 = vmatpush1.msra.mxu0 0.0
    %3327 = vmatprep.subr.mxu0 0.0
    %3328 = vmatpush1.msra.mxu0 0.0
    %3329 = vmatprep.subr.mxu0 0.0
    %3330 = vmatpush1.msra.mxu0 0.0
    %3331 = vmatprep.subr.mxu0 0.0
    %3332 = vmatpush1.msra.mxu0 0.0
    %3333 = vmatprep.subr.mxu0 0.0
    %3334 = vmatpush1.msra.mxu0 0.0
    %3335 = vmatprep.subr.mxu0 0.0
    %3336 = vmatpush1.msra.mxu0 0.0
    %3337 = vmatprep.subr.mxu0 0.0
    %3338 = vmatpush1.msra.mxu0 0.0
    %3339 = vmatprep.subr.mxu0 0.0
    %3340 = vmatpush1.msra.mxu0 0.0
    %3341 = vmatprep.subr.mxu0 0.0
    %3342 = vmatpush1.msra.mxu0 0.0
    %3343 = vmatprep.subr.mxu0 0.0
    %3344 = vmatpush1.msra.mxu0 0.0
    %3345 = vmatprep.subr.mxu0 0.0
    %3346 = vmatpush1.msra.mxu0 0.0
    %3347 = vmatprep.subr.mxu0 0.0
    %3348 = vmatpush1.msra.mxu0 0.0
    %3349 = vmatprep.subr.mxu0 0.0
    %3350 = vmatpush1.msra.mxu0 0.0
    %3351 = vmatprep.subr.mxu0 0.0
    %3352 = vmatpush1.msra.mxu0 0.0
    %3353 = vmatprep.subr.mxu0 0.0
    %3354 = vmatpush1.msra.mxu0 0.0
    %3355 = vmatprep.subr.mxu0 0.0
    %3356 = vmatpush1.msra.mxu0 0.0
    %3357 = vmatprep.subr.mxu0 0.0
    %3358 = vmatpush1.msra.mxu0 0.0
    %3359 = vmatprep.subr.mxu0 0.0
    %3360 = vmatpush1.msra.mxu0 0.0
    %3361 = vmatprep.subr.mxu0 0.0
    %3362 = vmatpush1.msra.mxu0 0.0
    %3363 = vmatprep.subr.mxu0 0.0
    %3364 = vmatpush1.msra.mxu0 0.0
    %3365 = vmatprep.mubr.f32.mxu0 0.0
    %3366 = vmatmul.mubr.f32.gmra.mrb[0].mxu0 %v3299
    %v3367 = vpop.f32.mrb[0].mxu0
    %v3368 = vadd.f32 %v3294, %v3367
    %v3369 = vpop.f32.mrb[0].mxu0
    %3370 = vdwg.mxu0
    %v3371 = vadd.f32 %v3368, %v2447
    %v3372 = vmax.f32 %v3371, 0.0
    %v3374 = vsel %vm2457, %v3372, 0
    %3376 = vmatprep.subr.mxu0 0.0
    %3377 = vmatpush1.msra.mxu0 %v2283
    %3378 = vmatprep.subr.mxu0 0.0
    %3379 = vmatpush1.msra.mxu0 %v2284
    %3380 = vmatprep.subr.mxu0 0.0
    %3381 = vmatpush1.msra.mxu0 0.0
    %3382 = vmatprep.subr.mxu0 0.0
    %3383 = vmatpush1.msra.mxu0 0.0
    %3384 = vmatprep.subr.mxu0 0.0
    %3385 = vmatpush1.msra.mxu0 0.0
    %3386 = vmatprep.subr.mxu0 0.0
    %3387 = vmatpush1.msra.mxu0 0.0
    %3388 = vmatprep.subr.mxu0 0.0
    %3389 = vmatpush1.msra.mxu0 0.0
    %3390 = vmatprep.subr.mxu0 0.0
    %3391 = vmatpush1.msra.mxu0 0.0
    %3392 = vmatprep.subr.mxu0 0.0
    %3393 = vmatpush1.msra.mxu0 0.0
    %3394 = vmatprep.subr.mxu0 0.0
    %3395 = vmatpush1.msra.mxu0 0.0
    %3396 = vmatprep.subr.mxu0 0.0
    %3397 = vmatpush1.msra.mxu0 0.0
    %3398 = vmatprep.subr.mxu0 0.0
    %3399 = vmatpush1.msra.mxu0 0.0
    %3400 = vmatprep.subr.mxu0 0.0
    %3401 = vmatpush1.msra.mxu0 0.0
    %3402 = vmatprep.subr.mxu0 0.0
    %3403 = vmatpush1.msra.mxu0 0.0
    %3404 = vmatprep.subr.mxu0 0.0
    %3405 = vmatpush1.msra.mxu0 0.0
    %3406 = vmatprep.subr.mxu0 0.0
    %3407 = vmatpush1.msra.mxu0 0.0
    %3408 = vmatprep.subr.mxu0 0.0
    %3409 = vmatpush1.msra.mxu0 0.0
    %3410 = vmatprep.subr.mxu0 0.0
    %3411 = vmatpush1.msra.mxu0 0.0
    %3412 = vmatprep.subr.mxu0 0.0
    %3413 = vmatpush1.msra.mxu0 0.0
    %3414 = vmatprep.subr.mxu0 0.0
    %3415 = vmatpush1.msra.mxu0 0.0
    %3416 = vmatprep.subr.mxu0 0.0
    %3417 = vmatpush1.msra.mxu0 0.0
    %3418 = vmatprep.subr.mxu0 0.0
    %3419 = vmatpush1.msra.mxu0 0.0
    %3420 = vmatprep.subr.mxu0 0.0
    %3421 = vmatpush1.msra.mxu0 0.0
    %3422 = vmatprep.subr.mxu0 0.0
    %3423 = vmatpush1.msra.mxu0 0.0
    %3424 = vmatprep.subr.mxu0 0.0
    %3425 = vmatpush1.msra.mxu0 0.0
    %3426 = vmatprep.subr.mxu0 0.0
    %3427 = vmatpush1.msra.mxu0 0.0
    %3428 = vmatprep.subr.mxu0 0.0
    %3429 = vmatpush1.msra.mxu0 0.0
    %3430 = vmatprep.subr.mxu0 0.0
    %3431 = vmatpush1.msra.mxu0 0.0
    %3432 = vmatprep.subr.mxu0 0.0
    %3433 = vmatpush1.msra.mxu0 0.0
    %3434 = vmatprep.subr.mxu0 0.0
    %3435 = vmatpush1.msra.mxu0 0.0
    %3436 = vmatprep.subr.mxu0 0.0
    %3437 = vmatpush1.msra.mxu0 0.0
    %3438 = vmatprep.subr.mxu0 0.0
    %3439 = vmatpush1.msra.mxu0 0.0
    %3440 = vmatprep.mubr.f32.mxu0 0.0
    %3441 = vmatmul.mubr.f32.gmra.mrb[0].mxu0 %v3374
    %v3442 = vpop.f32.mrb[0].mxu0
    %v3443 = vadd.f32 %v2455, %v3442
    %v3444 = vpop.f32.mrb[0].mxu0
    %3445 = vdwg.mxu0
    %3446 = vmatprep.subr.mxu0 0.0
    %3447 = vmatpush1.msra.mxu0 %v2532
    %3448 = vmatprep.subr.mxu0 0.0
    %3449 = vmatpush1.msra.mxu0 0.0
    %3450 = vmatprep.subr.mxu0 0.0
    %3451 = vmatpush1.msra.mxu0 0.0
    %3452 = vmatprep.subr.mxu0 0.0
    %3453 = vmatpush1.msra.mxu0 0.0
    %3454 = vmatprep.subr.mxu0 0.0
    %3455 = vmatpush1.msra.mxu0 0.0
    %3456 = vmatprep.subr.mxu0 0.0
    %3457 = vmatpush1.msra.mxu0 0.0
    %3458 = vmatprep.subr.mxu0 0.0
    %3459 = vmatpush1.msra.mxu0 0.0
    %3460 = vmatprep.subr.mxu0 0.0
    %3461 = vmatpush1.msra.mxu0 0.0
    %3462 = vmatprep.subr.mxu0 0.0
    %3463 = vmatpush1.msra.mxu0 0.0
    %3464 = vmatprep.subr.mxu0 0.0
    %3465 = vmatpush1.msra.mxu0 0.0
    %3466 = vmatprep.subr.mxu0 0.0
    %3467 = vmatpush1.msra.mxu0 0.0
    %3468 = vmatprep.subr.mxu0 0.0
    %3469 = vmatpush1.msra.mxu0 0.0
    %3470 = vmatprep.subr.mxu0 0.0
    %3471 = vmatpush1.msra.mxu0 0.0
    %3472 = vmatprep.subr.mxu0 0.0
    %3473 = vmatpush1.msra.mxu0 0.0
    %3474 = vmatprep.subr.mxu0 0.0
    %3475 = vmatpush1.msra.mxu0 0.0
    %3476 = vmatprep.subr.mxu0 0.0
    %3477 = vmatpush1.msra.mxu0 0.0
    %3478 = vmatprep.subr.mxu0 0.0
    %3479 = vmatpush1.msra.mxu0 0.0
    %3480 = vmatprep.subr.mxu0 0.0
    %3481 = vmatpush1.msra.mxu0 0.0
    %3482 = vmatprep.subr.mxu0 0.0
    %3483 = vmatpush1.msra.mxu0 0.0
    %3484 = vmatprep.subr.mxu0 0.0
    %3485 = vmatpush1.msra.mxu0 0.0
    %3486 = vmatprep.subr.mxu0 0.0
    %3487 = vmatpush1.msra.mxu0 0.0
    %3488 = vmatprep.subr.mxu0 0.0
    %3489 = vmatpush1.msra.mxu0 0.0
    %3490 = vmatprep.subr.mxu0 0.0
    %3491 = vmatpush1.msra.mxu0 0.0
    %3492 = vmatprep.subr.mxu0 0.0
    %3493 = vmatpush1.msra.mxu0 0.0
    %3494 = vmatprep.subr.mxu0 0.0
    %3495 = vmatpush1.msra.mxu0 0.0
    %3496 = vmatprep.subr.mxu0 0.0
    %3497 = vmatpush1.msra.mxu0 0.0
    %3498 = vmatprep.subr.mxu0 0.0
    %3499 = vmatpush1.msra.mxu0 0.0
    %3500 = vmatprep.subr.mxu0 0.0
    %3501 = vmatpush1.msra.mxu0 0.0
    %3502 = vmatprep.subr.mxu0 0.0
    %3503 = vmatpush1.msra.mxu0 0.0
    %3504 = vmatprep.subr.mxu0 0.0
    %3505 = vmatpush1.msra.mxu0 0.0
    %3506 = vmatprep.subr.mxu0 0.0
    %3507 = vmatpush1.msra.mxu0 0.0
    %3508 = vmatprep.subr.mxu0 0.0
    %3509 = vmatpush1.msra.mxu0 0.0
    %3510 = vmatprep.mubr.f32.mxu0 0.0
    %3511 = vmatmul.mubr.f32.gmra.mrb[0].mxu0 %v3299
    %v3512 = vpop.f32.mrb[0].mxu0
    %v3513 = vadd.f32 0.0, %v3512
    %v3514 = vpop.f32.mrb[0].mxu0
    %3515 = vdwg.mxu0
    %v3516 = vadd.f32 %v3443, %v3513
    %3517 = vmatprep.subr.mxu0 0.0
    %3518 = vmatpush1.msra.mxu0 %v2606
    %3519 = vmatprep.subr.mxu0 0.0
    %3520 = vmatpush1.msra.mxu0 0.0
    %3521 = vmatprep.subr.mxu0 0.0
    %3522 = vmatpush1.msra.mxu0 0.0
    %3523 = vmatprep.subr.mxu0 0.0
    %3524 = vmatpush1.msra.mxu0 0.0
    %3525 = vmatprep.subr.mxu0 0.0
    %3526 = vmatpush1.msra.mxu0 0.0
    %3527 = vmatprep.subr.mxu0 0.0
    %3528 = vmatpush1.msra.mxu0 0.0
    %3529 = vmatprep.subr.mxu0 0.0
    %3530 = vmatpush1.msra.mxu0 0.0
    %3531 = vmatprep.subr.mxu0 0.0
    %3532 = vmatpush1.msra.mxu0 0.0
    %3533 = vmatprep.subr.mxu0 0.0
    %3534 = vmatpush1.msra.mxu0 0.0
    %3535 = vmatprep.subr.mxu0 0.0
    %3536 = vmatpush1.msra.mxu0 0.0
    %3537 = vmatprep.subr.mxu0 0.0
    %3538 = vmatpush1.msra.mxu0 0.0
    %3539 = vmatprep.subr.mxu0 0.0
    %3540 = vmatpush1.msra.mxu0 0.0
    %3541 = vmatprep.subr.mxu0 0.0
    %3542 = vmatpush1.msra.mxu0 0.0
    %3543 = vmatprep.subr.mxu0 0.0
    %3544 = vmatpush1.msra.mxu0 0.0
    %3545 = vmatprep.subr.mxu0 0.0
    %3546 = vmatpush1.msra.mxu0 0.0
    %3547 = vmatprep.subr.mxu0 0.0
    %3548 = vmatpush1.msra.mxu0 0.0
    %3549 = vmatprep.subr.mxu0 0.0
    %3550 = vmatpush1.msra.mxu0 0.0
    %3551 = vmatprep.subr.mxu0 0.0
    %3552 = vmatpush1.msra.mxu0 0.0
    %3553 = vmatprep.subr.mxu0 0.0
    %3554 = vmatpush1.msra.mxu0 0.0
    %3555 = vmatprep.subr.mxu0 0.0
    %3556 = vmatpush1.msra.mxu0 0.0
    %3557 = vmatprep.subr.mxu0 0.0
    %3558 = vmatpush1.msra.mxu0 0.0
    %3559 = vmatprep.subr.mxu0 0.0
    %3560 = vmatpush1.msra.mxu0 0.0
    %3561 = vmatprep.subr.mxu0 0.0
    %3562 = vmatpush1.msra.mxu0 0.0
    %3563 = vmatprep.subr.mxu0 0.0
    %3564 = vmatpush1.msra.mxu0 0.0
    %3565 = vmatprep.subr.mxu0 0.0
    %3566 = vmatpush1.msra.mxu0 0.0
    %3567 = vmatprep.subr.mxu0 0.0
    %3568 = vmatpush1.msra.mxu0 0.0
    %3569 = vmatprep.subr.mxu0 0.0
    %3570 = vmatpush1.msra.mxu0 0.0
    %3571 = vmatprep.subr.mxu0 0.0
    %3572 = vmatpush1.msra.mxu0 0.0
    %3573 = vmatprep.subr.mxu0 0.0
    %3574 = vmatpush1.msra.mxu0 0.0
    %3575 = vmatprep.subr.mxu0 0.0
    %3576 = vmatpush1.msra.mxu0 0.0
    %3577 = vmatprep.subr.mxu0 0.0
    %3578 = vmatpush1.msra.mxu0 0.0
    %3579 = vmatprep.subr.mxu0 0.0
    %3580 = vmatpush1.msra.mxu0 0.0
    %3581 = vmatprep.mubr.f32.mxu0 0.0
    %3582 = vmatmul.mubr.f32.gmra.mrb[0].mxu0 %v3225
    %v3583 = vpop.f32.mrb[0].mxu0
    %v3584 = vadd.f32 0.0, %v3583
    %v3585 = vpop.f32.mrb[0].mxu0
    %3586 = vdwg.mxu0
    %v3587 = vadd.f32 %v3516, %v3584
    %v3588 = vadd.f32 %v3587, %v2683
    %v3589 = vsel %vm2686, %v3588, 0.0
    %3590 = vadd.xlane.f32.xlu0 %v3589
    %v3591 = vpop.xlane.xlu0 %3590
    %v3592 = vmul.f32 %v3591, %v2690
    %v3593 = vsub.f32 %v3588, %v3592
    %v3594 = vmul.f32 %v3593, %v3593
    %v3595 = vsel %vm2686, %v3594, 0.0
    %3596 = vadd.xlane.f32.xlu0 %v3595
    %v3597 = vpop.xlane.xlu0 %3596
    %v3598 = vmul.f32 %v3597, %v2690
    %v3599 = vadd.f32 %v3598, 1e-05
    %v3600 = vrsqrt.pop %v3599
    %v3601 = vmul.f32 %v3593, %v3600
    %v3602 = vmul.f32 %v3601, %v2705
    %v3603 = vadd.f32 %v3602, %v2712
    %s3604 = sld [smem:[#allocation3 + $0x2]]
    %v3605 = vstv %s3604
    %v3606 = vmul.f32 %v468, %v3605
    %s3607 = sld [smem:[#allocation3 + $0x82]]
    %v3608 = vstv %s3607
    %v3609 = vmul.f32 %v468, %v3608
    %3611 = vrot.lane.b32.xlu0 %v3609, 124
    %v3612 = vpop.permute.xlu0 %3611
    %v3614 = vadd.f32 %v3606, %v3612
    %s3615 = sld [smem:[#allocation3 + $0x102]]
    %v3616 = vstv %s3615
    %v3617 = vmul.f32 %v468, %v3616
    %3619 = vrot.lane.b32.xlu0 %v3617, 120
    %v3620 = vpop.permute.xlu0 %3619
    %v3622 = vadd.f32 %v3614, %v3620
    %s3623 = sld [smem:[#allocation3 + $0x182]]
    %v3624 = vstv %s3623
    %v3625 = vmul.f32 %v468, %v3624
    %3627 = vrot.lane.b32.xlu0 %v3625, 116
    %v3628 = vpop.permute.xlu0 %3627
    %v3630 = vadd.f32 %v3622, %v3628
    %s3631 = sld [smem:[#allocation3 + $0x202]]
    %v3632 = vstv %s3631
    %v3633 = vmul.f32 %v468, %v3632
    %3635 = vrot.lane.b32.xlu0 %v3633, 112
    %v3636 = vpop.permute.xlu0 %3635
    %v3638 = vadd.f32 %v3630, %v3636
    %s3639 = sld [smem:[#allocation3 + $0x282]]
    %v3640 = vstv %s3639
    %v3641 = vmul.f32 %v468, %v3640
    %3643 = vrot.lane.b32.xlu0 %v3641, 108
    %v3644 = vpop.permute.xlu0 %3643
    %v3646 = vadd.f32 %v3638, %v3644
    %s3647 = sld [smem:[#allocation3 + $0x302]]
    %v3648 = vstv %s3647
    %v3649 = vmul.f32 %v468, %v3648
    %3651 = vrot.lane.b32.xlu0 %v3649, 104
    %v3652 = vpop.permute.xlu0 %3651
    %v3654 = vadd.f32 %v3646, %v3652
    %s3655 = sld [smem:[#allocation3 + $0x382]]
    %v3656 = vstv %s3655
    %v3657 = vmul.f32 %v468, %v3656
    %3659 = vrot.lane.b32.xlu0 %v3657, 100
    %v3660 = vpop.permute.xlu0 %3659
    %v3662 = vadd.f32 %v3654, %v3660
    %v3663 = vadd.f32 %v3603, %v3662
    %s3664 = sld [smem:[#allocation6 + $0x2]]
    %v3665 = vstv %s3664
    %v3666 = vadd.f32 %v3663, %v3665
    %s3667 = scalar_lea.vmem %s127, 4
    %3668 = vst.msk [vmem:[%s3667] sm:$0x3] %vm2686, %v3666
    %v3669 = vrot.slane %v1079, 6
    %v3670 = vsel %vm752, %v3669, 0
    %3672 = vmatprep.subr.mxu0 0.0
    %3673 = vmatpush1.msra.mxu0 %v2295
    %3674 = vmatprep.subr.mxu0 0.0
    %3675 = vmatpush1.msra.mxu0 0.0
    %3676 = vmatprep.subr.mxu0 0.0
    %3677 = vmatpush1.msra.mxu0 0.0
    %3678 = vmatprep.subr.mxu0 0.0
    %3679 = vmatpush1.msra.mxu0 0.0
    %3680 = vmatprep.subr.mxu0 0.0
    %3681 = vmatpush1.msra.mxu0 0.0
    %3682 = vmatprep.subr.mxu0 0.0
    %3683 = vmatpush1.msra.mxu0 0.0
    %3684 = vmatprep.subr.mxu0 0.0
    %3685 = vmatpush1.msra.mxu0 0.0
    %3686 = vmatprep.subr.mxu0 0.0
    %3687 = vmatpush1.msra.mxu0 0.0
    %3688 = vmatprep.subr.mxu0 0.0
    %3689 = vmatpush1.msra.mxu0 0.0
    %3690 = vmatprep.subr.mxu0 0.0
    %3691 = vmatpush1.msra.mxu0 0.0
    %3692 = vmatprep.subr.mxu0 0.0
    %3693 = vmatpush1.msra.mxu0 0.0
    %3694 = vmatprep.subr.mxu0 0.0
    %3695 = vmatpush1.msra.mxu0 0.0
    %3696 = vmatprep.subr.mxu0 0.0
    %3697 = vmatpush1.msra.mxu0 0.0
    %3698 = vmatprep.subr.mxu0 0.0
    %3699 = vmatpush1.msra.mxu0 0.0
    %3700 = vmatprep.subr.mxu0 0.0
    %3701 = vmatpush1.msra.mxu0 0.0
    %3702 = vmatprep.subr.mxu0 0.0
    %3703 = vmatpush1.msra.mxu0 0.0
    %3704 = vmatprep.subr.mxu0 0.0
    %3705 = vmatpush1.msra.mxu0 0.0
    %3706 = vmatprep.subr.mxu0 0.0
    %3707 = vmatpush1.msra.mxu0 0.0
    %3708 = vmatprep.subr.mxu0 0.0
    %3709 = vmatpush1.msra.mxu0 0.0
    %3710 = vmatprep.subr.mxu0 0.0
    %3711 = vmatpush1.msra.mxu0 0.0
    %3712 = vmatprep.subr.mxu0 0.0
    %3713 = vmatpush1.msra.mxu0 0.0
    %3714 = vmatprep.subr.mxu0 0.0
    %3715 = vmatpush1.msra.mxu0 0.0
    %3716 = vmatprep.subr.mxu0 0.0
    %3717 = vmatpush1.msra.mxu0 0.0
    %3718 = vmatprep.subr.mxu0 0.0
    %3719 = vmatpush1.msra.mxu0 0.0
    %3720 = vmatprep.subr.mxu0 0.0
    %3721 = vmatpush1.msra.mxu0 0.0
    %3722 = vmatprep.subr.mxu0 0.0
    %3723 = vmatpush1.msra.mxu0 0.0
    %3724 = vmatprep.subr.mxu0 0.0
    %3725 = vmatpush1.msra.mxu0 0.0
    %3726 = vmatprep.subr.mxu0 0.0
    %3727 = vmatpush1.msra.mxu0 0.0
    %3728 = vmatprep.subr.mxu0 0.0
    %3729 = vmatpush1.msra.mxu0 0.0
    %3730 = vmatprep.subr.mxu0 0.0
    %3731 = vmatpush1.msra.mxu0 0.0
    %3732 = vmatprep.subr.mxu0 0.0
    %3733 = vmatpush1.msra.mxu0 0.0
    %3734 = vmatprep.subr.mxu0 0.0
    %3735 = vmatpush1.msra.mxu0 0.0
    %3736 = vmatprep.mubr.f32.mxu0 0.0
    %3737 = vmatmul.mubr.f32.gmra.mrb[0].mxu0 %v3670
    %v3738 = vpop.f32.mrb[0].mxu0
    %v3739 = vadd.f32 0.0, %v3738
    %v3740 = vpop.f32.mrb[0].mxu0
    %3741 = vdwg.mxu0
    %3742 = vrot.lane.b32.xlu0 %v2279, 119
    %v3743 = vpop.permute.xlu0 %3742
    %v3744 = vsel %vm488, %v3743, 0
    %3746 = vmatprep.subr.mxu0 0.0
    %3747 = vmatpush1.msra.mxu0 %v2371
    %3748 = vmatprep.subr.mxu0 0.0
    %3749 = vmatpush1.msra.mxu0 0.0
    %3750 = vmatprep.subr.mxu0 0.0
    %3751 = vmatpush1.msra.mxu0 0.0
    %3752 = vmatprep.subr.mxu0 0.0
    %3753 = vmatpush1.msra.mxu0 0.0
    %3754 = vmatprep.subr.mxu0 0.0
    %3755 = vmatpush1.msra.mxu0 0.0
    %3756 = vmatprep.subr.mxu0 0.0
    %3757 = vmatpush1.msra.mxu0 0.0
    %3758 = vmatprep.subr.mxu0 0.0
    %3759 = vmatpush1.msra.mxu0 0.0
    %3760 = vmatprep.subr.mxu0 0.0
    %3761 = vmatpush1.msra.mxu0 0.0
    %3762 = vmatprep.subr.mxu0 0.0
    %3763 = vmatpush1.msra.mxu0 0.0
    %3764 = vmatprep.subr.mxu0 0.0
    %3765 = vmatpush1.msra.mxu0 0.0
    %3766 = vmatprep.subr.mxu0 0.0
    %3767 = vmatpush1.msra.mxu0 0.0
    %3768 = vmatprep.subr.mxu0 0.0
    %3769 = vmatpush1.msra.mxu0 0.0
    %3770 = vmatprep.subr.mxu0 0.0
    %3771 = vmatpush1.msra.mxu0 0.0
    %3772 = vmatprep.subr.mxu0 0.0
    %3773 = vmatpush1.msra.mxu0 0.0
    %3774 = vmatprep.subr.mxu0 0.0
    %3775 = vmatpush1.msra.mxu0 0.0
    %3776 = vmatprep.subr.mxu0 0.0
    %3777 = vmatpush1.msra.mxu0 0.0
    %3778 = vmatprep.subr.mxu0 0.0
    %3779 = vmatpush1.msra.mxu0 0.0
    %3780 = vmatprep.subr.mxu0 0.0
    %3781 = vmatpush1.msra.mxu0 0.0
    %3782 = vmatprep.subr.mxu0 0.0
    %3783 = vmatpush1.msra.mxu0 0.0
    %3784 = vmatprep.subr.mxu0 0.0
    %3785 = vmatpush1.msra.mxu0 0.0
    %3786 = vmatprep.subr.mxu0 0.0
    %3787 = vmatpush1.msra.mxu0 0.0
    %3788 = vmatprep.subr.mxu0 0.0
    %3789 = vmatpush1.msra.mxu0 0.0
    %3790 = vmatprep.subr.mxu0 0.0
    %3791 = vmatpush1.msra.mxu0 0.0
    %3792 = vmatprep.subr.mxu0 0.0
    %3793 = vmatpush1.msra.mxu0 0.0
    %3794 = vmatprep.subr.mxu0 0.0
    %3795 = vmatpush1.msra.mxu0 0.0
    %3796 = vmatprep.subr.mxu0 0.0
    %3797 = vmatpush1.msra.mxu0 0.0
    %3798 = vmatprep.subr.mxu0 0.0
    %3799 = vmatpush1.msra.mxu0 0.0
    %3800 = vmatprep.subr.mxu0 0.0
    %3801 = vmatpush1.msra.mxu0 0.0
    %3802 = vmatprep.subr.mxu0 0.0
    %3803 = vmatpush1.msra.mxu0 0.0
    %3804 = vmatprep.subr.mxu0 0.0
    %3805 = vmatpush1.msra.mxu0 0.0
    %3806 = vmatprep.subr.mxu0 0.0
    %3807 = vmatpush1.msra.mxu0 0.0
    %3808 = vmatprep.subr.mxu0 0.0
    %3809 = vmatpush1.msra.mxu0 0.0
    %3810 = vmatprep.mubr.f32.mxu0 0.0
    %3811 = vmatmul.mubr.f32.gmra.mrb[0].mxu0 %v3744
    %v3812 = vpop.f32.mrb[0].mxu0
    %v3813 = vadd.f32 %v3739, %v3812
    %v3814 = vpop.f32.mrb[0].mxu0
    %3815 = vdwg.mxu0
    %v3816 = vadd.f32 %v3813, %v2447
    %v3817 = vmax.f32 %v3816, 0.0
    %v3819 = vsel %vm2457, %v3817, 0
    %3821 = vmatprep.subr.mxu0 0.0
    %3822 = vmatpush1.msra.mxu0 %v2283
    %3823 = vmatprep.subr.mxu0 0.0
    %3824 = vmatpush1.msra.mxu0 %v2284
    %3825 = vmatprep.subr.mxu0 0.0
    %3826 = vmatpush1.msra.mxu0 0.0
    %3827 = vmatprep.subr.mxu0 0.0
    %3828 = vmatpush1.msra.mxu0 0.0
    %3829 = vmatprep.subr.mxu0 0.0
    %3830 = vmatpush1.msra.mxu0 0.0
    %3831 = vmatprep.subr.mxu0 0.0
    %3832 = vmatpush1.msra.mxu0 0.0
    %3833 = vmatprep.subr.mxu0 0.0
    %3834 = vmatpush1.msra.mxu0 0.0
    %3835 = vmatprep.subr.mxu0 0.0
    %3836 = vmatpush1.msra.mxu0 0.0
    %3837 = vmatprep.subr.mxu0 0.0
    %3838 = vmatpush1.msra.mxu0 0.0
    %3839 = vmatprep.subr.mxu0 0.0
    %3840 = vmatpush1.msra.mxu0 0.0
    %3841 = vmatprep.subr.mxu0 0.0
    %3842 = vmatpush1.msra.mxu0 0.0
    %3843 = vmatprep.subr.mxu0 0.0
    %3844 = vmatpush1.msra.mxu0 0.0
    %3845 = vmatprep.subr.mxu0 0.0
    %3846 = vmatpush1.msra.mxu0 0.0
    %3847 = vmatprep.subr.mxu0 0.0
    %3848 = vmatpush1.msra.mxu0 0.0
    %3849 = vmatprep.subr.mxu0 0.0
    %3850 = vmatpush1.msra.mxu0 0.0
    %3851 = vmatprep.subr.mxu0 0.0
    %3852 = vmatpush1.msra.mxu0 0.0
    %3853 = vmatprep.subr.mxu0 0.0
    %3854 = vmatpush1.msra.mxu0 0.0
    %3855 = vmatprep.subr.mxu0 0.0
    %3856 = vmatpush1.msra.mxu0 0.0
    %3857 = vmatprep.subr.mxu0 0.0
    %3858 = vmatpush1.msra.mxu0 0.0
    %3859 = vmatprep.subr.mxu0 0.0
    %3860 = vmatpush1.msra.mxu0 0.0
    %3861 = vmatprep.subr.mxu0 0.0
    %3862 = vmatpush1.msra.mxu0 0.0
    %3863 = vmatprep.subr.mxu0 0.0
    %3864 = vmatpush1.msra.mxu0 0.0
    %3865 = vmatprep.subr.mxu0 0.0
    %3866 = vmatpush1.msra.mxu0 0.0
    %3867 = vmatprep.subr.mxu0 0.0
    %3868 = vmatpush1.msra.mxu0 0.0
    %3869 = vmatprep.subr.mxu0 0.0
    %3870 = vmatpush1.msra.mxu0 0.0
    %3871 = vmatprep.subr.mxu0 0.0
    %3872 = vmatpush1.msra.mxu0 0.0
    %3873 = vmatprep.subr.mxu0 0.0
    %3874 = vmatpush1.msra.mxu0 0.0
    %3875 = vmatprep.subr.mxu0 0.0
    %3876 = vmatpush1.msra.mxu0 0.0
    %3877 = vmatprep.subr.mxu0 0.0
    %3878 = vmatpush1.msra.mxu0 0.0
    %3879 = vmatprep.subr.mxu0 0.0
    %3880 = vmatpush1.msra.mxu0 0.0
    %3881 = vmatprep.subr.mxu0 0.0
    %3882 = vmatpush1.msra.mxu0 0.0
    %3883 = vmatprep.subr.mxu0 0.0
    %3884 = vmatpush1.msra.mxu0 0.0
    %3885 = vmatprep.mubr.f32.mxu0 0.0
    %3886 = vmatmul.mubr.f32.gmra.mrb[0].mxu0 %v3819
    %v3887 = vpop.f32.mrb[0].mxu0
    %v3888 = vadd.f32 %v2455, %v3887
    %v3889 = vpop.f32.mrb[0].mxu0
    %3890 = vdwg.mxu0
    %3891 = vmatprep.subr.mxu0 0.0
    %3892 = vmatpush1.msra.mxu0 %v2532
    %3893 = vmatprep.subr.mxu0 0.0
    %3894 = vmatpush1.msra.mxu0 0.0
    %3895 = vmatprep.subr.mxu0 0.0
    %3896 = vmatpush1.msra.mxu0 0.0
    %3897 = vmatprep.subr.mxu0 0.0
    %3898 = vmatpush1.msra.mxu0 0.0
    %3899 = vmatprep.subr.mxu0 0.0
    %3900 = vmatpush1.msra.mxu0 0.0
    %3901 = vmatprep.subr.mxu0 0.0
    %3902 = vmatpush1.msra.mxu0 0.0
    %3903 = vmatprep.subr.mxu0 0.0
    %3904 = vmatpush1.msra.mxu0 0.0
    %3905 = vmatprep.subr.mxu0 0.0
    %3906 = vmatpush1.msra.mxu0 0.0
    %3907 = vmatprep.subr.mxu0 0.0
    %3908 = vmatpush1.msra.mxu0 0.0
    %3909 = vmatprep.subr.mxu0 0.0
    %3910 = vmatpush1.msra.mxu0 0.0
    %3911 = vmatprep.subr.mxu0 0.0
    %3912 = vmatpush1.msra.mxu0 0.0
    %3913 = vmatprep.subr.mxu0 0.0
    %3914 = vmatpush1.msra.mxu0 0.0
    %3915 = vmatprep.subr.mxu0 0.0
    %3916 = vmatpush1.msra.mxu0 0.0
    %3917 = vmatprep.subr.mxu0 0.0
    %3918 = vmatpush1.msra.mxu0 0.0
    %3919 = vmatprep.subr.mxu0 0.0
    %3920 = vmatpush1.msra.mxu0 0.0
    %3921 = vmatprep.subr.mxu0 0.0
    %3922 = vmatpush1.msra.mxu0 0.0
    %3923 = vmatprep.subr.mxu0 0.0
    %3924 = vmatpush1.msra.mxu0 0.0
    %3925 = vmatprep.subr.mxu0 0.0
    %3926 = vmatpush1.msra.mxu0 0.0
    %3927 = vmatprep.subr.mxu0 0.0
    %3928 = vmatpush1.msra.mxu0 0.0
    %3929 = vmatprep.subr.mxu0 0.0
    %3930 = vmatpush1.msra.mxu0 0.0
    %3931 = vmatprep.subr.mxu0 0.0
    %3932 = vmatpush1.msra.mxu0 0.0
    %3933 = vmatprep.subr.mxu0 0.0
    %3934 = vmatpush1.msra.mxu0 0.0
    %3935 = vmatprep.subr.mxu0 0.0
    %3936 = vmatpush1.msra.mxu0 0.0
    %3937 = vmatprep.subr.mxu0 0.0
    %3938 = vmatpush1.msra.mxu0 0.0
    %3939 = vmatprep.subr.mxu0 0.0
    %3940 = vmatpush1.msra.mxu0 0.0
    %3941 = vmatprep.subr.mxu0 0.0
    %3942 = vmatpush1.msra.mxu0 0.0
    %3943 = vmatprep.subr.mxu0 0.0
    %3944 = vmatpush1.msra.mxu0 0.0
    %3945 = vmatprep.subr.mxu0 0.0
    %3946 = vmatpush1.msra.mxu0 0.0
    %3947 = vmatprep.subr.mxu0 0.0
    %3948 = vmatpush1.msra.mxu0 0.0
    %3949 = vmatprep.subr.mxu0 0.0
    %3950 = vmatpush1.msra.mxu0 0.0
    %3951 = vmatprep.subr.mxu0 0.0
    %3952 = vmatpush1.msra.mxu0 0.0
    %3953 = vmatprep.subr.mxu0 0.0
    %3954 = vmatpush1.msra.mxu0 0.0
    %3955 = vmatprep.mubr.f32.mxu0 0.0
    %3956 = vmatmul.mubr.f32.gmra.mrb[0].mxu0 %v3744
    %v3957 = vpop.f32.mrb[0].mxu0
    %v3958 = vadd.f32 0.0, %v3957
    %v3959 = vpop.f32.mrb[0].mxu0
    %3960 = vdwg.mxu0
    %v3961 = vadd.f32 %v3888, %v3958
    %3962 = vmatprep.subr.mxu0 0.0
    %3963 = vmatpush1.msra.mxu0 %v2606
    %3964 = vmatprep.subr.mxu0 0.0
    %3965 = vmatpush1.msra.mxu0 0.0
    %3966 = vmatprep.subr.mxu0 0.0
    %3967 = vmatpush1.msra.mxu0 0.0
    %3968 = vmatprep.subr.mxu0 0.0
    %3969 = vmatpush1.msra.mxu0 0.0
    %3970 = vmatprep.subr.mxu0 0.0
    %3971 = vmatpush1.msra.mxu0 0.0
    %3972 = vmatprep.subr.mxu0 0.0
    %3973 = vmatpush1.msra.mxu0 0.0
    %3974 = vmatprep.subr.mxu0 0.0
    %3975 = vmatpush1.msra.mxu0 0.0
    %3976 = vmatprep.subr.mxu0 0.0
    %3977 = vmatpush1.msra.mxu0 0.0
    %3978 = vmatprep.subr.mxu0 0.0
    %3979 = vmatpush1.msra.mxu0 0.0
    %3980 = vmatprep.subr.mxu0 0.0
    %3981 = vmatpush1.msra.mxu0 0.0
    %3982 = vmatprep.subr.mxu0 0.0
    %3983 = vmatpush1.msra.mxu0 0.0
    %3984 = vmatprep.subr.mxu0 0.0
    %3985 = vmatpush1.msra.mxu0 0.0
    %3986 = vmatprep.subr.mxu0 0.0
    %3987 = vmatpush1.msra.mxu0 0.0
    %3988 = vmatprep.subr.mxu0 0.0
    %3989 = vmatpush1.msra.mxu0 0.0
    %3990 = vmatprep.subr.mxu0 0.0
    %3991 = vmatpush1.msra.mxu0 0.0
    %3992 = vmatprep.subr.mxu0 0.0
    %3993 = vmatpush1.msra.mxu0 0.0
    %3994 = vmatprep.subr.mxu0 0.0
    %3995 = vmatpush1.msra.mxu0 0.0
    %3996 = vmatprep.subr.mxu0 0.0
    %3997 = vmatpush1.msra.mxu0 0.0
    %3998 = vmatprep.subr.mxu0 0.0
    %3999 = vmatpush1.msra.mxu0 0.0
    %4000 = vmatprep.subr.mxu0 0.0
    %4001 = vmatpush1.msra.mxu0 0.0
    %4002 = vmatprep.subr.mxu0 0.0
    %4003 = vmatpush1.msra.mxu0 0.0
    %4004 = vmatprep.subr.mxu0 0.0
    %4005 = vmatpush1.msra.mxu0 0.0
    %4006 = vmatprep.subr.mxu0 0.0
    %4007 = vmatpush1.msra.mxu0 0.0
    %4008 = vmatprep.subr.mxu0 0.0
    %4009 = vmatpush1.msra.mxu0 0.0
    %4010 = vmatprep.subr.mxu0 0.0
    %4011 = vmatpush1.msra.mxu0 0.0
    %4012 = vmatprep.subr.mxu0 0.0
    %4013 = vmatpush1.msra.mxu0 0.0
    %4014 = vmatprep.subr.mxu0 0.0
    %4015 = vmatpush1.msra.mxu0 0.0
    %4016 = vmatprep.subr.mxu0 0.0
    %4017 = vmatpush1.msra.mxu0 0.0
    %4018 = vmatprep.subr.mxu0 0.0
    %4019 = vmatpush1.msra.mxu0 0.0
    %4020 = vmatprep.subr.mxu0 0.0
    %4021 = vmatpush1.msra.mxu0 0.0
    %4022 = vmatprep.subr.mxu0 0.0
    %4023 = vmatpush1.msra.mxu0 0.0
    %4024 = vmatprep.subr.mxu0 0.0
    %4025 = vmatpush1.msra.mxu0 0.0
    %4026 = vmatprep.mubr.f32.mxu0 0.0
    %4027 = vmatmul.mubr.f32.gmra.mrb[0].mxu0 %v3670
    %v4028 = vpop.f32.mrb[0].mxu0
    %v4029 = vadd.f32 0.0, %v4028
    %v4030 = vpop.f32.mrb[0].mxu0
    %4031 = vdwg.mxu0
    %v4032 = vadd.f32 %v3961, %v4029
    %v4033 = vadd.f32 %v4032, %v2683
    %v4034 = vsel %vm2686, %v4033, 0.0
    %4035 = vadd.xlane.f32.xlu0 %v4034
    %v4036 = vpop.xlane.xlu0 %4035
    %v4037 = vmul.f32 %v4036, %v2690
    %v4038 = vsub.f32 %v4033, %v4037
    %v4039 = vmul.f32 %v4038, %v4038
    %v4040 = vsel %vm2686, %v4039, 0.0
    %4041 = vadd.xlane.f32.xlu0 %v4040
    %v4042 = vpop.xlane.xlu0 %4041
    %v4043 = vmul.f32 %v4042, %v2690
    %v4044 = vadd.f32 %v4043, 1e-05
    %v4045 = vrsqrt.pop %v4044
    %v4046 = vmul.f32 %v4038, %v4045
    %v4047 = vmul.f32 %v4046, %v2705
    %v4048 = vadd.f32 %v4047, %v2712
    %s4049 = sld [smem:[#allocation3 + $0x3]]
    %v4050 = vstv %s4049
    %v4051 = vmul.f32 %v468, %v4050
    %s4052 = sld [smem:[#allocation3 + $0x83]]
    %v4053 = vstv %s4052
    %v4054 = vmul.f32 %v468, %v4053
    %4056 = vrot.lane.b32.xlu0 %v4054, 124
    %v4057 = vpop.permute.xlu0 %4056
    %v4059 = vadd.f32 %v4051, %v4057
    %s4060 = sld [smem:[#allocation3 + $0x103]]
    %v4061 = vstv %s4060
    %v4062 = vmul.f32 %v468, %v4061
    %4064 = vrot.lane.b32.xlu0 %v4062, 120
    %v4065 = vpop.permute.xlu0 %4064
    %v4067 = vadd.f32 %v4059, %v4065
    %s4068 = sld [smem:[#allocation3 + $0x183]]
    %v4069 = vstv %s4068
    %v4070 = vmul.f32 %v468, %v4069
    %4072 = vrot.lane.b32.xlu0 %v4070, 116
    %v4073 = vpop.permute.xlu0 %4072
    %v4075 = vadd.f32 %v4067, %v4073
    %s4076 = sld [smem:[#allocation3 + $0x203]]
    %v4077 = vstv %s4076
    %v4078 = vmul.f32 %v468, %v4077
    %4080 = vrot.lane.b32.xlu0 %v4078, 112
    %v4081 = vpop.permute.xlu0 %4080
    %v4083 = vadd.f32 %v4075, %v4081
    %s4084 = sld [smem:[#allocation3 + $0x283]]
    %v4085 = vstv %s4084
    %v4086 = vmul.f32 %v468, %v4085
    %4088 = vrot.lane.b32.xlu0 %v4086, 108
    %v4089 = vpop.permute.xlu0 %4088
    %v4091 = vadd.f32 %v4083, %v4089
    %s4092 = sld [smem:[#allocation3 + $0x303]]
    %v4093 = vstv %s4092
    %v4094 = vmul.f32 %v468, %v4093
    %4096 = vrot.lane.b32.xlu0 %v4094, 104
    %v4097 = vpop.permute.xlu0 %4096
    %v4099 = vadd.f32 %v4091, %v4097
    %s4100 = sld [smem:[#allocation3 + $0x383]]
    %v4101 = vstv %s4100
    %v4102 = vmul.f32 %v468, %v4101
    %4104 = vrot.lane.b32.xlu0 %v4102, 100
    %v4105 = vpop.permute.xlu0 %4104
    %v4107 = vadd.f32 %v4099, %v4105
    %v4108 = vadd.f32 %v4048, %v4107
    %s4109 = sld [smem:[#allocation6 + $0x3]]
    %v4110 = vstv %s4109
    %v4111 = vadd.f32 %v4108, %v4110
    %s4112 = scalar_lea.vmem %s127, 6
    %4113 = vst.msk [vmem:[%s4112] sm:$0x3] %vm2686, %v4111
    // Predicated region
    $region326: #{_lambda_.1} parent=1 // pred_check
      _
    $region327: #{_lambda_.1} parent=1 // pred_check_branch
      %4115 = sbr.rel (0) target = $region329
    $region328: #{_lambda_.1} parent=1 // pred_region
      _
    $region329: #{_lambda_.1} parent=1 // pred_fallthru
      _
    // Predicated region
    $region330: #{_lambda_.1} parent=1 // pred_check
      _
    $region331: #{_lambda_.1} parent=1 // pred_check_branch
      %4117 = sbr.rel (0) target = $region333
    $region332: #{_lambda_.1} parent=1 // pred_region
      _
    $region333: #{_lambda_.1} parent=1 // pred_fallthru
      _
    %4118 = vsyncpa [#allocation4], 1
    %4119 = vsyncpa [#allocation10], 1
    %4120 = vsyncpa [#allocation13], 1
    %4121 = vsyncpa [#allocation16], 1
    %4122 = vsyncpa [#allocation19], 1
    %4123 = vsyncpa [#allocation22], 1
    %4124 = vsyncpa [#allocation25], 1
    %4125 = vsyncpa [#allocation28], 1
    %4126 = vsyncpa [#allocation31], 1
    %4127 = vsyncpa [#allocation5], 1
    %4128 = vsyncpa [#allocation7], 1

</llo_original>
